<compile_context>
chip_gen: v7x
topology: tpu7x:2x2x1
jax: 0.10.0
libtpu: 0.0.40
codegen_flags: <defaults>
</compile_context>

<pallas_src>
import jax
import jax.numpy as jnp
from jax.experimental import pallas as pl
from jax.experimental.pallas import tpu as pltpu

EPS = 1e-6


# ----------------------------------------------------------------------------
# Pallas kernel: all GatedResNet blocks, one batch tile per "parallel" step
# ----------------------------------------------------------------------------
def _acnn_kernel(x_ref, w1_ref, b1_ref, g1_ref, be1_ref, a1_ref,
                 w2_ref, b2_ref, g2_ref, be2_ref, a2_ref,
                 o_ref, pad_ref):
    nt, H, W, C = o_ref.shape
    HW = H * W
    M = nt * HW
    r = pl.program_id(1)            # ResNet-block index (sequential axis)

    # Initialize the resident activation and the zero boundary of the padded
    # staging buffer once per batch tile (scratch contents are undefined).
    @pl.when(r == 0)
    def _():
        o_ref[...] = x_ref[...]
        pad_ref[...] = jnp.zeros(pad_ref.shape, pad_ref.dtype)

    x = o_ref[...]                  # (nt, H, W, C) f32, resident across blocks

    def concat_silu(v):
        # F.silu(cat([v, -v], channel)); sigmoid computed once (EUP saver):
        # silu(-v) = -v * sigmoid(-v) = v * (sigmoid(v) - 1)
        s = jax.nn.sigmoid(v)
        return jnp.concatenate([v * s, v * (s - 1.0)], axis=-1)

    def drs_conv(u, w_ref, b_ref):
        """2x2 conv with zero pad (top=1, left=1) as a single im2col matmul."""
        cin = u.shape[-1]                                   # = 2C
        # interior store; boundary row/col stays zero from the r==0 init
        pad_ref[:, pl.ds(1, H), pl.ds(1, W), :] = u.astype(pad_ref.dtype)
        t00 = pad_ref[:, pl.ds(0, H), pl.ds(0, W), :]       # u[i-1, j-1]
        t01 = pad_ref[:, pl.ds(0, H), pl.ds(1, W), :]       # u[i-1, j  ]
        t10 = pad_ref[:, pl.ds(1, H), pl.ds(0, W), :]       # u[i  , j-1]
        t11 = pad_ref[:, pl.ds(1, H), pl.ds(1, W), :]       # u[i  , j  ]
        cat = jnp.concatenate([t00, t01, t10, t11], axis=-1)  # (nt,H,W,4cin) bf16
        y = jnp.dot(cat.reshape(M, 4 * cin), w_ref[0],
                    preferred_element_type=jnp.float32)       # K = 4cin
        return y + b_ref[0]                                   # (M, cout) f32

    def group_norm(y, a_ref, g_ref, be_ref):
        """Per-sample GroupNorm; group moments via one fused stats matmul.

        gamma/beta are folded into a per-sample (nt, cout) scale/shift so the
        large (nt, HW, cout) tensor sees a single multiply-add.
        """
        cout = y.shape[-1]
        yb = y.reshape(nt, HW, cout)
        s1 = jnp.sum(yb, axis=1)                  # (nt, cout)  sum x
        s2 = jnp.sum(yb * yb, axis=1)             # (nt, cout)  sum x^2
        st = jnp.concatenate([s1, s2], axis=0)    # (2*nt, cout)
        # A is the pre-scaled group-indicator matrix: st @ A -> group E[.]/E[.^2]
        ms = jnp.dot(st, a_ref[...], preferred_element_type=jnp.float32)
        mean = ms[:nt]
        inv = jax.lax.rsqrt(ms[nt:] - mean * mean + EPS)      # (nt, cout)
        scale = inv * g_ref[0]                    # gamma folded in
        shift = be_ref[0] - mean * scale          # beta  folded in
        return yb * scale[:, None, :] + shift[:, None, :]     # (nt, HW, cout)

    # conv_input branch
    u1 = concat_silu(x)                                               # (nt,H,W,2C)
    y1 = group_norm(drs_conv(u1, w1_ref, b1_ref), a1_ref, g1_ref, be1_ref)

    # concat_elu -> dropout (identity, eval) -> conv_out
    # TODO(synk): nn.Dropout2d is stochastic in train mode; identity here (eval).
    # TODO(synk): h-conditioning branch (h_upres/h_downres/h_res/h_out) is not
    #             implemented; this kernel covers the forward with h=None.
    u2 = concat_silu(y1).reshape(nt, H, W, 2 * C)                     # (nt,H,W,2C)
    y2 = group_norm(drs_conv(u2, w2_ref, b2_ref), a2_ref, g2_ref, be2_ref)

    # gate + residual (stays in f32)
    gated = y2[..., :C] * jax.nn.sigmoid(y2[..., C:])                 # (nt,HW,C)
    o_ref[...] = (x + gated.reshape(nt, H, W, C)).astype(o_ref.dtype)


# ----------------------------------------------------------------------------
# wrapper: single fused pallas_call over (batch tiles, nr_resnet)
# ----------------------------------------------------------------------------
def acnn_layer_pallas(x_nhwc, params, n_tile=None):
    N, H, W, C = x_nhwc.shape
    R = params["w1"].shape[0]
    if n_tile is None:
        n_tile = min(N, 8)            # fold batch into the MXU M dimension
        while N % n_tile:
            n_tile -= 1

    # im2col weights: taps (0,0),(0,1),(1,0),(1,1) stacked along K, cast bf16
    w1 = params["w1"].reshape(R, 8 * C, C).astype(jnp.bfloat16)
    w2 = params["w2"].reshape(R, 8 * C, 2 * C).astype(jnp.bfloat16)

    args = (x_nhwc, w1, params["b1"], params["g1"], params["be1"], params["A1"],
            w2, params["b2"], params["g2"], params["be2"], params["A2"])

    def stacked_spec(shape):          # per-block params, indexed by r
        nd = len(shape)
        return pl.BlockSpec((1,) + tuple(shape[1:]),
                            lambda b, r, _nd=nd: (r,) + (0,) * (_nd - 1))

    def const_spec(shape):            # block-invariant params
        nd = len(shape)
        return pl.BlockSpec(tuple(shape), lambda b, r, _nd=nd: (0,) * _nd)

    x_spec = pl.BlockSpec((n_tile, H, W, C), lambda b, r: (b, 0, 0, 0))
    in_specs = [
        x_spec,
        stacked_spec(w1.shape), stacked_spec(params["b1"].shape),
        stacked_spec(params["g1"].shape), stacked_spec(params["be1"].shape),
        const_spec(params["A1"].shape),
        stacked_spec(w2.shape), stacked_spec(params["b2"].shape),
        stacked_spec(params["g2"].shape), stacked_spec(params["be2"].shape),
        const_spec(params["A2"].shape),
    ]

    return pl.pallas_call(
        _acnn_kernel,
        out_shape=jax.ShapeDtypeStruct((N, H, W, C), x_nhwc.dtype),
        grid_spec=pltpu.PrefetchScalarGridSpec(
            num_scalar_prefetch=0,
            grid=(N // n_tile, R),
            in_specs=in_specs,
            out_specs=x_spec,
            scratch_shapes=[
                pltpu.VMEM((n_tile, H + 1, W + 1, 2 * C), jnp.bfloat16)],
        ),
        compiler_params=pltpu.CompilerParams(
            dimension_semantics=("parallel", "arbitrary")),
    )(*args)


def acnn_layer_forward(ul_nchw, params, n_tile=None):
    """ACNNLayer.forward(ul, h=None) — NCHW in/out, kernel runs in NHWC."""
    x = jnp.transpose(ul_nchw, (0, 2, 3, 1))       # NCHW -> NHWC
    x = acnn_layer_pallas(x, params, n_tile=n_tile)
    return jnp.transpose(x, (0, 3, 1, 2))          # NHWC -> NCHW


# ----------------------------------------------------------------------------
# pure-JAX reference (mirrors bf16 matmul operands, f32 everywhere else)
# ----------------------------------------------------------------------------
def _concat_silu_ref(v):
    u = jnp.concatenate([v, -v], axis=-1)
    return u * jax.nn.sigmoid(u)


def _drs_conv_ref(x, w4, b):
    N, H, W, _ = x.shape
    xb = x.astype(jnp.bfloat16)
    wb = w4.astype(jnp.bfloat16)
    xp = jnp.pad(xb, ((0, 0), (1, 0), (1, 0), (0, 0)))
    acc = 0.0
    k = 0
    for dy in (0, 1):
        for dx in (0, 1):
            acc = acc + jnp.einsum("nhwc,cd->nhwd",
                                   xp[:, dy:dy + H, dx:dx + W, :], wb[k],
                                   preferred_element_type=jnp.float32)
            k += 1
    return acc + b.reshape(1, 1, 1, -1)


def _group_norm_ref(x, gamma, beta, groups):
    N, H, W, C = x.shape
    cg = C // groups
    xg = x.reshape(N, H, W, groups, cg)
    mean = xg.mean(axis=(1, 2, 4), keepdims=True)
    var = jnp.mean((xg - mean) ** 2, axis=(1, 2, 4), keepdims=True)
    xn = ((xg - mean) / jnp.sqrt(var + EPS)).reshape(N, H, W, C)
    return xn * gamma.reshape(1, 1, 1, -1) + beta.reshape(1, 1, 1, -1)


def acnn_layer_reference(ul_nchw, params):
    x = jnp.transpose(ul_nchw, (0, 2, 3, 1))
    C = x.shape[-1]
    R = params["w1"].shape[0]
    for r in range(R):
        u1 = _concat_silu_ref(x)
        y1 = _group_norm_ref(_drs_conv_ref(u1, params["w1"][r], params["b1"][r]),
                             params["g1"][r], params["be1"][r], params["groups1"])
        u2 = _concat_silu_ref(y1)                      # dropout = identity (eval)
        y2 = _group_norm_ref(_drs_conv_ref(u2, params["w2"][r], params["b2"][r]),
                             params["g2"][r], params["be2"][r], params["groups2"])
        x = x + y2[..., :C] * jax.nn.sigmoid(y2[..., C:])
    return jnp.transpose(x, (0, 3, 1, 2))


# ----------------------------------------------------------------------------
# deterministic synthetic params (shapes follow the module __init__)
# ----------------------------------------------------------------------------
def init_params(key, nr_resnet, C, H, W):
    hw = H * W
    groups1 = min(C // 4, 32)            # GroupNorm of conv_input (C channels)
    groups2 = min((2 * C) // 4, 32)      # GroupNorm of conv_out  (2C channels)

    def gmat(channels, groups):
        cg = channels // groups
        gid = jnp.arange(channels) // cg
        a = (gid[:, None] == gid[None, :]).astype(jnp.float32)
        return a / float(hw * cg)        # pre-scaled group-averaging matrix

    R = nr_resnet
    ks = jax.random.split(key, 8)
    return dict(
        # w* stacked (block, tap, Cin, Cout); taps in order (0,0),(0,1),(1,0),(1,1)
        w1=0.05 * jax.random.normal(ks[0], (R, 4, 2 * C, C), jnp.float32),
        b1=0.05 * jax.random.normal(ks[1], (R, 1, C), jnp.float32),
        g1=1.0 + 0.1 * jax.random.normal(ks[2], (R, 1, C), jnp.float32),
        be1=0.1 * jax.random.normal(ks[3], (R, 1, C), jnp.float32),
        w2=0.05 * jax.random.normal(ks[4], (R, 4, 2 * C, 2 * C), jnp.float32),
        b2=0.05 * jax.random.normal(ks[5], (R, 1, 2 * C), jnp.float32),
        g2=1.0 + 0.1 * jax.random.normal(ks[6], (R, 1, 2 * C), jnp.float32),
        be2=0.1 * jax.random.normal(ks[7], (R, 1, 2 * C), jnp.float32),
        A1=gmat(C, groups1), A2=gmat(2 * C, groups2),
        groups1=groups1, groups2=groups2,
    )


if __name__ == "__main__":
    key = jax.random.PRNGKey(0)
    # nr_filters = 64 so 2C = 128 -> lane-dense intermediates / im2col K = 512
    N, C, H, W = 2, 64, 8, 8          # batch, nr_filters, spatial
    nr_resnet = 2

    kx, kp = jax.random.split(key)
    ul_nchw = jax.random.normal(kx, (N, C, H, W), jnp.float32)
    params = init_params(kp, nr_resnet, C, H, W)

    out = acnn_layer_forward(ul_nchw, params)
    out = jax.block_until_ready(out)

    ref = acnn_layer_reference(ul_nchw, params)
    err = float(jnp.max(jnp.abs(out - ref)))
    # bf16 matmul operands in both kernel and reference; residual error is
    # f32 accumulation order + GroupNorm variance formulation.
    if not (err < 5e-3):
        raise AssertionError(f"Pallas kernel mismatch vs reference: max|diff|={err}")

    print("KERNEL_OK")
</pallas_src>

<mosaic_0001>
module attributes {stable_mosaic.version = 11 : i64} {
  func.func @_acnn_kernel(%arg0: i32, %arg1: i32, %arg2: memref<2x8x8x64xf32, #tpu.memory_space<vmem>>, %arg3: memref<1x512x64xbf16, #tpu.memory_space<vmem>>, %arg4: memref<1x1x64xf32, #tpu.memory_space<vmem>>, %arg5: memref<1x1x64xf32, #tpu.memory_space<vmem>>, %arg6: memref<1x1x64xf32, #tpu.memory_space<vmem>>, %arg7: memref<64x64xf32, #tpu.memory_space<vmem>>, %arg8: memref<1x512x128xbf16, #tpu.memory_space<vmem>>, %arg9: memref<1x1x128xf32, #tpu.memory_space<vmem>>, %arg10: memref<1x1x128xf32, #tpu.memory_space<vmem>>, %arg11: memref<1x1x128xf32, #tpu.memory_space<vmem>>, %arg12: memref<128x128xf32, #tpu.memory_space<vmem>>, %arg13: memref<2x8x8x64xf32, #tpu.memory_space<vmem>>, %arg14: memref<2x9x9x128xbf16, #tpu.memory_space<vmem>>) attributes {dimension_semantics = [#tpu.dimension_semantics<parallel>, #tpu.dimension_semantics<arbitrary>], iteration_bounds = array<i64: 1, 2>, scalar_prefetch = 0 : i64, scratch_operands = 1 : i64, tpu.core_type = #tpu.core_type<tc>, window_params = [{transform_indices = @transform_0, window_bounds = array<i64: 2, 8, 8, 64>}, {transform_indices = @transform_1, window_bounds = array<i64: 1, 512, 64>}, {transform_indices = @transform_2, window_bounds = array<i64: 1, 1, 64>}, {transform_indices = @transform_3, window_bounds = array<i64: 1, 1, 64>}, {transform_indices = @transform_4, window_bounds = array<i64: 1, 1, 64>}, {pipeline_mode = #tpu.pipeline_mode<synchronous>, transform_indices = @transform_5, window_bounds = array<i64: 64, 64>}, {transform_indices = @transform_6, window_bounds = array<i64: 1, 512, 128>}, {transform_indices = @transform_7, window_bounds = array<i64: 1, 1, 128>}, {transform_indices = @transform_8, window_bounds = array<i64: 1, 1, 128>}, {transform_indices = @transform_9, window_bounds = array<i64: 1, 1, 128>}, {pipeline_mode = #tpu.pipeline_mode<synchronous>, transform_indices = @transform_10, window_bounds = array<i64: 128, 128>}, {transform_indices = @transform_11, window_bounds = array<i64: 2, 8, 8, 64>}]} {
    %c0_i32 = arith.constant 0 : i32
    %0 = arith.cmpi eq, %arg1, %c0_i32 : i32
    %1 = arith.extui %0 : i1 to i32
    %c0_i32_0 = arith.constant 0 : i32
    %2 = arith.cmpi ne, %1, %c0_i32_0 : i32
    scf.if %2 {
      %c0_89 = arith.constant 0 : index
      %c0_90 = arith.constant 0 : index
      %c0_91 = arith.constant 0 : index
      %c0_92 = arith.constant 0 : index
      %124 = vector.load %arg2[%c0_89, %c0_90, %c0_91, %c0_92] : memref<2x8x8x64xf32, #tpu.memory_space<vmem>>, vector<2x8x8x64xf32>
      %c0_93 = arith.constant 0 : index
      %c0_94 = arith.constant 0 : index
      %c0_95 = arith.constant 0 : index
      %c0_96 = arith.constant 0 : index
      %125 = vector.load %arg13[%c0_93, %c0_94, %c0_95, %c0_96] : memref<2x8x8x64xf32, #tpu.memory_space<vmem>>, vector<2x8x8x64xf32>
      tpu.vector_store %arg13[%c0_93, %c0_94, %c0_95, %c0_96], %124 {strides = array<i32>} : memref<2x8x8x64xf32, #tpu.memory_space<vmem>>, vector<2x8x8x64xf32>,
      %cst_97 = arith.constant 0.000000e+00 : bf16
      %126 = vector.broadcast %cst_97 : bf16 to vector<2x9x9x128xbf16>
      %c0_98 = arith.constant 0 : index
      %c0_99 = arith.constant 0 : index
      %c0_100 = arith.constant 0 : index
      %c0_101 = arith.constant 0 : index
      %127 = vector.load %arg14[%c0_98, %c0_99, %c0_100, %c0_101] : memref<2x9x9x128xbf16, #tpu.memory_space<vmem>>, vector<2x9x9x128xbf16>
      tpu.vector_store %arg14[%c0_98, %c0_99, %c0_100, %c0_101], %126 {strides = array<i32>} : memref<2x9x9x128xbf16, #tpu.memory_space<vmem>>, vector<2x9x9x128xbf16>,
    } else {
    }
    %c0 = arith.constant 0 : index
    %c0_1 = arith.constant 0 : index
    %c0_2 = arith.constant 0 : index
    %c0_3 = arith.constant 0 : index
    %3 = vector.load %arg13[%c0, %c0_1, %c0_2, %c0_3] : memref<2x8x8x64xf32, #tpu.memory_space<vmem>>, vector<2x8x8x64xf32>
    %4 = arith.negf %3 : vector<2x8x8x64xf32>
    %5 = math.exp %4 : vector<2x8x8x64xf32>
    %cst = arith.constant 1.000000e+00 : f32
    %6 = vector.broadcast %cst : f32 to vector<2x8x8x64xf32>
    %7 = arith.addf %6, %5 : vector<2x8x8x64xf32>
    %8 = arith.divf %6, %7 : vector<2x8x8x64xf32>
    %9 = arith.mulf %3, %8 : vector<2x8x8x64xf32>
    %cst_4 = arith.constant 1.000000e+00 : f32
    %10 = vector.broadcast %cst_4 : f32 to vector<2x8x8x64xf32>
    %11 = arith.subf %8, %10 : vector<2x8x8x64xf32>
    %12 = arith.mulf %3, %11 : vector<2x8x8x64xf32>
    %13 = tpu.concatenate %9, %12 in 3 : vector<2x8x8x64xf32>, vector<2x8x8x64xf32> -> vector<2x8x8x128xf32>
    %14 = arith.truncf %13 : vector<2x8x8x128xf32> to vector<2x8x8x128xbf16>
    %c0_5 = arith.constant 0 : index
    %c1 = arith.constant 1 : index
    %c1_6 = arith.constant 1 : index
    %c0_7 = arith.constant 0 : index
    %15 = vector.load %arg14[%c0_5, %c1, %c1_6, %c0_7] : memref<2x9x9x128xbf16, #tpu.memory_space<vmem>>, vector<2x8x8x128xbf16>
    tpu.vector_store %arg14[%c0_5, %c1, %c1_6, %c0_7], %14 {strides = array<i32>} : memref<2x9x9x128xbf16, #tpu.memory_space<vmem>>, vector<2x8x8x128xbf16>,
    %c0_8 = arith.constant 0 : index
    %c0_9 = arith.constant 0 : index
    %c0_10 = arith.constant 0 : index
    %c0_11 = arith.constant 0 : index
    %16 = vector.load %arg14[%c0_8, %c0_9, %c0_10, %c0_11] : memref<2x9x9x128xbf16, #tpu.memory_space<vmem>>, vector<2x8x8x128xbf16>
    %c0_12 = arith.constant 0 : index
    %c0_13 = arith.constant 0 : index
    %c1_14 = arith.constant 1 : index
    %c0_15 = arith.constant 0 : index
    %17 = vector.load %arg14[%c0_12, %c0_13, %c1_14, %c0_15] : memref<2x9x9x128xbf16, #tpu.memory_space<vmem>>, vector<2x8x8x128xbf16>
    %c0_16 = arith.constant 0 : index
    %c1_17 = arith.constant 1 : index
    %c0_18 = arith.constant 0 : index
    %c0_19 = arith.constant 0 : index
    %18 = vector.load %arg14[%c0_16, %c1_17, %c0_18, %c0_19] : memref<2x9x9x128xbf16, #tpu.memory_space<vmem>>, vector<2x8x8x128xbf16>
    %c0_20 = arith.constant 0 : index
    %c1_21 = arith.constant 1 : index
    %c1_22 = arith.constant 1 : index
    %c0_23 = arith.constant 0 : index
    %19 = vector.load %arg14[%c0_20, %c1_21, %c1_22, %c0_23] : memref<2x9x9x128xbf16, #tpu.memory_space<vmem>>, vector<2x8x8x128xbf16>
    %20 = tpu.concatenate %16, %17, %18, %19 in 3 : vector<2x8x8x128xbf16>, vector<2x8x8x128xbf16>, vector<2x8x8x128xbf16>, vector<2x8x8x128xbf16> -> vector<2x8x8x512xbf16>
    %21 = vector.shape_cast %20 : vector<2x8x8x512xbf16> to vector<128x512xbf16>
    %c0_24 = arith.constant 0 : index
    %c0_25 = arith.constant 0 : index
    %c0_26 = arith.constant 0 : index
    %22 = vector.load %arg3[%c0_24, %c0_25, %c0_26] : memref<1x512x64xbf16, #tpu.memory_space<vmem>>, vector<1x512x64xbf16>
    %23 = vector.shape_cast %22 : vector<1x512x64xbf16> to vector<512x64xbf16>
    %cst_27 = arith.constant dense<0.000000e+00> : vector<128x64xf32>
    %24 = tpu.matmul %21, %23, %cst_27 {dimension_numbers = #tpu.dot_dimension_numbers<[1], [0], [0], [1], [0, 0, 1, 1], [], []>} : vector<128x512xbf16>, vector<512x64xbf16>, vector<128x64xf32> -> vector<128x64xf32>
    %c0_28 = arith.constant 0 : index
    %c0_29 = arith.constant 0 : index
    %c0_30 = arith.constant 0 : index
    %25 = vector.load %arg4[%c0_28, %c0_29, %c0_30] : memref<1x1x64xf32, #tpu.memory_space<vmem>>, vector<1x1x64xf32>
    %26 = vector.shape_cast %25 : vector<1x1x64xf32> to vector<1x64xf32>
    %27 = vector.broadcast %26 : vector<1x64xf32> to vector<128x64xf32>
    %28 = arith.addf %24, %27 : vector<128x64xf32>
    %29 = vector.shape_cast %28 : vector<128x64xf32> to vector<2x64x64xf32>
    %cst_31 = arith.constant dense<0.000000e+00> : vector<2x64xf32>
    %30 = vector.multi_reduction <add>, %29, %cst_31 [1] : vector<2x64x64xf32> to vector<2x64xf32>
    %31 = arith.mulf %29, %29 : vector<2x64x64xf32>
    %cst_32 = arith.constant dense<0.000000e+00> : vector<2x64xf32>
    %32 = vector.multi_reduction <add>, %31, %cst_32 [1] : vector<2x64x64xf32> to vector<2x64xf32>
    %33 = tpu.concatenate %30, %32 in 0 : vector<2x64xf32>, vector<2x64xf32> -> vector<4x64xf32>
    %c0_33 = arith.constant 0 : index
    %c0_34 = arith.constant 0 : index
    %34 = vector.load %arg7[%c0_33, %c0_34] : memref<64x64xf32, #tpu.memory_space<vmem>>, vector<64x64xf32>
    %cst_35 = arith.constant dense<0.000000e+00> : vector<4x64xf32>
    %35 = tpu.matmul %33, %34, %cst_35 {dimension_numbers = #tpu.dot_dimension_numbers<[1], [0], [0], [1], [0, 0, 1, 1], [], []>} : vector<4x64xf32>, vector<64x64xf32>, vector<4x64xf32> -> vector<4x64xf32>
    %36 = vector.extract_strided_slice %35 {offsets = [0, 0], sizes = [2, 64], strides = [1, 1]} : vector<4x64xf32> to vector<2x64xf32>
    %37 = vector.extract_strided_slice %35 {offsets = [2, 0], sizes = [2, 64], strides = [1, 1]} : vector<4x64xf32> to vector<2x64xf32>
    %38 = arith.mulf %36, %36 : vector<2x64xf32>
    %39 = arith.subf %37, %38 : vector<2x64xf32>
    %cst_36 = arith.constant 9.99999997E-7 : f32
    %40 = vector.broadcast %cst_36 : f32 to vector<2x64xf32>
    %41 = arith.addf %39, %40 : vector<2x64xf32>
    %42 = math.rsqrt %41 : vector<2x64xf32>
    %c0_37 = arith.constant 0 : index
    %c0_38 = arith.constant 0 : index
    %c0_39 = arith.constant 0 : index
    %43 = vector.load %arg5[%c0_37, %c0_38, %c0_39] : memref<1x1x64xf32, #tpu.memory_space<vmem>>, vector<1x1x64xf32>
    %44 = vector.shape_cast %43 : vector<1x1x64xf32> to vector<1x64xf32>
    %45 = vector.broadcast %44 : vector<1x64xf32> to vector<2x64xf32>
    %46 = arith.mulf %42, %45 : vector<2x64xf32>
    %c0_40 = arith.constant 0 : index
    %c0_41 = arith.constant 0 : index
    %c0_42 = arith.constant 0 : index
    %47 = vector.load %arg6[%c0_40, %c0_41, %c0_42] : memref<1x1x64xf32, #tpu.memory_space<vmem>>, vector<1x1x64xf32>
    %48 = vector.shape_cast %47 : vector<1x1x64xf32> to vector<1x64xf32>
    %49 = arith.mulf %36, %46 : vector<2x64xf32>
    %50 = vector.broadcast %48 : vector<1x64xf32> to vector<2x64xf32>
    %51 = arith.subf %50, %49 : vector<2x64xf32>
    %52 = vector.shape_cast %46 : vector<2x64xf32> to vector<2x1x64xf32>
    %53 = vector.broadcast %52 : vector<2x1x64xf32> to vector<2x64x64xf32>
    %54 = arith.mulf %29, %53 : vector<2x64x64xf32>
    %55 = vector.shape_cast %51 : vector<2x64xf32> to vector<2x1x64xf32>
    %56 = vector.broadcast %55 : vector<2x1x64xf32> to vector<2x64x64xf32>
    %57 = arith.addf %54, %56 : vector<2x64x64xf32>
    %58 = arith.negf %57 : vector<2x64x64xf32>
    %59 = math.exp %58 : vector<2x64x64xf32>
    %cst_43 = arith.constant 1.000000e+00 : f32
    %60 = vector.broadcast %cst_43 : f32 to vector<2x64x64xf32>
    %61 = arith.addf %60, %59 : vector<2x64x64xf32>
    %62 = arith.divf %60, %61 : vector<2x64x64xf32>
    %63 = arith.mulf %57, %62 : vector<2x64x64xf32>
    %cst_44 = arith.constant 1.000000e+00 : f32
    %64 = vector.broadcast %cst_44 : f32 to vector<2x64x64xf32>
    %65 = arith.subf %62, %64 : vector<2x64x64xf32>
    %66 = arith.mulf %57, %65 : vector<2x64x64xf32>
    %67 = tpu.concatenate %63, %66 in 2 : vector<2x64x64xf32>, vector<2x64x64xf32> -> vector<2x64x128xf32>
    %68 = vector.shape_cast %67 : vector<2x64x128xf32> to vector<2x8x8x128xf32>
    %69 = arith.truncf %68 : vector<2x8x8x128xf32> to vector<2x8x8x128xbf16>
    %c0_45 = arith.constant 0 : index
    %c1_46 = arith.constant 1 : index
    %c1_47 = arith.constant 1 : index
    %c0_48 = arith.constant 0 : index
    %70 = vector.load %arg14[%c0_45, %c1_46, %c1_47, %c0_48] : memref<2x9x9x128xbf16, #tpu.memory_space<vmem>>, vector<2x8x8x128xbf16>
    tpu.vector_store %arg14[%c0_45, %c1_46, %c1_47, %c0_48], %69 {strides = array<i32>} : memref<2x9x9x128xbf16, #tpu.memory_space<vmem>>, vector<2x8x8x128xbf16>,
    %c0_49 = arith.constant 0 : index
    %c0_50 = arith.constant 0 : index
    %c0_51 = arith.constant 0 : index
    %c0_52 = arith.constant 0 : index
    %71 = vector.load %arg14[%c0_49, %c0_50, %c0_51, %c0_52] : memref<2x9x9x128xbf16, #tpu.memory_space<vmem>>, vector<2x8x8x128xbf16>
    %c0_53 = arith.constant 0 : index
    %c0_54 = arith.constant 0 : index
    %c1_55 = arith.constant 1 : index
    %c0_56 = arith.constant 0 : index
    %72 = vector.load %arg14[%c0_53, %c0_54, %c1_55, %c0_56] : memref<2x9x9x128xbf16, #tpu.memory_space<vmem>>, vector<2x8x8x128xbf16>
    %c0_57 = arith.constant 0 : index
    %c1_58 = arith.constant 1 : index
    %c0_59 = arith.constant 0 : index
    %c0_60 = arith.constant 0 : index
    %73 = vector.load %arg14[%c0_57, %c1_58, %c0_59, %c0_60] : memref<2x9x9x128xbf16, #tpu.memory_space<vmem>>, vector<2x8x8x128xbf16>
    %c0_61 = arith.constant 0 : index
    %c1_62 = arith.constant 1 : index
    %c1_63 = arith.constant 1 : index
    %c0_64 = arith.constant 0 : index
    %74 = vector.load %arg14[%c0_61, %c1_62, %c1_63, %c0_64] : memref<2x9x9x128xbf16, #tpu.memory_space<vmem>>, vector<2x8x8x128xbf16>
    %75 = tpu.concatenate %71, %72, %73, %74 in 3 : vector<2x8x8x128xbf16>, vector<2x8x8x128xbf16>, vector<2x8x8x128xbf16>, vector<2x8x8x128xbf16> -> vector<2x8x8x512xbf16>
    %76 = vector.shape_cast %75 : vector<2x8x8x512xbf16> to vector<128x512xbf16>
    %c0_65 = arith.constant 0 : index
    %c0_66 = arith.constant 0 : index
    %c0_67 = arith.constant 0 : index
    %77 = vector.load %arg8[%c0_65, %c0_66, %c0_67] : memref<1x512x128xbf16, #tpu.memory_space<vmem>>, vector<1x512x128xbf16>
    %78 = vector.shape_cast %77 : vector<1x512x128xbf16> to vector<512x128xbf16>
    %cst_68 = arith.constant dense<0.000000e+00> : vector<128x128xf32>
    %79 = tpu.matmul %76, %78, %cst_68 {dimension_numbers = #tpu.dot_dimension_numbers<[1], [0], [0], [1], [0, 0, 1, 1], [], []>} : vector<128x512xbf16>, vector<512x128xbf16>, vector<128x128xf32> -> vector<128x128xf32>
    %c0_69 = arith.constant 0 : index
    %c0_70 = arith.constant 0 : index
    %c0_71 = arith.constant 0 : index
    %80 = vector.load %arg9[%c0_69, %c0_70, %c0_71] : memref<1x1x128xf32, #tpu.memory_space<vmem>>, vector<1x1x128xf32>
    %81 = vector.shape_cast %80 : vector<1x1x128xf32> to vector<1x128xf32>
    %82 = vector.broadcast %81 : vector<1x128xf32> to vector<128x128xf32>
    %83 = arith.addf %79, %82 : vector<128x128xf32>
    %84 = vector.shape_cast %83 : vector<128x128xf32> to vector<2x64x128xf32>
    %cst_72 = arith.constant dense<0.000000e+00> : vector<2x128xf32>
    %85 = vector.multi_reduction <add>, %84, %cst_72 [1] : vector<2x64x128xf32> to vector<2x128xf32>
    %86 = arith.mulf %84, %84 : vector<2x64x128xf32>
    %cst_73 = arith.constant dense<0.000000e+00> : vector<2x128xf32>
    %87 = vector.multi_reduction <add>, %86, %cst_73 [1] : vector<2x64x128xf32> to vector<2x128xf32>
    %88 = tpu.concatenate %85, %87 in 0 : vector<2x128xf32>, vector<2x128xf32> -> vector<4x128xf32>
    %c0_74 = arith.constant 0 : index
    %c0_75 = arith.constant 0 : index
    %89 = vector.load %arg12[%c0_74, %c0_75] : memref<128x128xf32, #tpu.memory_space<vmem>>, vector<128x128xf32>
    %cst_76 = arith.constant dense<0.000000e+00> : vector<4x128xf32>
    %90 = tpu.matmul %88, %89, %cst_76 {dimension_numbers = #tpu.dot_dimension_numbers<[1], [0], [0], [1], [0, 0, 1, 1], [], []>} : vector<4x128xf32>, vector<128x128xf32>, vector<4x128xf32> -> vector<4x128xf32>
    %91 = vector.extract_strided_slice %90 {offsets = [0, 0], sizes = [2, 128], strides = [1, 1]} : vector<4x128xf32> to vector<2x128xf32>
    %92 = vector.extract_strided_slice %90 {offsets = [2, 0], sizes = [2, 128], strides = [1, 1]} : vector<4x128xf32> to vector<2x128xf32>
    %93 = arith.mulf %91, %91 : vector<2x128xf32>
    %94 = arith.subf %92, %93 : vector<2x128xf32>
    %cst_77 = arith.constant 9.99999997E-7 : f32
    %95 = vector.broadcast %cst_77 : f32 to vector<2x128xf32>
    %96 = arith.addf %94, %95 : vector<2x128xf32>
    %97 = math.rsqrt %96 : vector<2x128xf32>
    %c0_78 = arith.constant 0 : index
    %c0_79 = arith.constant 0 : index
    %c0_80 = arith.constant 0 : index
    %98 = vector.load %arg10[%c0_78, %c0_79, %c0_80] : memref<1x1x128xf32, #tpu.memory_space<vmem>>, vector<1x1x128xf32>
    %99 = vector.shape_cast %98 : vector<1x1x128xf32> to vector<1x128xf32>
    %100 = vector.broadcast %99 : vector<1x128xf32> to vector<2x128xf32>
    %101 = arith.mulf %97, %100 : vector<2x128xf32>
    %c0_81 = arith.constant 0 : index
    %c0_82 = arith.constant 0 : index
    %c0_83 = arith.constant 0 : index
    %102 = vector.load %arg11[%c0_81, %c0_82, %c0_83] : memref<1x1x128xf32, #tpu.memory_space<vmem>>, vector<1x1x128xf32>
    %103 = vector.shape_cast %102 : vector<1x1x128xf32> to vector<1x128xf32>
    %104 = arith.mulf %91, %101 : vector<2x128xf32>
    %105 = vector.broadcast %103 : vector<1x128xf32> to vector<2x128xf32>
    %106 = arith.subf %105, %104 : vector<2x128xf32>
    %107 = vector.shape_cast %101 : vector<2x128xf32> to vector<2x1x128xf32>
    %108 = vector.broadcast %107 : vector<2x1x128xf32> to vector<2x64x128xf32>
    %109 = arith.mulf %84, %108 : vector<2x64x128xf32>
    %110 = vector.shape_cast %106 : vector<2x128xf32> to vector<2x1x128xf32>
    %111 = vector.broadcast %110 : vector<2x1x128xf32> to vector<2x64x128xf32>
    %112 = arith.addf %109, %111 : vector<2x64x128xf32>
    %113 = vector.extract_strided_slice %112 {offsets = [0, 0, 0], sizes = [2, 64, 64], strides = [1, 1, 1]} : vector<2x64x128xf32> to vector<2x64x64xf32>
    %114 = vector.extract_strided_slice %112 {offsets = [0, 0, 64], sizes = [2, 64, 64], strides = [1, 1, 1]} : vector<2x64x128xf32> to vector<2x64x64xf32>
    %115 = arith.negf %114 : vector<2x64x64xf32>
    %116 = math.exp %115 : vector<2x64x64xf32>
    %cst_84 = arith.constant 1.000000e+00 : f32
    %117 = vector.broadcast %cst_84 : f32 to vector<2x64x64xf32>
    %118 = arith.addf %117, %116 : vector<2x64x64xf32>
    %119 = arith.divf %117, %118 : vector<2x64x64xf32>
    %120 = arith.mulf %113, %119 : vector<2x64x64xf32>
    %121 = vector.shape_cast %120 : vector<2x64x64xf32> to vector<2x8x8x64xf32>
    %122 = arith.addf %3, %121 : vector<2x8x8x64xf32>
    %c0_85 = arith.constant 0 : index
    %c0_86 = arith.constant 0 : index
    %c0_87 = arith.constant 0 : index
    %c0_88 = arith.constant 0 : index
    %123 = vector.load %arg13[%c0_85, %c0_86, %c0_87, %c0_88] : memref<2x8x8x64xf32, #tpu.memory_space<vmem>>, vector<2x8x8x64xf32>
    tpu.vector_store %arg13[%c0_85, %c0_86, %c0_87, %c0_88], %122 {strides = array<i32>} : memref<2x8x8x64xf32, #tpu.memory_space<vmem>>, vector<2x8x8x64xf32>,
    return
  }
  func.func @transform_0(%arg0: i32, %arg1: i32) -> (i32, i32, i32, i32) {
    %c0_i32 = arith.constant 0 : i32
    %c0_i32_0 = arith.constant 0 : i32
    %c0_i32_1 = arith.constant 0 : i32
    %c0_i32_2 = arith.constant 0 : i32
    return %arg0, %c0_i32, %c0_i32_0, %c0_i32_1 : i32, i32, i32, i32
  }
  func.func @transform_1(%arg0: i32, %arg1: i32) -> (i32, i32, i32) {
    %c0_i32 = arith.constant 0 : i32
    %c0_i32_0 = arith.constant 0 : i32
    %c0_i32_1 = arith.constant 0 : i32
    return %arg1, %c0_i32, %c0_i32_0 : i32, i32, i32
  }
  func.func @transform_2(%arg0: i32, %arg1: i32) -> (i32, i32, i32) {
    %c0_i32 = arith.constant 0 : i32
    %c0_i32_0 = arith.constant 0 : i32
    %c0_i32_1 = arith.constant 0 : i32
    return %arg1, %c0_i32, %c0_i32_0 : i32, i32, i32
  }
  func.func @transform_3(%arg0: i32, %arg1: i32) -> (i32, i32, i32) {
    %c0_i32 = arith.constant 0 : i32
    %c0_i32_0 = arith.constant 0 : i32
    %c0_i32_1 = arith.constant 0 : i32
    return %arg1, %c0_i32, %c0_i32_0 : i32, i32, i32
  }
  func.func @transform_4(%arg0: i32, %arg1: i32) -> (i32, i32, i32) {
    %c0_i32 = arith.constant 0 : i32
    %c0_i32_0 = arith.constant 0 : i32
    %c0_i32_1 = arith.constant 0 : i32
    return %arg1, %c0_i32, %c0_i32_0 : i32, i32, i32
  }
  func.func @transform_5(%arg0: i32, %arg1: i32) -> (i32, i32) {
    %c0_i32 = arith.constant 0 : i32
    %c0_i32_0 = arith.constant 0 : i32
    %c0_i32_1 = arith.constant 0 : i32
    return %c0_i32, %c0_i32_0 : i32, i32
  }
  func.func @transform_6(%arg0: i32, %arg1: i32) -> (i32, i32, i32) {
    %c0_i32 = arith.constant 0 : i32
    %c0_i32_0 = arith.constant 0 : i32
    %c0_i32_1 = arith.constant 0 : i32
    return %arg1, %c0_i32, %c0_i32_0 : i32, i32, i32
  }
  func.func @transform_7(%arg0: i32, %arg1: i32) -> (i32, i32, i32) {
    %c0_i32 = arith.constant 0 : i32
    %c0_i32_0 = arith.constant 0 : i32
    %c0_i32_1 = arith.constant 0 : i32
    return %arg1, %c0_i32, %c0_i32_0 : i32, i32, i32
  }
  func.func @transform_8(%arg0: i32, %arg1: i32) -> (i32, i32, i32) {
    %c0_i32 = arith.constant 0 : i32
    %c0_i32_0 = arith.constant 0 : i32
    %c0_i32_1 = arith.constant 0 : i32
    return %arg1, %c0_i32, %c0_i32_0 : i32, i32, i32
  }
  func.func @transform_9(%arg0: i32, %arg1: i32) -> (i32, i32, i32) {
    %c0_i32 = arith.constant 0 : i32
    %c0_i32_0 = arith.constant 0 : i32
    %c0_i32_1 = arith.constant 0 : i32
    return %arg1, %c0_i32, %c0_i32_0 : i32, i32, i32
  }
  func.func @transform_10(%arg0: i32, %arg1: i32) -> (i32, i32) {
    %c0_i32 = arith.constant 0 : i32
    %c0_i32_0 = arith.constant 0 : i32
    %c0_i32_1 = arith.constant 0 : i32
    return %c0_i32, %c0_i32_0 : i32, i32
  }
  func.func @transform_11(%arg0: i32, %arg1: i32) -> (i32, i32, i32, i32) {
    %c0_i32 = arith.constant 0 : i32
    %c0_i32_0 = arith.constant 0 : i32
    %c0_i32_1 = arith.constant 0 : i32
    %c0_i32_2 = arith.constant 0 : i32
    return %arg0, %c0_i32, %c0_i32_0, %c0_i32_1 : i32, i32, i32, i32
  }
}

</mosaic_0001>

<llo_original>
// kernel: tpu_custom_call.1
$region0: #{tpu_custom_call.1}
  #allocation0 [shape = 'u32[]', space=smem, size = 0x4, offset = 0x4, fixed_abs, tag = 'smem constant byte address 0x4 - core index']
  #allocation1 [shape = 'u32[144,128]{1,0:T(1,128)}', space=vmem, size = 0x12000, scoped, tag = 'internal scratch']
  #allocation2 [shape = 'bf16[2,9,9,128]{3,2,1,0:T(8,128)(2,1)}', space=vmem, size = 0x12000, scoped, tag = 'scratch operand']
  %s0 = inlined_call_operand.vmem [shape: f32[2,8,8,64], index: 0, kind: input, shape index: {}]
  %s1 = inlined_call_operand.vmem [shape: bf16[2,512,64], index: 1, kind: input, shape index: {}]
  %s2 = inlined_call_operand.vmem [shape: f32[2,1,64], index: 2, kind: input, shape index: {}]
  %s3 = inlined_call_operand.vmem [shape: f32[2,1,64], index: 3, kind: input, shape index: {}]
  %s4 = inlined_call_operand.vmem [shape: f32[2,1,64], index: 4, kind: input, shape index: {}]
  %s5 = inlined_call_operand.hbm [shape: f32[64,64], index: 5, kind: input, shape index: {}]
  %s6 = inlined_call_operand.vmem [shape: bf16[2,512,128], index: 6, kind: input, shape index: {}]
  %s7 = inlined_call_operand.vmem [shape: f32[2,1,128], index: 7, kind: input, shape index: {}]
  %s8 = inlined_call_operand.vmem [shape: f32[2,1,128], index: 8, kind: input, shape index: {}]
  %s9 = inlined_call_operand.vmem [shape: f32[2,1,128], index: 9, kind: input, shape index: {}]
  %s10 = inlined_call_operand.vmem [shape: f32[128,128], index: 10, kind: input, shape index: {}]
  %s11 = inlined_call_operand.hbm [shape: f32[2,8,8,64], index: 11, kind: output, shape index: {}]
  %s12 = sld [smem:[#allocation0]]
  $region85: #{tpu_custom_call.1} parent=0
    _
  %s14 = ssub.s32 1, %s12
  %s15 = scalar_select 0, %s14, %s12
  $region1: #{tpu_custom_call.1} parent=0
    #allocation3 [shape = 'u8[32768]{0}', space=vmem, size = 0x8000, scoped, tag = 'input window, operand 5, single buffered']
    #allocation4 [shape = 's32[2]{0}', space=sflag, size = 0x8, scoped, tag = 'scoped memory for tpu_custom_call.1']
    #allocation5 [shape = 's32[2]{0}', space=sflag, size = 0x8, scoped, tag = 'scoped memory for tpu_custom_call.1']
    #allocation6 [shape = 'u8[65536]{0}', space=vmem, size = 0x10000, scoped, tag = 'output window, operand 0, single buffered']
    %16 = vsyncpa [#allocation4], 0
    %17 = vsyncpa [#allocation5], 0
    loop: start=0, step=1, limit=4
    $region2: #{tpu_custom_call.1} parent=1 // loop_pre_header
      _
    $region3: #{tpu_custom_call.1} parent=1 // loop_header
      %s19 = sphi 0, %s23
      %p20 = scmp.ge.s32.totalorder %s19, 4
      %s26 = sphi 0, %s38
      %s27 = sphi 0, %s34
      %s28 = sphi 0, %s26
      %s29 = sphi 0, %s27
      %s30 = sphi 0, %s28
      %s31 = sphi 0, %s29
      %s41 = sphi 0, %s43
      %s44 = sphi 0, %s41
      %s45 = sphi 0, %s44
      %s61 = sphi 0, %s45
      %s67 = sphi 0, %s69
      %s70 = sphi 0, %s67
      %s71 = sphi 0, %s70
      %s87 = sphi 0, %s71
      %s93 = sphi 0, %s95
      %s96 = sphi 0, %s93
      %s97 = sphi 0, %s96
      %s113 = sphi 0, %s97
      %s119 = sphi 0, %s121
      %s122 = sphi 0, %s119
      %s123 = sphi 0, %s122
      %s139 = sphi 0, %s123
      %s145 = sphi 0, %s147
      %s148 = sphi 0, %s145
      %s149 = sphi 0, %s148
      %s165 = sphi 0, %s149
      %s169 = sphi 0, %s169
      %s171 = sphi 0, %s169
      %s172 = sphi 0, %s171
      %s186 = sphi 0, %s172
      %s192 = sphi 0, %s194
      %s195 = sphi 0, %s192
      %s196 = sphi 0, %s195
      %s212 = sphi 0, %s196
      %s218 = sphi 0, %s220
      %s221 = sphi 0, %s218
      %s222 = sphi 0, %s221
      %s238 = sphi 0, %s222
      %s244 = sphi 0, %s246
      %s247 = sphi 0, %s244
      %s248 = sphi 0, %s247
      %s264 = sphi 0, %s248
      %s270 = sphi 0, %s272
      %s273 = sphi 0, %s270
      %s274 = sphi 0, %s273
      %s290 = sphi 0, %s274
      %s294 = sphi 0, %s294
      %s296 = sphi 0, %s294
      %s297 = sphi 0, %s296
      %s311 = sphi 0, %s297
      %s317 = sphi 0, %s319
      %s320 = sphi 0, %s317
      %s321 = sphi 0, %s320
      %s337 = sphi 0, %s321
    $region4: #{tpu_custom_call.1} parent=1 // loop_header_branch
      %22 = sbr.rel (%p20) target = $region8
    $region5: #{tpu_custom_call.1} parent=1 // loop_body
      %s24 = ssub.s32 %s19, 1
      %s25 = ssub.s32 %s19, 2
      %s32 = sadd.s32 1, %s27
      %p33 = scmp.ge.s32.totalorder %s32, 2
      %s34 = scalar_select %p33, 0, %s32
      %s35 = sadd.s32 1, %s26
      %s36 = scalar_select %p33, %s35, %s26
      %p37 = scmp.ge.s32.totalorder %s36, 1
      %s38 = scalar_select %p37, 0, %s36
      %s39 = ssub.s32 %s26, %s38
      %p40 = scmp.eq.s32.totalorder %s39, 0
      %s42 = sadd.s32 %s41, 1
      %s43 = scalar_select %p40, %s41, %s42
      %p46 = pneg %p40
      %p47 = scmp.eq.s32.totalorder %s19, 1
      %p48 = por %p46, %p47
      %p49 = scmp.ne.s32.totalorder %s41, %s44
      %p50 = scmp.eq.s32.totalorder %s19, 0
      %p51 = por %p49, %p50
      %p52 = scmp.ne.s32.totalorder %s41, %s44
      %p53 = scmp.eq.s32.totalorder %s24, 1
      %p54 = por %p52, %p53
      %p55 = scmp.ne.s32.totalorder %s44, %s45
      %p56 = scmp.eq.s32.totalorder %s24, 0
      %p57 = por %p55, %p56
      %p58 = scmp.ne.s32.totalorder %s44, %s45
      %p59 = scmp.eq.s32.totalorder %s25, 1
      %p60 = por %p58, %p59
      %p62 = scmp.ne.s32.totalorder %s45, %s61
      %p63 = scmp.eq.s32.totalorder %s25, 0
      %p64 = por %p62, %p63
      %s65 = ssub.s32 %s27, %s34
      %p66 = scmp.eq.s32.totalorder %s65, 0
      %s68 = sadd.s32 %s67, 1
      %s69 = scalar_select %p66, %s67, %s68
      %p72 = pneg %p66
      %p73 = scmp.eq.s32.totalorder %s19, 1
      %p74 = por %p72, %p73
      %p75 = scmp.ne.s32.totalorder %s67, %s70
      %p76 = scmp.eq.s32.totalorder %s19, 0
      %p77 = por %p75, %p76
      %p78 = scmp.ne.s32.totalorder %s67, %s70
      %p79 = scmp.eq.s32.totalorder %s24, 1
      %p80 = por %p78, %p79
      %p81 = scmp.ne.s32.totalorder %s70, %s71
      %p82 = scmp.eq.s32.totalorder %s24, 0
      %p83 = por %p81, %p82
      %p84 = scmp.ne.s32.totalorder %s70, %s71
      %p85 = scmp.eq.s32.totalorder %s25, 1
      %p86 = por %p84, %p85
      %p88 = scmp.ne.s32.totalorder %s71, %s87
      %p89 = scmp.eq.s32.totalorder %s25, 0
      %p90 = por %p88, %p89
      %s91 = ssub.s32 %s27, %s34
      %p92 = scmp.eq.s32.totalorder %s91, 0
      %s94 = sadd.s32 %s93, 1
      %s95 = scalar_select %p92, %s93, %s94
      %p98 = pneg %p92
      %p99 = scmp.eq.s32.totalorder %s19, 1
      %p100 = por %p98, %p99
      %p101 = scmp.ne.s32.totalorder %s93, %s96
      %p102 = scmp.eq.s32.totalorder %s19, 0
      %p103 = por %p101, %p102
      %p104 = scmp.ne.s32.totalorder %s93, %s96
      %p105 = scmp.eq.s32.totalorder %s24, 1
      %p106 = por %p104, %p105
      %p107 = scmp.ne.s32.totalorder %s96, %s97
      %p108 = scmp.eq.s32.totalorder %s24, 0
      %p109 = por %p107, %p108
      %p110 = scmp.ne.s32.totalorder %s96, %s97
      %p111 = scmp.eq.s32.totalorder %s25, 1
      %p112 = por %p110, %p111
      %p114 = scmp.ne.s32.totalorder %s97, %s113
      %p115 = scmp.eq.s32.totalorder %s25, 0
      %p116 = por %p114, %p115
      %s117 = ssub.s32 %s27, %s34
      %p118 = scmp.eq.s32.totalorder %s117, 0
      %s120 = sadd.s32 %s119, 1
      %s121 = scalar_select %p118, %s119, %s120
      %p124 = pneg %p118
      %p125 = scmp.eq.s32.totalorder %s19, 1
      %p126 = por %p124, %p125
      %p127 = scmp.ne.s32.totalorder %s119, %s122
      %p128 = scmp.eq.s32.totalorder %s19, 0
      %p129 = por %p127, %p128
      %p130 = scmp.ne.s32.totalorder %s119, %s122
      %p131 = scmp.eq.s32.totalorder %s24, 1
      %p132 = por %p130, %p131
      %p133 = scmp.ne.s32.totalorder %s122, %s123
      %p134 = scmp.eq.s32.totalorder %s24, 0
      %p135 = por %p133, %p134
      %p136 = scmp.ne.s32.totalorder %s122, %s123
      %p137 = scmp.eq.s32.totalorder %s25, 1
      %p138 = por %p136, %p137
      %p140 = scmp.ne.s32.totalorder %s123, %s139
      %p141 = scmp.eq.s32.totalorder %s25, 0
      %p142 = por %p140, %p141
      %s143 = ssub.s32 %s27, %s34
      %p144 = scmp.eq.s32.totalorder %s143, 0
      %s146 = sadd.s32 %s145, 1
      %s147 = scalar_select %p144, %s145, %s146
      %p150 = pneg %p144
      %p151 = scmp.eq.s32.totalorder %s19, 1
      %p152 = por %p150, %p151
      %p153 = scmp.ne.s32.totalorder %s145, %s148
      %p154 = scmp.eq.s32.totalorder %s19, 0
      %p155 = por %p153, %p154
      %p156 = scmp.ne.s32.totalorder %s145, %s148
      %p157 = scmp.eq.s32.totalorder %s24, 1
      %p158 = por %p156, %p157
      %p159 = scmp.ne.s32.totalorder %s148, %s149
      %p160 = scmp.eq.s32.totalorder %s24, 0
      %p161 = por %p159, %p160
      %p162 = scmp.ne.s32.totalorder %s148, %s149
      %p163 = scmp.eq.s32.totalorder %s25, 1
      %p164 = por %p162, %p163
      %p166 = scmp.ne.s32.totalorder %s149, %s165
      %p167 = scmp.eq.s32.totalorder %s25, 0
      %p168 = por %p166, %p167
      %s170 = sadd.s32 %s169, 1
      %p173 = scmp.eq.s32.totalorder %s19, 1
      %p174 = scmp.ne.s32.totalorder %s169, %s171
      %p175 = scmp.eq.s32.totalorder %s19, 0
      %p176 = por %p174, %p175
      %p177 = scmp.ne.s32.totalorder %s169, %s171
      %p178 = scmp.eq.s32.totalorder %s24, 1
      %p179 = por %p177, %p178
      %p180 = scmp.ne.s32.totalorder %s171, %s172
      %p181 = scmp.eq.s32.totalorder %s24, 0
      %p182 = por %p180, %p181
      %p183 = scmp.ne.s32.totalorder %s171, %s172
      %p184 = scmp.eq.s32.totalorder %s25, 1
      %p185 = por %p183, %p184
      %p187 = scmp.ne.s32.totalorder %s172, %s186
      %p188 = scmp.eq.s32.totalorder %s25, 0
      %p189 = por %p187, %p188
      %s190 = ssub.s32 %s27, %s34
      %p191 = scmp.eq.s32.totalorder %s190, 0
      %s193 = sadd.s32 %s192, 1
      %s194 = scalar_select %p191, %s192, %s193
      %p197 = pneg %p191
      %p198 = scmp.eq.s32.totalorder %s19, 1
      %p199 = por %p197, %p198
      %p200 = scmp.ne.s32.totalorder %s192, %s195
      %p201 = scmp.eq.s32.totalorder %s19, 0
      %p202 = por %p200, %p201
      %p203 = scmp.ne.s32.totalorder %s192, %s195
      %p204 = scmp.eq.s32.totalorder %s24, 1
      %p205 = por %p203, %p204
      %p206 = scmp.ne.s32.totalorder %s195, %s196
      %p207 = scmp.eq.s32.totalorder %s24, 0
      %p208 = por %p206, %p207
      %p209 = scmp.ne.s32.totalorder %s195, %s196
      %p210 = scmp.eq.s32.totalorder %s25, 1
      %p211 = por %p209, %p210
      %p213 = scmp.ne.s32.totalorder %s196, %s212
      %p214 = scmp.eq.s32.totalorder %s25, 0
      %p215 = por %p213, %p214
      %s216 = ssub.s32 %s27, %s34
      %p217 = scmp.eq.s32.totalorder %s216, 0
      %s219 = sadd.s32 %s218, 1
      %s220 = scalar_select %p217, %s218, %s219
      %p223 = pneg %p217
      %p224 = scmp.eq.s32.totalorder %s19, 1
      %p225 = por %p223, %p224
      %p226 = scmp.ne.s32.totalorder %s218, %s221
      %p227 = scmp.eq.s32.totalorder %s19, 0
      %p228 = por %p226, %p227
      %p229 = scmp.ne.s32.totalorder %s218, %s221
      %p230 = scmp.eq.s32.totalorder %s24, 1
      %p231 = por %p229, %p230
      %p232 = scmp.ne.s32.totalorder %s221, %s222
      %p233 = scmp.eq.s32.totalorder %s24, 0
      %p234 = por %p232, %p233
      %p235 = scmp.ne.s32.totalorder %s221, %s222
      %p236 = scmp.eq.s32.totalorder %s25, 1
      %p237 = por %p235, %p236
      %p239 = scmp.ne.s32.totalorder %s222, %s238
      %p240 = scmp.eq.s32.totalorder %s25, 0
      %p241 = por %p239, %p240
      %s242 = ssub.s32 %s27, %s34
      %p243 = scmp.eq.s32.totalorder %s242, 0
      %s245 = sadd.s32 %s244, 1
      %s246 = scalar_select %p243, %s244, %s245
      %p249 = pneg %p243
      %p250 = scmp.eq.s32.totalorder %s19, 1
      %p251 = por %p249, %p250
      %p252 = scmp.ne.s32.totalorder %s244, %s247
      %p253 = scmp.eq.s32.totalorder %s19, 0
      %p254 = por %p252, %p253
      %p255 = scmp.ne.s32.totalorder %s244, %s247
      %p256 = scmp.eq.s32.totalorder %s24, 1
      %p257 = por %p255, %p256
      %p258 = scmp.ne.s32.totalorder %s247, %s248
      %p259 = scmp.eq.s32.totalorder %s24, 0
      %p260 = por %p258, %p259
      %p261 = scmp.ne.s32.totalorder %s247, %s248
      %p262 = scmp.eq.s32.totalorder %s25, 1
      %p263 = por %p261, %p262
      %p265 = scmp.ne.s32.totalorder %s248, %s264
      %p266 = scmp.eq.s32.totalorder %s25, 0
      %p267 = por %p265, %p266
      %s268 = ssub.s32 %s27, %s34
      %p269 = scmp.eq.s32.totalorder %s268, 0
      %s271 = sadd.s32 %s270, 1
      %s272 = scalar_select %p269, %s270, %s271
      %p275 = pneg %p269
      %p276 = scmp.eq.s32.totalorder %s19, 1
      %p277 = por %p275, %p276
      %p278 = scmp.ne.s32.totalorder %s270, %s273
      %p279 = scmp.eq.s32.totalorder %s19, 0
      %p280 = por %p278, %p279
      %p281 = scmp.ne.s32.totalorder %s270, %s273
      %p282 = scmp.eq.s32.totalorder %s24, 1
      %p283 = por %p281, %p282
      %p284 = scmp.ne.s32.totalorder %s273, %s274
      %p285 = scmp.eq.s32.totalorder %s24, 0
      %p286 = por %p284, %p285
      %p287 = scmp.ne.s32.totalorder %s273, %s274
      %p288 = scmp.eq.s32.totalorder %s25, 1
      %p289 = por %p287, %p288
      %p291 = scmp.ne.s32.totalorder %s274, %s290
      %p292 = scmp.eq.s32.totalorder %s25, 0
      %p293 = por %p291, %p292
      %s295 = sadd.s32 %s294, 1
      %p298 = scmp.eq.s32.totalorder %s19, 1
      %p299 = scmp.ne.s32.totalorder %s294, %s296
      %p300 = scmp.eq.s32.totalorder %s19, 0
      %p301 = por %p299, %p300
      %p302 = scmp.ne.s32.totalorder %s294, %s296
      %p303 = scmp.eq.s32.totalorder %s24, 1
      %p304 = por %p302, %p303
      %p305 = scmp.ne.s32.totalorder %s296, %s297
      %p306 = scmp.eq.s32.totalorder %s24, 0
      %p307 = por %p305, %p306
      %p308 = scmp.ne.s32.totalorder %s296, %s297
      %p309 = scmp.eq.s32.totalorder %s25, 1
      %p310 = por %p308, %p309
      %p312 = scmp.ne.s32.totalorder %s297, %s311
      %p313 = scmp.eq.s32.totalorder %s25, 0
      %p314 = por %p312, %p313
      %s315 = ssub.s32 %s26, %s38
      %p316 = scmp.eq.s32.totalorder %s315, 0
      %s318 = sadd.s32 %s317, 1
      %s319 = scalar_select %p316, %s317, %s318
      %p322 = pneg %p316
      %p323 = scmp.eq.s32.totalorder %s19, 1
      %p324 = por %p322, %p323
      %p325 = scmp.ne.s32.totalorder %s317, %s320
      %p326 = scmp.eq.s32.totalorder %s19, 0
      %p327 = por %p325, %p326
      %p328 = scmp.ne.s32.totalorder %s317, %s320
      %p329 = scmp.eq.s32.totalorder %s24, 1
      %p330 = por %p328, %p329
      %p331 = scmp.ne.s32.totalorder %s320, %s321
      %p332 = scmp.eq.s32.totalorder %s24, 0
      %p333 = por %p331, %p332
      %p334 = scmp.ne.s32.totalorder %s320, %s321
      %p335 = scmp.eq.s32.totalorder %s25, 1
      %p336 = por %p334, %p335
      %p338 = scmp.ne.s32.totalorder %s321, %s337
      %p339 = scmp.eq.s32.totalorder %s25, 0
      %p340 = por %p338, %p339
      %p341 = scmp.le.s32.totalorder 1, %s19
      %p342 = scmp.lt.s32.totalorder %s19, 3
      %p343 = pnand %p341, %p342
      %p344 = pneg %p343
      // Predicated region
      $region9: #{tpu_custom_call.1} parent=5 // pred_check
        _
      $region10: #{tpu_custom_call.1} parent=5 // pred_check_branch
        %346 = sbr.rel (%p343) target = $region12
      $region11: #{tpu_custom_call.1} parent=5 // pred_region
        %s347 = ssub.s32 %s19, 1
        // Predicated region
        $region13: #{tpu_custom_call.1} parent=11 // pred_check
          %p348 = pneg %p57
        $region14: #{tpu_custom_call.1} parent=11 // pred_check_branch
          %350 = sbr.rel (%p348) target = $region16
        $region15: #{tpu_custom_call.1} parent=11 // pred_region
          %s351 = smul.u32 2, %s28
          %p352 = scmp.lt.s32.totalorder %s351, 1
          %s353 = scalar_select %p352, %s351, 1
          %s354 = smul.addr %s353, 8
          %s355 = smul.addr %s354, 8
          %s356 = scalar_lea.vmem %s0, %s355
          %s357 = smul.u32 2, %s28
        $region16: #{tpu_custom_call.1} parent=11 // pred_fallthru
          _
        // Predicated region
        $region17: #{tpu_custom_call.1} parent=11 // pred_check
          %p358 = pneg %p182
        $region18: #{tpu_custom_call.1} parent=11 // pred_check_branch
          %360 = sbr.rel (%p358) target = $region20
        $region19: #{tpu_custom_call.1} parent=11 // pred_region
          %s362 = ssub.s32 1024, 1024
          %363 = vsyncadd [#allocation4], %s362
          %s364 = sshll.u32 [#allocation3], 4
          %s365 = int_to_ptr.vmem [resolvable:$true] %s364
          %370 = dma.hbm_to_vmem [thread:$0]  %s5, 1024, %s365, [#allocation4], 128, 128, 8
        $region20: #{tpu_custom_call.1} parent=11 // pred_fallthru
          _
        // Predicated region
        $region21: #{tpu_custom_call.1} parent=11 // pred_check
          %p371 = pneg %p307
        $region22: #{tpu_custom_call.1} parent=11 // pred_check_branch
          %373 = sbr.rel (%p371) target = $region24
        $region23: #{tpu_custom_call.1} parent=11 // pred_region
          _
        $region24: #{tpu_custom_call.1} parent=11 // pred_fallthru
          _
      $region12: #{tpu_custom_call.1} parent=5 // pred_fallthru
        _
      %p374 = scmp.lt.s32.totalorder %s19, 2
      // Predicated region
      $region25: #{tpu_custom_call.1} parent=5 // pred_check
        %p375 = pneg %p374
      $region26: #{tpu_custom_call.1} parent=5 // pred_check_branch
        %377 = sbr.rel (%p375) target = $region28
      $region27: #{tpu_custom_call.1} parent=5 // pred_region
        // Predicated region
        $region29: #{tpu_custom_call.1} parent=27 // pred_check
          %p378 = pneg %p77
        $region30: #{tpu_custom_call.1} parent=27 // pred_check_branch
          %380 = sbr.rel (%p378) target = $region32
        $region31: #{tpu_custom_call.1} parent=27 // pred_region
          %p381 = scmp.lt.s32.totalorder %s27, 1
          %s382 = scalar_select %p381, %s27, 1
          %s383 = smul.addr %s382, 64
          %s384 = smul.addr %s383, 4
          %s385 = scalar_lea.vmem %s1, %s384
        $region32: #{tpu_custom_call.1} parent=27 // pred_fallthru
          _
        // Predicated region
        $region33: #{tpu_custom_call.1} parent=27 // pred_check
          %p386 = pneg %p103
        $region34: #{tpu_custom_call.1} parent=27 // pred_check_branch
          %388 = sbr.rel (%p386) target = $region36
        $region35: #{tpu_custom_call.1} parent=27 // pred_region
          %p389 = scmp.lt.s32.totalorder %s27, 1
          %s390 = scalar_select %p389, %s27, 1
          %s391 = scalar_lea.vmem %s2, %s390
        $region36: #{tpu_custom_call.1} parent=27 // pred_fallthru
          _
        // Predicated region
        $region37: #{tpu_custom_call.1} parent=27 // pred_check
          %p392 = pneg %p129
        $region38: #{tpu_custom_call.1} parent=27 // pred_check_branch
          %394 = sbr.rel (%p392) target = $region40
        $region39: #{tpu_custom_call.1} parent=27 // pred_region
          %p395 = scmp.lt.s32.totalorder %s27, 1
          %s396 = scalar_select %p395, %s27, 1
          %s397 = scalar_lea.vmem %s3, %s396
        $region40: #{tpu_custom_call.1} parent=27 // pred_fallthru
          _
        // Predicated region
        $region41: #{tpu_custom_call.1} parent=27 // pred_check
          %p398 = pneg %p155
        $region42: #{tpu_custom_call.1} parent=27 // pred_check_branch
          %400 = sbr.rel (%p398) target = $region44
        $region43: #{tpu_custom_call.1} parent=27 // pred_region
          %p401 = scmp.lt.s32.totalorder %s27, 1
          %s402 = scalar_select %p401, %s27, 1
          %s403 = scalar_lea.vmem %s4, %s402
        $region44: #{tpu_custom_call.1} parent=27 // pred_fallthru
          _
        // Predicated region
        $region45: #{tpu_custom_call.1} parent=27 // pred_check
          %p404 = pneg %p202
        $region46: #{tpu_custom_call.1} parent=27 // pred_check_branch
          %406 = sbr.rel (%p404) target = $region48
        $region47: #{tpu_custom_call.1} parent=27 // pred_region
          %p407 = scmp.lt.s32.totalorder %s27, 1
          %s408 = scalar_select %p407, %s27, 1
          %s409 = smul.addr %s408, 64
          %s410 = smul.addr %s409, 4
          %s411 = scalar_lea.vmem %s6, %s410
        $region48: #{tpu_custom_call.1} parent=27 // pred_fallthru
          _
        // Predicated region
        $region49: #{tpu_custom_call.1} parent=27 // pred_check
          %p412 = pneg %p228
        $region50: #{tpu_custom_call.1} parent=27 // pred_check_branch
          %414 = sbr.rel (%p412) target = $region52
        $region51: #{tpu_custom_call.1} parent=27 // pred_region
          %p415 = scmp.lt.s32.totalorder %s27, 1
          %s416 = scalar_select %p415, %s27, 1
          %s417 = scalar_lea.vmem %s7, %s416
        $region52: #{tpu_custom_call.1} parent=27 // pred_fallthru
          _
        // Predicated region
        $region53: #{tpu_custom_call.1} parent=27 // pred_check
          %p418 = pneg %p254
        $region54: #{tpu_custom_call.1} parent=27 // pred_check_branch
          %420 = sbr.rel (%p418) target = $region56
        $region55: #{tpu_custom_call.1} parent=27 // pred_region
          %p421 = scmp.lt.s32.totalorder %s27, 1
          %s422 = scalar_select %p421, %s27, 1
          %s423 = scalar_lea.vmem %s8, %s422
        $region56: #{tpu_custom_call.1} parent=27 // pred_fallthru
          _
        // Predicated region
        $region57: #{tpu_custom_call.1} parent=27 // pred_check
          %p424 = pneg %p280
        $region58: #{tpu_custom_call.1} parent=27 // pred_check_branch
          %426 = sbr.rel (%p424) target = $region60
        $region59: #{tpu_custom_call.1} parent=27 // pred_region
          %p427 = scmp.lt.s32.totalorder %s27, 1
          %s428 = scalar_select %p427, %s27, 1
          %s429 = scalar_lea.vmem %s9, %s428
        $region60: #{tpu_custom_call.1} parent=27 // pred_fallthru
          _
      $region28: #{tpu_custom_call.1} parent=5 // pred_fallthru
        _
      %p430 = scmp.le.s32.totalorder 1, %s19
      %p431 = scmp.lt.s32.totalorder %s19, 3
      %p432 = pnand %p430, %p431
      %p433 = pneg %p432
      // Predicated region
      $region61: #{tpu_custom_call.1} parent=5 // pred_check
        _
      $region62: #{tpu_custom_call.1} parent=5 // pred_check_branch
        %435 = sbr.rel (%p432) target = $region64
      $region63: #{tpu_custom_call.1} parent=5 // pred_region
        %s436 = ssub.s32 %s19, 1
        // Predicated region
        $region65: #{tpu_custom_call.1} parent=63 // pred_check
          %p437 = pneg %p182
        $region66: #{tpu_custom_call.1} parent=63 // pred_check_branch
          %439 = sbr.rel (%p437) target = $region68
        $region67: #{tpu_custom_call.1} parent=63 // pred_region
          %440 = dma.done [#allocation4], 1024
        $region68: #{tpu_custom_call.1} parent=63 // pred_fallthru
          _
        %s441 = smul.u32 2, %s28
        %p442 = scmp.lt.s32.totalorder %s441, 1
        %s443 = scalar_select %p442, %s441, 1
        %s444 = smul.addr %s443, 8
        %s445 = smul.addr %s444, 8
        %s446 = scalar_lea.vmem %s0, %s445
        %p447 = pneg %p57
        %p448 = pneg %p54
        %p449 = scmp.lt.s32.totalorder %s29, 1
        %s450 = scalar_select %p449, %s29, 1
        %s451 = smul.addr %s450, 64
        %s452 = smul.addr %s451, 4
        %s453 = scalar_lea.vmem %s1, %s452
        %p454 = pneg %p83
        %p455 = pneg %p80
        %p456 = scmp.lt.s32.totalorder %s29, 1
        %s457 = scalar_select %p456, %s29, 1
        %s458 = scalar_lea.vmem %s2, %s457
        %p459 = pneg %p109
        %p460 = pneg %p106
        %p461 = scmp.lt.s32.totalorder %s29, 1
        %s462 = scalar_select %p461, %s29, 1
        %s463 = scalar_lea.vmem %s3, %s462
        %p464 = pneg %p135
        %p465 = pneg %p132
        %p466 = scmp.lt.s32.totalorder %s29, 1
        %s467 = scalar_select %p466, %s29, 1
        %s468 = scalar_lea.vmem %s4, %s467
        %p469 = pneg %p161
        %p470 = pneg %p158
        %p471 = pneg %p182
        %p472 = pneg %p179
        %p473 = scmp.lt.s32.totalorder %s29, 1
        %s474 = scalar_select %p473, %s29, 1
        %s475 = smul.addr %s474, 64
        %s476 = smul.addr %s475, 4
        %s477 = scalar_lea.vmem %s6, %s476
        %p478 = pneg %p208
        %p479 = pneg %p205
        %p480 = scmp.lt.s32.totalorder %s29, 1
        %s481 = scalar_select %p480, %s29, 1
        %s482 = scalar_lea.vmem %s7, %s481
        %p483 = pneg %p234
        %p484 = pneg %p231
        %p485 = scmp.lt.s32.totalorder %s29, 1
        %s486 = scalar_select %p485, %s29, 1
        %s487 = scalar_lea.vmem %s8, %s486
        %p488 = pneg %p260
        %p489 = pneg %p257
        %p490 = scmp.lt.s32.totalorder %s29, 1
        %s491 = scalar_select %p490, %s29, 1
        %s492 = scalar_lea.vmem %s9, %s491
        %p493 = pneg %p286
        %p494 = pneg %p283
        %p495 = pneg %p307
        %p496 = pneg %p304
        %p497 = pneg %p333
        %p498 = pneg %p330
        %s499 = smul.u32 2, %s28
        %p500 = scmp.lt.s32.totalorder %s499, 1
        %s501 = scalar_select %p500, %s499, 1
        %s502 = smul.addr %s501, 8
        %s503 = smul.addr %s502, 8
        %s504 = scalar_lea.vmem %s0, %s503
        %s505 = smul.u32 2, %s28
        %p506 = scmp.lt.s32.totalorder %s29, 1
        %s507 = scalar_select %p506, %s29, 1
        %s508 = smul.addr %s507, 64
        %s509 = smul.addr %s508, 4
        %s510 = scalar_lea.vmem %s1, %s509
        %p511 = scmp.lt.s32.totalorder %s29, 1
        %s512 = scalar_select %p511, %s29, 1
        %s513 = scalar_lea.vmem %s2, %s512
        %p514 = scmp.lt.s32.totalorder %s29, 1
        %s515 = scalar_select %p514, %s29, 1
        %s516 = scalar_lea.vmem %s3, %s515
        %p517 = scmp.lt.s32.totalorder %s29, 1
        %s518 = scalar_select %p517, %s29, 1
        %s519 = scalar_lea.vmem %s4, %s518
        %p520 = scmp.lt.s32.totalorder %s29, 1
        %s521 = scalar_select %p520, %s29, 1
        %s522 = smul.addr %s521, 64
        %s523 = smul.addr %s522, 4
        %s524 = scalar_lea.vmem %s6, %s523
        %p525 = scmp.lt.s32.totalorder %s29, 1
        %s526 = scalar_select %p525, %s29, 1
        %s527 = scalar_lea.vmem %s7, %s526
        %p528 = scmp.lt.s32.totalorder %s29, 1
        %s529 = scalar_select %p528, %s29, 1
        %s530 = scalar_lea.vmem %s8, %s529
        %p531 = scmp.lt.s32.totalorder %s29, 1
        %s532 = scalar_select %p531, %s29, 1
        %s533 = scalar_lea.vmem %s9, %s532
        %s534 = smul.u32 2, %s28
        %p536 = scmp.eq.s32.totalorder %s29, 0
        // Predicated region
        $region69: #{tpu_custom_call.1} parent=63 // pred_check
          %p537 = pneg %p536
        $region70: #{tpu_custom_call.1} parent=63 // pred_check_branch
          %539 = sbr.rel (%p537) target = $region72
        $region71: #{tpu_custom_call.1} parent=63 // pred_region
          %v540 = vld [vmem:[%s504] sm:$0xff]
          %v541 = vld [vmem:[%s504 + $0x8] sm:$0xff]
          %v542 = vld [vmem:[%s504 + $0x10] sm:$0xff]
          %v543 = vld [vmem:[%s504 + $0x18] sm:$0xff]
          %v544 = vld [vmem:[%s504 + $0x20] sm:$0xff]
          %v545 = vld [vmem:[%s504 + $0x28] sm:$0xff]
          %v546 = vld [vmem:[%s504 + $0x30] sm:$0xff]
          %v547 = vld [vmem:[%s504 + $0x38] sm:$0xff]
          %v548 = vld [vmem:[%s504 + $0x40] sm:$0xff]
          %v549 = vld [vmem:[%s504 + $0x48] sm:$0xff]
          %v550 = vld [vmem:[%s504 + $0x50] sm:$0xff]
          %v551 = vld [vmem:[%s504 + $0x58] sm:$0xff]
          %v552 = vld [vmem:[%s504 + $0x60] sm:$0xff]
          %v553 = vld [vmem:[%s504 + $0x68] sm:$0xff]
          %v554 = vld [vmem:[%s504 + $0x70] sm:$0xff]
          %v555 = vld [vmem:[%s504 + $0x78] sm:$0xff]
          %vm556 = vcmask 523264
          %557 = vst.msk [vmem:[#allocation6] sm:$0xff] %vm556, %v540
          %558 = vst.msk [vmem:[#allocation6 + $0x8] sm:$0xff] %vm556, %v541
          %559 = vst.msk [vmem:[#allocation6 + $0x10] sm:$0xff] %vm556, %v542
          %560 = vst.msk [vmem:[#allocation6 + $0x18] sm:$0xff] %vm556, %v543
          %561 = vst.msk [vmem:[#allocation6 + $0x20] sm:$0xff] %vm556, %v544
          %562 = vst.msk [vmem:[#allocation6 + $0x28] sm:$0xff] %vm556, %v545
          %563 = vst.msk [vmem:[#allocation6 + $0x30] sm:$0xff] %vm556, %v546
          %564 = vst.msk [vmem:[#allocation6 + $0x38] sm:$0xff] %vm556, %v547
          %565 = vst.msk [vmem:[#allocation6 + $0x40] sm:$0xff] %vm556, %v548
          %566 = vst.msk [vmem:[#allocation6 + $0x48] sm:$0xff] %vm556, %v549
          %567 = vst.msk [vmem:[#allocation6 + $0x50] sm:$0xff] %vm556, %v550
          %568 = vst.msk [vmem:[#allocation6 + $0x58] sm:$0xff] %vm556, %v551
          %569 = vst.msk [vmem:[#allocation6 + $0x60] sm:$0xff] %vm556, %v552
          %570 = vst.msk [vmem:[#allocation6 + $0x68] sm:$0xff] %vm556, %v553
          %571 = vst.msk [vmem:[#allocation6 + $0x70] sm:$0xff] %vm556, %v554
          %572 = vst.msk [vmem:[#allocation6 + $0x78] sm:$0xff] %vm556, %v555
          %573 = vst [vmem:[#allocation2] sm:$0xf] 0
          %vm574 = vcmask 1040384
          %vm575 = vsmask.f32 256
          %vm576 = vmand %vm574, %vm575
          %v577 = vld [vmem:[#allocation2 + $0x4] sm:$0x1]
          %v578 = vsel %vm576, 0, %v577
          %579 = vst [vmem:[#allocation2 + $0x4] sm:$0x1] %v578
          %580 = vst [vmem:[#allocation2 + $0x8] sm:$0xf] 0
          %v581 = vld [vmem:[#allocation2 + $0xc] sm:$0x1]
          %v582 = vsel %vm576, 0, %v581
          %583 = vst [vmem:[#allocation2 + $0xc] sm:$0x1] %v582
          %584 = vst [vmem:[#allocation2 + $0x10] sm:$0xf] 0
          %v585 = vld [vmem:[#allocation2 + $0x14] sm:$0x1]
          %v586 = vsel %vm576, 0, %v585
          %587 = vst [vmem:[#allocation2 + $0x14] sm:$0x1] %v586
          %588 = vst [vmem:[#allocation2 + $0x18] sm:$0xf] 0
          %v589 = vld [vmem:[#allocation2 + $0x1c] sm:$0x1]
          %v590 = vsel %vm576, 0, %v589
          %591 = vst [vmem:[#allocation2 + $0x1c] sm:$0x1] %v590
          %592 = vst [vmem:[#allocation2 + $0x20] sm:$0xf] 0
          %v593 = vld [vmem:[#allocation2 + $0x24] sm:$0x1]
          %v594 = vsel %vm576, 0, %v593
          %595 = vst [vmem:[#allocation2 + $0x24] sm:$0x1] %v594
          %596 = vst [vmem:[#allocation2 + $0x28] sm:$0xf] 0
          %v597 = vld [vmem:[#allocation2 + $0x2c] sm:$0x1]
          %v598 = vsel %vm576, 0, %v597
          %599 = vst [vmem:[#allocation2 + $0x2c] sm:$0x1] %v598
          %600 = vst [vmem:[#allocation2 + $0x30] sm:$0xf] 0
          %v601 = vld [vmem:[#allocation2 + $0x34] sm:$0x1]
          %v602 = vsel %vm576, 0, %v601
          %603 = vst [vmem:[#allocation2 + $0x34] sm:$0x1] %v602
          %604 = vst [vmem:[#allocation2 + $0x38] sm:$0xf] 0
          %v605 = vld [vmem:[#allocation2 + $0x3c] sm:$0x1]
          %v606 = vsel %vm576, 0, %v605
          %607 = vst [vmem:[#allocation2 + $0x3c] sm:$0x1] %v606
          %608 = vst [vmem:[#allocation2 + $0x40] sm:$0xf] 0
          %v609 = vld [vmem:[#allocation2 + $0x44] sm:$0x1]
          %v610 = vsel %vm576, 0, %v609
          %611 = vst [vmem:[#allocation2 + $0x44] sm:$0x1] %v610
          %612 = vst [vmem:[#allocation2 + $0x48] sm:$0xf] 0
          %v613 = vld [vmem:[#allocation2 + $0x4c] sm:$0x1]
          %v614 = vsel %vm576, 0, %v613
          %615 = vst [vmem:[#allocation2 + $0x4c] sm:$0x1] %v614
          %616 = vst [vmem:[#allocation2 + $0x50] sm:$0xf] 0
          %v617 = vld [vmem:[#allocation2 + $0x54] sm:$0x1]
          %v618 = vsel %vm576, 0, %v617
          %619 = vst [vmem:[#allocation2 + $0x54] sm:$0x1] %v618
          %620 = vst [vmem:[#allocation2 + $0x58] sm:$0xf] 0
          %v621 = vld [vmem:[#allocation2 + $0x5c] sm:$0x1]
          %v622 = vsel %vm576, 0, %v621
          %623 = vst [vmem:[#allocation2 + $0x5c] sm:$0x1] %v622
          %624 = vst [vmem:[#allocation2 + $0x60] sm:$0xf] 0
          %v625 = vld [vmem:[#allocation2 + $0x64] sm:$0x1]
          %v626 = vsel %vm576, 0, %v625
          %627 = vst [vmem:[#allocation2 + $0x64] sm:$0x1] %v626
          %628 = vst [vmem:[#allocation2 + $0x68] sm:$0xf] 0
          %v629 = vld [vmem:[#allocation2 + $0x6c] sm:$0x1]
          %v630 = vsel %vm576, 0, %v629
          %631 = vst [vmem:[#allocation2 + $0x6c] sm:$0x1] %v630
          %632 = vst [vmem:[#allocation2 + $0x70] sm:$0xf] 0
          %v633 = vld [vmem:[#allocation2 + $0x74] sm:$0x1]
          %v634 = vsel %vm576, 0, %v633
          %635 = vst [vmem:[#allocation2 + $0x74] sm:$0x1] %v634
          %636 = vst [vmem:[#allocation2 + $0x78] sm:$0xf] 0
          %v637 = vld [vmem:[#allocation2 + $0x7c] sm:$0x1]
          %v638 = vsel %vm576, 0, %v637
          %639 = vst [vmem:[#allocation2 + $0x7c] sm:$0x1] %v638
          %640 = vst [vmem:[#allocation2 + $0x80] sm:$0xf] 0
          %v641 = vld [vmem:[#allocation2 + $0x84] sm:$0x1]
          %v642 = vsel %vm576, 0, %v641
          %643 = vst [vmem:[#allocation2 + $0x84] sm:$0x1] %v642
          %644 = vst [vmem:[#allocation2 + $0x88] sm:$0xf] 0
          %v645 = vld [vmem:[#allocation2 + $0x8c] sm:$0x1]
          %v646 = vsel %vm576, 0, %v645
          %647 = vst [vmem:[#allocation2 + $0x8c] sm:$0x1] %v646
        $region72: #{tpu_custom_call.1} parent=63 // pred_fallthru
          _
        %v648 = vld [vmem:[#allocation6] sm:$0xff]
        %v649 = vld [vmem:[#allocation6 + $0x8] sm:$0xff]
        %v650 = vld [vmem:[#allocation6 + $0x10] sm:$0xff]
        %v651 = vld [vmem:[#allocation6 + $0x18] sm:$0xff]
        %v652 = vld [vmem:[#allocation6 + $0x20] sm:$0xff]
        %v653 = vld [vmem:[#allocation6 + $0x28] sm:$0xff]
        %v654 = vld [vmem:[#allocation6 + $0x30] sm:$0xff]
        %v655 = vld [vmem:[#allocation6 + $0x38] sm:$0xff]
        %v656 = vld [vmem:[#allocation6 + $0x40] sm:$0xff]
        %v657 = vld [vmem:[#allocation6 + $0x48] sm:$0xff]
        %v658 = vld [vmem:[#allocation6 + $0x50] sm:$0xff]
        %v659 = vld [vmem:[#allocation6 + $0x58] sm:$0xff]
        %v660 = vld [vmem:[#allocation6 + $0x60] sm:$0xff]
        %v661 = vld [vmem:[#allocation6 + $0x68] sm:$0xff]
        %v662 = vld [vmem:[#allocation6 + $0x70] sm:$0xff]
        %v663 = vld [vmem:[#allocation6 + $0x78] sm:$0xff]
        %v664 = vxor.u32 %v648, 2147483648
        %v665 = vxor.u32 %v649, 2147483648
        %v666 = vxor.u32 %v650, 2147483648
        %v667 = vxor.u32 %v651, 2147483648
        %v668 = vxor.u32 %v652, 2147483648
        %v669 = vxor.u32 %v653, 2147483648
        %v670 = vxor.u32 %v654, 2147483648
        %v671 = vxor.u32 %v655, 2147483648
        %v672 = vxor.u32 %v656, 2147483648
        %v673 = vxor.u32 %v657, 2147483648
        %v674 = vxor.u32 %v658, 2147483648
        %v675 = vxor.u32 %v659, 2147483648
        %v676 = vxor.u32 %v660, 2147483648
        %v677 = vxor.u32 %v661, 2147483648
        %v678 = vxor.u32 %v662, 2147483648
        %v679 = vxor.u32 %v663, 2147483648
        %v680 = vmul.f32 %v664, 1.442695
        %v681 = vpow.pop %v680
        %v682 = vmul.f32 %v665, 1.442695
        %v683 = vpow.pop %v682
        %v684 = vmul.f32 %v666, 1.442695
        %v685 = vpow.pop %v684
        %v686 = vmul.f32 %v667, 1.442695
        %v687 = vpow.pop %v686
        %v688 = vmul.f32 %v668, 1.442695
        %v689 = vpow.pop %v688
        %v690 = vmul.f32 %v669, 1.442695
        %v691 = vpow.pop %v690
        %v692 = vmul.f32 %v670, 1.442695
        %v693 = vpow.pop %v692
        %v694 = vmul.f32 %v671, 1.442695
        %v695 = vpow.pop %v694
        %v696 = vmul.f32 %v672, 1.442695
        %v697 = vpow.pop %v696
        %v698 = vmul.f32 %v673, 1.442695
        %v699 = vpow.pop %v698
        %v700 = vmul.f32 %v674, 1.442695
        %v701 = vpow.pop %v700
        %v702 = vmul.f32 %v675, 1.442695
        %v703 = vpow.pop %v702
        %v704 = vmul.f32 %v676, 1.442695
        %v705 = vpow.pop %v704
        %v706 = vmul.f32 %v677, 1.442695
        %v707 = vpow.pop %v706
        %v708 = vmul.f32 %v678, 1.442695
        %v709 = vpow.pop %v708
        %v710 = vmul.f32 %v679, 1.442695
        %v711 = vpow.pop %v710
        %v712 = vadd.f32 %v681, 1.0
        %v713 = vadd.f32 %v683, 1.0
        %v714 = vadd.f32 %v685, 1.0
        %v715 = vadd.f32 %v687, 1.0
        %v716 = vadd.f32 %v689, 1.0
        %v717 = vadd.f32 %v691, 1.0
        %v718 = vadd.f32 %v693, 1.0
        %v719 = vadd.f32 %v695, 1.0
        %v720 = vadd.f32 %v697, 1.0
        %v721 = vadd.f32 %v699, 1.0
        %v722 = vadd.f32 %v701, 1.0
        %v723 = vadd.f32 %v703, 1.0
        %v724 = vadd.f32 %v705, 1.0
        %v725 = vadd.f32 %v707, 1.0
        %v726 = vadd.f32 %v709, 1.0
        %v727 = vadd.f32 %v711, 1.0
        %v728 = vrcp.pop %v712
        %v729 = vmul.f32 1.0, %v728
        %v730 = vrcp.pop %v713
        %v731 = vmul.f32 1.0, %v730
        %v732 = vrcp.pop %v714
        %v733 = vmul.f32 1.0, %v732
        %v734 = vrcp.pop %v715
        %v735 = vmul.f32 1.0, %v734
        %v736 = vrcp.pop %v716
        %v737 = vmul.f32 1.0, %v736
        %v738 = vrcp.pop %v717
        %v739 = vmul.f32 1.0, %v738
        %v740 = vrcp.pop %v718
        %v741 = vmul.f32 1.0, %v740
        %v742 = vrcp.pop %v719
        %v743 = vmul.f32 1.0, %v742
        %v744 = vrcp.pop %v720
        %v745 = vmul.f32 1.0, %v744
        %v746 = vrcp.pop %v721
        %v747 = vmul.f32 1.0, %v746
        %v748 = vrcp.pop %v722
        %v749 = vmul.f32 1.0, %v748
        %v750 = vrcp.pop %v723
        %v751 = vmul.f32 1.0, %v750
        %v752 = vrcp.pop %v724
        %v753 = vmul.f32 1.0, %v752
        %v754 = vrcp.pop %v725
        %v755 = vmul.f32 1.0, %v754
        %v756 = vrcp.pop %v726
        %v757 = vmul.f32 1.0, %v756
        %v758 = vrcp.pop %v727
        %v759 = vmul.f32 1.0, %v758
        %v760 = vmul.f32 %v648, %v729
        %v761 = vmul.f32 %v649, %v731
        %v762 = vmul.f32 %v650, %v733
        %v763 = vmul.f32 %v651, %v735
        %v764 = vmul.f32 %v652, %v737
        %v765 = vmul.f32 %v653, %v739
        %v766 = vmul.f32 %v654, %v741
        %v767 = vmul.f32 %v655, %v743
        %v768 = vmul.f32 %v656, %v745
        %v769 = vmul.f32 %v657, %v747
        %v770 = vmul.f32 %v658, %v749
        %v771 = vmul.f32 %v659, %v751
        %v772 = vmul.f32 %v660, %v753
        %v773 = vmul.f32 %v661, %v755
        %v774 = vmul.f32 %v662, %v757
        %v775 = vmul.f32 %v663, %v759
        %v776 = vsub.f32 %v729, 1.0
        %v777 = vsub.f32 %v731, 1.0
        %v778 = vsub.f32 %v733, 1.0
        %v779 = vsub.f32 %v735, 1.0
        %v780 = vsub.f32 %v737, 1.0
        %v781 = vsub.f32 %v739, 1.0
        %v782 = vsub.f32 %v741, 1.0
        %v783 = vsub.f32 %v743, 1.0
        %v784 = vsub.f32 %v745, 1.0
        %v785 = vsub.f32 %v747, 1.0
        %v786 = vsub.f32 %v749, 1.0
        %v787 = vsub.f32 %v751, 1.0
        %v788 = vsub.f32 %v753, 1.0
        %v789 = vsub.f32 %v755, 1.0
        %v790 = vsub.f32 %v757, 1.0
        %v791 = vsub.f32 %v759, 1.0
        %v792 = vmul.f32 %v648, %v776
        %v793 = vmul.f32 %v649, %v777
        %v794 = vmul.f32 %v650, %v778
        %v795 = vmul.f32 %v651, %v779
        %v796 = vmul.f32 %v652, %v780
        %v797 = vmul.f32 %v653, %v781
        %v798 = vmul.f32 %v654, %v782
        %v799 = vmul.f32 %v655, %v783
        %v800 = vmul.f32 %v656, %v784
        %v801 = vmul.f32 %v657, %v785
        %v802 = vmul.f32 %v658, %v786
        %v803 = vmul.f32 %v659, %v787
        %v804 = vmul.f32 %v660, %v788
        %v805 = vmul.f32 %v661, %v789
        %v806 = vmul.f32 %v662, %v790
        %v807 = vmul.f32 %v663, %v791
        %824 = vrot.lane.b32.xlu0 %v792, 64
        %v825 = vpop.permute.xlu0 %824
        %826 = vrot.lane.b32.xlu0 %v793, 64
        %v827 = vpop.permute.xlu0 %826
        %828 = vrot.lane.b32.xlu0 %v794, 64
        %v829 = vpop.permute.xlu0 %828
        %830 = vrot.lane.b32.xlu0 %v795, 64
        %v831 = vpop.permute.xlu0 %830
        %832 = vrot.lane.b32.xlu0 %v796, 64
        %v833 = vpop.permute.xlu0 %832
        %834 = vrot.lane.b32.xlu0 %v797, 64
        %v835 = vpop.permute.xlu0 %834
        %836 = vrot.lane.b32.xlu0 %v798, 64
        %v837 = vpop.permute.xlu0 %836
        %838 = vrot.lane.b32.xlu0 %v799, 64
        %v839 = vpop.permute.xlu0 %838
        %840 = vrot.lane.b32.xlu0 %v800, 64
        %v841 = vpop.permute.xlu0 %840
        %842 = vrot.lane.b32.xlu0 %v801, 64
        %v843 = vpop.permute.xlu0 %842
        %844 = vrot.lane.b32.xlu0 %v802, 64
        %v845 = vpop.permute.xlu0 %844
        %846 = vrot.lane.b32.xlu0 %v803, 64
        %v847 = vpop.permute.xlu0 %846
        %848 = vrot.lane.b32.xlu0 %v804, 64
        %v849 = vpop.permute.xlu0 %848
        %850 = vrot.lane.b32.xlu0 %v805, 64
        %v851 = vpop.permute.xlu0 %850
        %852 = vrot.lane.b32.xlu0 %v806, 64
        %v853 = vpop.permute.xlu0 %852
        %854 = vrot.lane.b32.xlu0 %v807, 64
        %v855 = vpop.permute.xlu0 %854
        %vm872 = vcmask 523264
        %v873 = vsel %vm872, %v760, %v825
        %v874 = vsel %vm872, %v761, %v827
        %v875 = vsel %vm872, %v762, %v829
        %v876 = vsel %vm872, %v763, %v831
        %v877 = vsel %vm872, %v764, %v833
        %v878 = vsel %vm872, %v765, %v835
        %v879 = vsel %vm872, %v766, %v837
        %v880 = vsel %vm872, %v767, %v839
        %v881 = vsel %vm872, %v768, %v841
        %v882 = vsel %vm872, %v769, %v843
        %v883 = vsel %vm872, %v770, %v845
        %v884 = vsel %vm872, %v771, %v847
        %v885 = vsel %vm872, %v772, %v849
        %v886 = vsel %vm872, %v773, %v851
        %v887 = vsel %vm872, %v774, %v853
        %v888 = vsel %vm872, %v775, %v855
        %v889 = vpack.c.bf16 %v873, %v873
        %v890 = vpack.c.bf16 %v874, %v874
        %v891 = vpack.c.bf16 %v875, %v875
        %v892 = vpack.c.bf16 %v876, %v876
        %v893 = vpack.c.bf16 %v877, %v877
        %v894 = vpack.c.bf16 %v878, %v878
        %v895 = vpack.c.bf16 %v879, %v879
        %v896 = vpack.c.bf16 %v880, %v880
        %v897 = vpack.c.bf16 %v881, %v881
        %v898 = vpack.c.bf16 %v882, %v882
        %v899 = vpack.c.bf16 %v883, %v883
        %v900 = vpack.c.bf16 %v884, %v884
        %v901 = vpack.c.bf16 %v885, %v885
        %v902 = vpack.c.bf16 %v886, %v886
        %v903 = vpack.c.bf16 %v887, %v887
        %v904 = vpack.c.bf16 %v888, %v888
        %v921 = vunpack.c.l.b16 %v889
        %v922 = vunpack.c.l.b16 %v890
        %v923 = vunpack.c.l.b16 %v891
        %v924 = vunpack.c.l.b16 %v892
        %v925 = vunpack.c.l.b16 %v893
        %v926 = vunpack.c.l.b16 %v894
        %v927 = vunpack.c.l.b16 %v895
        %v928 = vunpack.c.l.b16 %v896
        %v929 = vunpack.c.l.b16 %v897
        %v930 = vunpack.c.l.b16 %v898
        %v931 = vunpack.c.l.b16 %v899
        %v932 = vunpack.c.l.b16 %v900
        %v933 = vunpack.c.l.b16 %v901
        %v934 = vunpack.c.l.b16 %v902
        %v935 = vunpack.c.l.b16 %v903
        %v936 = vunpack.c.l.b16 %v904
        %v937 = vpack.c.b16 %v921, %v921
        %v938 = vpack.c.b16 %v922, %v922
        %v939 = vpack.c.b16 %v923, %v923
        %v940 = vpack.c.b16 %v924, %v924
        %v941 = vpack.c.b16 %v925, %v925
        %v942 = vpack.c.b16 %v926, %v926
        %v943 = vpack.c.b16 %v927, %v927
        %v944 = vpack.c.b16 %v928, %v928
        %v945 = vpack.c.b16 %v929, %v929
        %v946 = vpack.c.b16 %v930, %v930
        %v947 = vpack.c.b16 %v931, %v931
        %v948 = vpack.c.b16 %v932, %v932
        %v949 = vpack.c.b16 %v933, %v933
        %v950 = vpack.c.b16 %v934, %v934
        %v951 = vpack.c.b16 %v935, %v935
        %v952 = vpack.c.b16 %v936, %v936
        %v954 = vshrl.u32 %v937, 16
        %v956 = vrot.slane %v954, 7
        %v957 = vshll.u32 %v937, 16
        %v959 = vor.u32 %v956, %v957
        %v960 = vrot.slane %v956, 4
        %v962 = vshrl.u32 %v938, 16
        %v964 = vrot.slane %v962, 7
        %v965 = vshll.u32 %v938, 16
        %v967 = vor.u32 %v964, %v965
        %v968 = vrot.slane %v964, 4
        %v970 = vshrl.u32 %v939, 16
        %v972 = vrot.slane %v970, 7
        %v973 = vshll.u32 %v939, 16
        %v975 = vor.u32 %v972, %v973
        %v976 = vrot.slane %v972, 4
        %v978 = vshrl.u32 %v940, 16
        %v980 = vrot.slane %v978, 7
        %v981 = vshll.u32 %v940, 16
        %v983 = vor.u32 %v980, %v981
        %v984 = vrot.slane %v980, 4
        %v986 = vshrl.u32 %v941, 16
        %v988 = vrot.slane %v986, 7
        %v989 = vshll.u32 %v941, 16
        %v991 = vor.u32 %v988, %v989
        %v992 = vrot.slane %v988, 4
        %v994 = vshrl.u32 %v942, 16
        %v996 = vrot.slane %v994, 7
        %v997 = vshll.u32 %v942, 16
        %v999 = vor.u32 %v996, %v997
        %v1000 = vrot.slane %v996, 4
        %v1002 = vshrl.u32 %v943, 16
        %v1004 = vrot.slane %v1002, 7
        %v1005 = vshll.u32 %v943, 16
        %v1007 = vor.u32 %v1004, %v1005
        %v1008 = vrot.slane %v1004, 4
        %v1010 = vshrl.u32 %v944, 16
        %v1012 = vrot.slane %v1010, 7
        %v1013 = vshll.u32 %v944, 16
        %v1015 = vor.u32 %v1012, %v1013
        %v1016 = vrot.slane %v1012, 4
        %v1018 = vshrl.u32 %v945, 16
        %v1020 = vrot.slane %v1018, 7
        %v1021 = vshll.u32 %v945, 16
        %v1023 = vor.u32 %v1020, %v1021
        %v1024 = vrot.slane %v1020, 4
        %v1026 = vshrl.u32 %v946, 16
        %v1028 = vrot.slane %v1026, 7
        %v1029 = vshll.u32 %v946, 16
        %v1031 = vor.u32 %v1028, %v1029
        %v1032 = vrot.slane %v1028, 4
        %v1034 = vshrl.u32 %v947, 16
        %v1036 = vrot.slane %v1034, 7
        %v1037 = vshll.u32 %v947, 16
        %v1039 = vor.u32 %v1036, %v1037
        %v1040 = vrot.slane %v1036, 4
        %v1042 = vshrl.u32 %v948, 16
        %v1044 = vrot.slane %v1042, 7
        %v1045 = vshll.u32 %v948, 16
        %v1047 = vor.u32 %v1044, %v1045
        %v1048 = vrot.slane %v1044, 4
        %v1050 = vshrl.u32 %v949, 16
        %v1052 = vrot.slane %v1050, 7
        %v1053 = vshll.u32 %v949, 16
        %v1055 = vor.u32 %v1052, %v1053
        %v1056 = vrot.slane %v1052, 4
        %v1058 = vshrl.u32 %v950, 16
        %v1060 = vrot.slane %v1058, 7
        %v1061 = vshll.u32 %v950, 16
        %v1063 = vor.u32 %v1060, %v1061
        %v1064 = vrot.slane %v1060, 4
        %v1066 = vshrl.u32 %v951, 16
        %v1068 = vrot.slane %v1066, 7
        %v1069 = vshll.u32 %v951, 16
        %v1071 = vor.u32 %v1068, %v1069
        %v1072 = vrot.slane %v1068, 4
        %v1074 = vshrl.u32 %v952, 16
        %v1076 = vrot.slane %v1074, 7
        %v1077 = vshll.u32 %v952, 16
        %v1079 = vor.u32 %v1076, %v1077
        %v1080 = vrot.slane %v1076, 4
        %s1113 = scalar_lea.vmem [#allocation2], 8
        %vm1114 = vcmask 1043456
        %vm1115 = vsmask.f32 7938
        %vm1116 = vmand %vm1114, %vm1115
        %v1117 = vld [vmem:[%s1113] sm:$0xf]
        %v1118 = vsel %vm1116, %v959, %v1117
        %1119 = vst [vmem:[%s1113] sm:$0xf] %v1118
        %vm1120 = vcmask 1040384
        %vm1121 = vsmask.f32 256
        %vm1122 = vmand %vm1120, %vm1121
        %v1123 = vld [vmem:[%s1113 + $0x4] sm:$0x1]
        %v1124 = vsel %vm1122, %v960, %v1123
        %1125 = vst [vmem:[%s1113 + $0x4] sm:$0x1] %v1124
        %v1126 = vld [vmem:[%s1113 + $0x8] sm:$0xf]
        %v1127 = vsel %vm1116, %v967, %v1126
        %1128 = vst [vmem:[%s1113 + $0x8] sm:$0xf] %v1127
        %v1129 = vld [vmem:[%s1113 + $0xc] sm:$0x1]
        %v1130 = vsel %vm1122, %v968, %v1129
        %1131 = vst [vmem:[%s1113 + $0xc] sm:$0x1] %v1130
        %v1132 = vld [vmem:[%s1113 + $0x10] sm:$0xf]
        %v1133 = vsel %vm1116, %v975, %v1132
        %1134 = vst [vmem:[%s1113 + $0x10] sm:$0xf] %v1133
        %v1135 = vld [vmem:[%s1113 + $0x14] sm:$0x1]
        %v1136 = vsel %vm1122, %v976, %v1135
        %1137 = vst [vmem:[%s1113 + $0x14] sm:$0x1] %v1136
        %v1138 = vld [vmem:[%s1113 + $0x18] sm:$0xf]
        %v1139 = vsel %vm1116, %v983, %v1138
        %1140 = vst [vmem:[%s1113 + $0x18] sm:$0xf] %v1139
        %v1141 = vld [vmem:[%s1113 + $0x1c] sm:$0x1]
        %v1142 = vsel %vm1122, %v984, %v1141
        %1143 = vst [vmem:[%s1113 + $0x1c] sm:$0x1] %v1142
        %v1144 = vld [vmem:[%s1113 + $0x20] sm:$0xf]
        %v1145 = vsel %vm1116, %v991, %v1144
        %1146 = vst [vmem:[%s1113 + $0x20] sm:$0xf] %v1145
        %v1147 = vld [vmem:[%s1113 + $0x24] sm:$0x1]
        %v1148 = vsel %vm1122, %v992, %v1147
        %1149 = vst [vmem:[%s1113 + $0x24] sm:$0x1] %v1148
        %v1150 = vld [vmem:[%s1113 + $0x28] sm:$0xf]
        %v1151 = vsel %vm1116, %v999, %v1150
        %1152 = vst [vmem:[%s1113 + $0x28] sm:$0xf] %v1151
        %v1153 = vld [vmem:[%s1113 + $0x2c] sm:$0x1]
        %v1154 = vsel %vm1122, %v1000, %v1153
        %1155 = vst [vmem:[%s1113 + $0x2c] sm:$0x1] %v1154
        %v1156 = vld [vmem:[%s1113 + $0x30] sm:$0xf]
        %v1157 = vsel %vm1116, %v1007, %v1156
        %1158 = vst [vmem:[%s1113 + $0x30] sm:$0xf] %v1157
        %v1159 = vld [vmem:[%s1113 + $0x34] sm:$0x1]
        %v1160 = vsel %vm1122, %v1008, %v1159
        %1161 = vst [vmem:[%s1113 + $0x34] sm:$0x1] %v1160
        %v1162 = vld [vmem:[%s1113 + $0x38] sm:$0xf]
        %v1163 = vsel %vm1116, %v1015, %v1162
        %1164 = vst [vmem:[%s1113 + $0x38] sm:$0xf] %v1163
        %v1165 = vld [vmem:[%s1113 + $0x3c] sm:$0x1]
        %v1166 = vsel %vm1122, %v1016, %v1165
        %1167 = vst [vmem:[%s1113 + $0x3c] sm:$0x1] %v1166
        %v1168 = vld [vmem:[%s1113 + $0x48] sm:$0xf]
        %v1169 = vsel %vm1116, %v1023, %v1168
        %1170 = vst [vmem:[%s1113 + $0x48] sm:$0xf] %v1169
        %v1171 = vld [vmem:[%s1113 + $0x4c] sm:$0x1]
        %v1172 = vsel %vm1122, %v1024, %v1171
        %1173 = vst [vmem:[%s1113 + $0x4c] sm:$0x1] %v1172
        %v1174 = vld [vmem:[%s1113 + $0x50] sm:$0xf]
        %v1175 = vsel %vm1116, %v1031, %v1174
        %1176 = vst [vmem:[%s1113 + $0x50] sm:$0xf] %v1175
        %v1177 = vld [vmem:[%s1113 + $0x54] sm:$0x1]
        %v1178 = vsel %vm1122, %v1032, %v1177
        %1179 = vst [vmem:[%s1113 + $0x54] sm:$0x1] %v1178
        %v1180 = vld [vmem:[%s1113 + $0x58] sm:$0xf]
        %v1181 = vsel %vm1116, %v1039, %v1180
        %1182 = vst [vmem:[%s1113 + $0x58] sm:$0xf] %v1181
        %v1183 = vld [vmem:[%s1113 + $0x5c] sm:$0x1]
        %v1184 = vsel %vm1122, %v1040, %v1183
        %1185 = vst [vmem:[%s1113 + $0x5c] sm:$0x1] %v1184
        %v1186 = vld [vmem:[%s1113 + $0x60] sm:$0xf]
        %v1187 = vsel %vm1116, %v1047, %v1186
        %1188 = vst [vmem:[%s1113 + $0x60] sm:$0xf] %v1187
        %v1189 = vld [vmem:[%s1113 + $0x64] sm:$0x1]
        %v1190 = vsel %vm1122, %v1048, %v1189
        %1191 = vst [vmem:[%s1113 + $0x64] sm:$0x1] %v1190
        %v1192 = vld [vmem:[%s1113 + $0x68] sm:$0xf]
        %v1193 = vsel %vm1116, %v1055, %v1192
        %1194 = vst [vmem:[%s1113 + $0x68] sm:$0xf] %v1193
        %v1195 = vld [vmem:[%s1113 + $0x6c] sm:$0x1]
        %v1196 = vsel %vm1122, %v1056, %v1195
        %1197 = vst [vmem:[%s1113 + $0x6c] sm:$0x1] %v1196
        %v1198 = vld [vmem:[%s1113 + $0x70] sm:$0xf]
        %v1199 = vsel %vm1116, %v1063, %v1198
        %1200 = vst [vmem:[%s1113 + $0x70] sm:$0xf] %v1199
        %v1201 = vld [vmem:[%s1113 + $0x74] sm:$0x1]
        %v1202 = vsel %vm1122, %v1064, %v1201
        %1203 = vst [vmem:[%s1113 + $0x74] sm:$0x1] %v1202
        %v1204 = vld [vmem:[%s1113 + $0x78] sm:$0xf]
        %v1205 = vsel %vm1116, %v1071, %v1204
        %1206 = vst [vmem:[%s1113 + $0x78] sm:$0xf] %v1205
        %v1207 = vld [vmem:[%s1113 + $0x7c] sm:$0x1]
        %v1208 = vsel %vm1122, %v1072, %v1207
        %1209 = vst [vmem:[%s1113 + $0x7c] sm:$0x1] %v1208
        %v1210 = vld [vmem:[%s1113 + $0x80] sm:$0xf]
        %v1211 = vsel %vm1116, %v1079, %v1210
        %1212 = vst [vmem:[%s1113 + $0x80] sm:$0xf] %v1211
        %v1213 = vld [vmem:[%s1113 + $0x84] sm:$0x1]
        %v1214 = vsel %vm1122, %v1080, %v1213
        %1215 = vst [vmem:[%s1113 + $0x84] sm:$0x1] %v1214
        %v1216 = vld [vmem:[#allocation2] sm:$0xf]
        %v1217 = vld [vmem:[#allocation2 + $0x8] sm:$0xf]
        %v1218 = vld [vmem:[#allocation2 + $0x10] sm:$0xf]
        %v1219 = vld [vmem:[#allocation2 + $0x18] sm:$0xf]
        %v1220 = vld [vmem:[#allocation2 + $0x20] sm:$0xf]
        %v1221 = vld [vmem:[#allocation2 + $0x28] sm:$0xf]
        %v1222 = vld [vmem:[#allocation2 + $0x30] sm:$0xf]
        %v1223 = vld [vmem:[#allocation2 + $0x38] sm:$0xf]
        %v1224 = vld [vmem:[#allocation2 + $0x48] sm:$0xf]
        %v1225 = vld [vmem:[#allocation2 + $0x50] sm:$0xf]
        %v1226 = vld [vmem:[#allocation2 + $0x58] sm:$0xf]
        %v1227 = vld [vmem:[#allocation2 + $0x60] sm:$0xf]
        %v1228 = vld [vmem:[#allocation2 + $0x68] sm:$0xf]
        %v1229 = vld [vmem:[#allocation2 + $0x70] sm:$0xf]
        %v1230 = vld [vmem:[#allocation2 + $0x78] sm:$0xf]
        %v1231 = vld [vmem:[#allocation2 + $0x80] sm:$0xf]
        %v1232 = vld [vmem:[#allocation2 + $0x4] sm:$0x1]
        %v1233 = vld [vmem:[#allocation2 + $0xc] sm:$0x1]
        %v1234 = vld [vmem:[#allocation2 + $0x14] sm:$0x1]
        %v1235 = vld [vmem:[#allocation2 + $0x1c] sm:$0x1]
        %v1236 = vld [vmem:[#allocation2 + $0x24] sm:$0x1]
        %v1237 = vld [vmem:[#allocation2 + $0x2c] sm:$0x1]
        %v1238 = vld [vmem:[#allocation2 + $0x34] sm:$0x1]
        %v1239 = vld [vmem:[#allocation2 + $0x3c] sm:$0x1]
        %v1240 = vld [vmem:[#allocation2 + $0x4c] sm:$0x1]
        %v1241 = vld [vmem:[#allocation2 + $0x54] sm:$0x1]
        %v1242 = vld [vmem:[#allocation2 + $0x5c] sm:$0x1]
        %v1243 = vld [vmem:[#allocation2 + $0x64] sm:$0x1]
        %v1244 = vld [vmem:[#allocation2 + $0x6c] sm:$0x1]
        %v1245 = vld [vmem:[#allocation2 + $0x74] sm:$0x1]
        %v1246 = vld [vmem:[#allocation2 + $0x7c] sm:$0x1]
        %v1247 = vld [vmem:[#allocation2 + $0x84] sm:$0x1]
        %v1248 = vld [vmem:[%s1113] sm:$0xf]
        %v1249 = vld [vmem:[%s1113 + $0x8] sm:$0xf]
        %v1250 = vld [vmem:[%s1113 + $0x10] sm:$0xf]
        %v1251 = vld [vmem:[%s1113 + $0x18] sm:$0xf]
        %v1252 = vld [vmem:[%s1113 + $0x20] sm:$0xf]
        %v1253 = vld [vmem:[%s1113 + $0x28] sm:$0xf]
        %v1254 = vld [vmem:[%s1113 + $0x30] sm:$0xf]
        %v1255 = vld [vmem:[%s1113 + $0x38] sm:$0xf]
        %v1256 = vld [vmem:[%s1113 + $0x48] sm:$0xf]
        %v1257 = vld [vmem:[%s1113 + $0x50] sm:$0xf]
        %v1258 = vld [vmem:[%s1113 + $0x58] sm:$0xf]
        %v1259 = vld [vmem:[%s1113 + $0x60] sm:$0xf]
        %v1260 = vld [vmem:[%s1113 + $0x68] sm:$0xf]
        %v1261 = vld [vmem:[%s1113 + $0x70] sm:$0xf]
        %v1262 = vld [vmem:[%s1113 + $0x78] sm:$0xf]
        %v1263 = vld [vmem:[%s1113 + $0x80] sm:$0xf]
        %v1264 = vld [vmem:[%s1113 + $0x4] sm:$0x1]
        %v1265 = vld [vmem:[%s1113 + $0xc] sm:$0x1]
        %v1266 = vld [vmem:[%s1113 + $0x14] sm:$0x1]
        %v1267 = vld [vmem:[%s1113 + $0x1c] sm:$0x1]
        %v1268 = vld [vmem:[%s1113 + $0x24] sm:$0x1]
        %v1269 = vld [vmem:[%s1113 + $0x2c] sm:$0x1]
        %v1270 = vld [vmem:[%s1113 + $0x34] sm:$0x1]
        %v1271 = vld [vmem:[%s1113 + $0x3c] sm:$0x1]
        %v1272 = vld [vmem:[%s1113 + $0x4c] sm:$0x1]
        %v1273 = vld [vmem:[%s1113 + $0x54] sm:$0x1]
        %v1274 = vld [vmem:[%s1113 + $0x5c] sm:$0x1]
        %v1275 = vld [vmem:[%s1113 + $0x64] sm:$0x1]
        %v1276 = vld [vmem:[%s1113 + $0x6c] sm:$0x1]
        %v1277 = vld [vmem:[%s1113 + $0x74] sm:$0x1]
        %v1278 = vld [vmem:[%s1113 + $0x7c] sm:$0x1]
        %v1279 = vld [vmem:[%s1113 + $0x84] sm:$0x1]
        %v1312 = vunpack.c.l.b16 %v1216
        %v1313 = vunpack.c.l.b16 %v1232
        %v1314 = vunpack.c.l.b16 %v1217
        %v1315 = vunpack.c.l.b16 %v1233
        %v1316 = vunpack.c.l.b16 %v1218
        %v1317 = vunpack.c.l.b16 %v1234
        %v1318 = vunpack.c.l.b16 %v1219
        %v1319 = vunpack.c.l.b16 %v1235
        %v1320 = vunpack.c.l.b16 %v1220
        %v1321 = vunpack.c.l.b16 %v1236
        %v1322 = vunpack.c.l.b16 %v1221
        %v1323 = vunpack.c.l.b16 %v1237
        %v1324 = vunpack.c.l.b16 %v1222
        %v1325 = vunpack.c.l.b16 %v1238
        %v1326 = vunpack.c.l.b16 %v1223
        %v1327 = vunpack.c.l.b16 %v1239
        %v1328 = vunpack.c.l.b16 %v1224
        %v1329 = vunpack.c.l.b16 %v1240
        %v1330 = vunpack.c.l.b16 %v1225
        %v1331 = vunpack.c.l.b16 %v1241
        %v1332 = vunpack.c.l.b16 %v1226
        %v1333 = vunpack.c.l.b16 %v1242
        %v1334 = vunpack.c.l.b16 %v1227
        %v1335 = vunpack.c.l.b16 %v1243
        %v1336 = vunpack.c.l.b16 %v1228
        %v1337 = vunpack.c.l.b16 %v1244
        %v1338 = vunpack.c.l.b16 %v1229
        %v1339 = vunpack.c.l.b16 %v1245
        %v1340 = vunpack.c.l.b16 %v1230
        %v1341 = vunpack.c.l.b16 %v1246
        %v1342 = vunpack.c.l.b16 %v1231
        %v1343 = vunpack.c.l.b16 %v1247
        %v1344 = vpack.c.b16 %v1313, %v1312
        %v1345 = vpack.c.b16 %v1315, %v1314
        %v1346 = vpack.c.b16 %v1317, %v1316
        %v1347 = vpack.c.b16 %v1319, %v1318
        %v1348 = vpack.c.b16 %v1321, %v1320
        %v1349 = vpack.c.b16 %v1323, %v1322
        %v1350 = vpack.c.b16 %v1325, %v1324
        %v1351 = vpack.c.b16 %v1327, %v1326
        %v1352 = vpack.c.b16 %v1329, %v1328
        %v1353 = vpack.c.b16 %v1331, %v1330
        %v1354 = vpack.c.b16 %v1333, %v1332
        %v1355 = vpack.c.b16 %v1335, %v1334
        %v1356 = vpack.c.b16 %v1337, %v1336
        %v1357 = vpack.c.b16 %v1339, %v1338
        %v1358 = vpack.c.b16 %v1341, %v1340
        %v1359 = vpack.c.b16 %v1343, %v1342
        %v1361 = vshrl.u32 %v1344, 16
        %v1363 = vshll.u32 %v1344, 16
        %v1365 = vrot.slane %v1363, 1
        %v1366 = vor.u32 %v1361, %v1365
        %v1368 = vshrl.u32 %v1345, 16
        %v1370 = vshll.u32 %v1345, 16
        %v1372 = vrot.slane %v1370, 1
        %v1373 = vor.u32 %v1368, %v1372
        %v1375 = vshrl.u32 %v1346, 16
        %v1377 = vshll.u32 %v1346, 16
        %v1379 = vrot.slane %v1377, 1
        %v1380 = vor.u32 %v1375, %v1379
        %v1382 = vshrl.u32 %v1347, 16
        %v1384 = vshll.u32 %v1347, 16
        %v1386 = vrot.slane %v1384, 1
        %v1387 = vor.u32 %v1382, %v1386
        %v1389 = vshrl.u32 %v1348, 16
        %v1391 = vshll.u32 %v1348, 16
        %v1393 = vrot.slane %v1391, 1
        %v1394 = vor.u32 %v1389, %v1393
        %v1396 = vshrl.u32 %v1349, 16
        %v1398 = vshll.u32 %v1349, 16
        %v1400 = vrot.slane %v1398, 1
        %v1401 = vor.u32 %v1396, %v1400
        %v1403 = vshrl.u32 %v1350, 16
        %v1405 = vshll.u32 %v1350, 16
        %v1407 = vrot.slane %v1405, 1
        %v1408 = vor.u32 %v1403, %v1407
        %v1410 = vshrl.u32 %v1351, 16
        %v1412 = vshll.u32 %v1351, 16
        %v1414 = vrot.slane %v1412, 1
        %v1415 = vor.u32 %v1410, %v1414
        %v1417 = vshrl.u32 %v1352, 16
        %v1419 = vshll.u32 %v1352, 16
        %v1421 = vrot.slane %v1419, 1
        %v1422 = vor.u32 %v1417, %v1421
        %v1424 = vshrl.u32 %v1353, 16
        %v1426 = vshll.u32 %v1353, 16
        %v1428 = vrot.slane %v1426, 1
        %v1429 = vor.u32 %v1424, %v1428
        %v1431 = vshrl.u32 %v1354, 16
        %v1433 = vshll.u32 %v1354, 16
        %v1435 = vrot.slane %v1433, 1
        %v1436 = vor.u32 %v1431, %v1435
        %v1438 = vshrl.u32 %v1355, 16
        %v1440 = vshll.u32 %v1355, 16
        %v1442 = vrot.slane %v1440, 1
        %v1443 = vor.u32 %v1438, %v1442
        %v1445 = vshrl.u32 %v1356, 16
        %v1447 = vshll.u32 %v1356, 16
        %v1449 = vrot.slane %v1447, 1
        %v1450 = vor.u32 %v1445, %v1449
        %v1452 = vshrl.u32 %v1357, 16
        %v1454 = vshll.u32 %v1357, 16
        %v1456 = vrot.slane %v1454, 1
        %v1457 = vor.u32 %v1452, %v1456
        %v1459 = vshrl.u32 %v1358, 16
        %v1461 = vshll.u32 %v1358, 16
        %v1463 = vrot.slane %v1461, 1
        %v1464 = vor.u32 %v1459, %v1463
        %v1466 = vshrl.u32 %v1359, 16
        %v1468 = vshll.u32 %v1359, 16
        %v1470 = vrot.slane %v1468, 1
        %v1471 = vor.u32 %v1466, %v1470
        %v1504 = vunpack.c.l.b16 %v1248
        %v1505 = vunpack.c.l.b16 %v1264
        %v1506 = vunpack.c.l.b16 %v1249
        %v1507 = vunpack.c.l.b16 %v1265
        %v1508 = vunpack.c.l.b16 %v1250
        %v1509 = vunpack.c.l.b16 %v1266
        %v1510 = vunpack.c.l.b16 %v1251
        %v1511 = vunpack.c.l.b16 %v1267
        %v1512 = vunpack.c.l.b16 %v1252
        %v1513 = vunpack.c.l.b16 %v1268
        %v1514 = vunpack.c.l.b16 %v1253
        %v1515 = vunpack.c.l.b16 %v1269
        %v1516 = vunpack.c.l.b16 %v1254
        %v1517 = vunpack.c.l.b16 %v1270
        %v1518 = vunpack.c.l.b16 %v1255
        %v1519 = vunpack.c.l.b16 %v1271
        %v1520 = vunpack.c.l.b16 %v1256
        %v1521 = vunpack.c.l.b16 %v1272
        %v1522 = vunpack.c.l.b16 %v1257
        %v1523 = vunpack.c.l.b16 %v1273
        %v1524 = vunpack.c.l.b16 %v1258
        %v1525 = vunpack.c.l.b16 %v1274
        %v1526 = vunpack.c.l.b16 %v1259
        %v1527 = vunpack.c.l.b16 %v1275
        %v1528 = vunpack.c.l.b16 %v1260
        %v1529 = vunpack.c.l.b16 %v1276
        %v1530 = vunpack.c.l.b16 %v1261
        %v1531 = vunpack.c.l.b16 %v1277
        %v1532 = vunpack.c.l.b16 %v1262
        %v1533 = vunpack.c.l.b16 %v1278
        %v1534 = vunpack.c.l.b16 %v1263
        %v1535 = vunpack.c.l.b16 %v1279
        %v1536 = vpack.c.b16 %v1505, %v1504
        %v1537 = vpack.c.b16 %v1507, %v1506
        %v1538 = vpack.c.b16 %v1509, %v1508
        %v1539 = vpack.c.b16 %v1511, %v1510
        %v1540 = vpack.c.b16 %v1513, %v1512
        %v1541 = vpack.c.b16 %v1515, %v1514
        %v1542 = vpack.c.b16 %v1517, %v1516
        %v1543 = vpack.c.b16 %v1519, %v1518
        %v1544 = vpack.c.b16 %v1521, %v1520
        %v1545 = vpack.c.b16 %v1523, %v1522
        %v1546 = vpack.c.b16 %v1525, %v1524
        %v1547 = vpack.c.b16 %v1527, %v1526
        %v1548 = vpack.c.b16 %v1529, %v1528
        %v1549 = vpack.c.b16 %v1531, %v1530
        %v1550 = vpack.c.b16 %v1533, %v1532
        %v1551 = vpack.c.b16 %v1535, %v1534
        %v1553 = vshrl.u32 %v1536, 16
        %v1555 = vshll.u32 %v1536, 16
        %v1557 = vrot.slane %v1555, 1
        %v1558 = vor.u32 %v1553, %v1557
        %v1560 = vshrl.u32 %v1537, 16
        %v1562 = vshll.u32 %v1537, 16
        %v1564 = vrot.slane %v1562, 1
        %v1565 = vor.u32 %v1560, %v1564
        %v1567 = vshrl.u32 %v1538, 16
        %v1569 = vshll.u32 %v1538, 16
        %v1571 = vrot.slane %v1569, 1
        %v1572 = vor.u32 %v1567, %v1571
        %v1574 = vshrl.u32 %v1539, 16
        %v1576 = vshll.u32 %v1539, 16
        %v1578 = vrot.slane %v1576, 1
        %v1579 = vor.u32 %v1574, %v1578
        %v1581 = vshrl.u32 %v1540, 16
        %v1583 = vshll.u32 %v1540, 16
        %v1585 = vrot.slane %v1583, 1
        %v1586 = vor.u32 %v1581, %v1585
        %v1588 = vshrl.u32 %v1541, 16
        %v1590 = vshll.u32 %v1541, 16
        %v1592 = vrot.slane %v1590, 1
        %v1593 = vor.u32 %v1588, %v1592
        %v1595 = vshrl.u32 %v1542, 16
        %v1597 = vshll.u32 %v1542, 16
        %v1599 = vrot.slane %v1597, 1
        %v1600 = vor.u32 %v1595, %v1599
        %v1602 = vshrl.u32 %v1543, 16
        %v1604 = vshll.u32 %v1543, 16
        %v1606 = vrot.slane %v1604, 1
        %v1607 = vor.u32 %v1602, %v1606
        %v1609 = vshrl.u32 %v1544, 16
        %v1611 = vshll.u32 %v1544, 16
        %v1613 = vrot.slane %v1611, 1
        %v1614 = vor.u32 %v1609, %v1613
        %v1616 = vshrl.u32 %v1545, 16
        %v1618 = vshll.u32 %v1545, 16
        %v1620 = vrot.slane %v1618, 1
        %v1621 = vor.u32 %v1616, %v1620
        %v1623 = vshrl.u32 %v1546, 16
        %v1625 = vshll.u32 %v1546, 16
        %v1627 = vrot.slane %v1625, 1
        %v1628 = vor.u32 %v1623, %v1627
        %v1630 = vshrl.u32 %v1547, 16
        %v1632 = vshll.u32 %v1547, 16
        %v1634 = vrot.slane %v1632, 1
        %v1635 = vor.u32 %v1630, %v1634
        %v1637 = vshrl.u32 %v1548, 16
        %v1639 = vshll.u32 %v1548, 16
        %v1641 = vrot.slane %v1639, 1
        %v1642 = vor.u32 %v1637, %v1641
        %v1644 = vshrl.u32 %v1549, 16
        %v1646 = vshll.u32 %v1549, 16
        %v1648 = vrot.slane %v1646, 1
        %v1649 = vor.u32 %v1644, %v1648
        %v1651 = vshrl.u32 %v1550, 16
        %v1653 = vshll.u32 %v1550, 16
        %v1655 = vrot.slane %v1653, 1
        %v1656 = vor.u32 %v1651, %v1655
        %v1658 = vshrl.u32 %v1551, 16
        %v1660 = vshll.u32 %v1551, 16
        %v1662 = vrot.slane %v1660, 1
        %v1663 = vor.u32 %v1658, %v1662
        %v1664 = vunpack.c.l.b16 %v1366
        %v1665 = vunpack.c.l.b16 %v1558
        %v1666 = vunpack.c.l.b16 %v1373
        %v1667 = vunpack.c.l.b16 %v1565
        %v1668 = vunpack.c.l.b16 %v1380
        %v1669 = vunpack.c.l.b16 %v1572
        %v1670 = vunpack.c.l.b16 %v1387
        %v1671 = vunpack.c.l.b16 %v1579
        %v1672 = vunpack.c.l.b16 %v1394
        %v1673 = vunpack.c.l.b16 %v1586
        %v1674 = vunpack.c.l.b16 %v1401
        %v1675 = vunpack.c.l.b16 %v1593
        %v1676 = vunpack.c.l.b16 %v1408
        %v1677 = vunpack.c.l.b16 %v1600
        %v1678 = vunpack.c.l.b16 %v1415
        %v1679 = vunpack.c.l.b16 %v1607
        %v1680 = vunpack.c.l.b16 %v1422
        %v1681 = vunpack.c.l.b16 %v1614
        %v1682 = vunpack.c.l.b16 %v1429
        %v1683 = vunpack.c.l.b16 %v1621
        %v1684 = vunpack.c.l.b16 %v1436
        %v1685 = vunpack.c.l.b16 %v1628
        %v1686 = vunpack.c.l.b16 %v1443
        %v1687 = vunpack.c.l.b16 %v1635
        %v1688 = vunpack.c.l.b16 %v1450
        %v1689 = vunpack.c.l.b16 %v1642
        %v1690 = vunpack.c.l.b16 %v1457
        %v1691 = vunpack.c.l.b16 %v1649
        %v1692 = vunpack.c.l.b16 %v1464
        %v1693 = vunpack.c.l.b16 %v1656
        %v1694 = vunpack.c.l.b16 %v1471
        %v1695 = vunpack.c.l.b16 %v1663
        %v1696 = vld [vmem:[%s510] sm:$0xf]
        %v1697 = vld [vmem:[%s510 + $0x4] sm:$0xf]
        %v1698 = vld [vmem:[%s510 + $0x8] sm:$0xf]
        %v1699 = vld [vmem:[%s510 + $0xc] sm:$0xf]
        %v1700 = vld [vmem:[%s510 + $0x10] sm:$0xf]
        %v1701 = vld [vmem:[%s510 + $0x14] sm:$0xf]
        %v1702 = vld [vmem:[%s510 + $0x18] sm:$0xf]
        %v1703 = vld [vmem:[%s510 + $0x1c] sm:$0xf]
        %v1704 = vld [vmem:[%s510 + $0x20] sm:$0xf]
        %v1705 = vld [vmem:[%s510 + $0x24] sm:$0xf]
        %v1706 = vld [vmem:[%s510 + $0x28] sm:$0xf]
        %v1707 = vld [vmem:[%s510 + $0x2c] sm:$0xf]
        %v1708 = vld [vmem:[%s510 + $0x30] sm:$0xf]
        %v1709 = vld [vmem:[%s510 + $0x34] sm:$0xf]
        %v1710 = vld [vmem:[%s510 + $0x38] sm:$0xf]
        %v1711 = vld [vmem:[%s510 + $0x3c] sm:$0xf]
        %v1712 = vld [vmem:[%s510 + $0x40] sm:$0xf]
        %v1713 = vld [vmem:[%s510 + $0x44] sm:$0xf]
        %v1714 = vld [vmem:[%s510 + $0x48] sm:$0xf]
        %v1715 = vld [vmem:[%s510 + $0x4c] sm:$0xf]
        %v1716 = vld [vmem:[%s510 + $0x50] sm:$0xf]
        %v1717 = vld [vmem:[%s510 + $0x54] sm:$0xf]
        %v1718 = vld [vmem:[%s510 + $0x58] sm:$0xf]
        %v1719 = vld [vmem:[%s510 + $0x5c] sm:$0xf]
        %v1720 = vld [vmem:[%s510 + $0x60] sm:$0xf]
        %v1721 = vld [vmem:[%s510 + $0x64] sm:$0xf]
        %v1722 = vld [vmem:[%s510 + $0x68] sm:$0xf]
        %v1723 = vld [vmem:[%s510 + $0x6c] sm:$0xf]
        %v1724 = vld [vmem:[%s510 + $0x70] sm:$0xf]
        %v1725 = vld [vmem:[%s510 + $0x74] sm:$0xf]
        %v1726 = vld [vmem:[%s510 + $0x78] sm:$0xf]
        %v1727 = vld [vmem:[%s510 + $0x7c] sm:$0xf]
        %v1728 = vld [vmem:[%s510 + $0x80] sm:$0xf]
        %v1729 = vld [vmem:[%s510 + $0x84] sm:$0xf]
        %v1730 = vld [vmem:[%s510 + $0x88] sm:$0xf]
        %v1731 = vld [vmem:[%s510 + $0x8c] sm:$0xf]
        %v1732 = vld [vmem:[%s510 + $0x90] sm:$0xf]
        %v1733 = vld [vmem:[%s510 + $0x94] sm:$0xf]
        %v1734 = vld [vmem:[%s510 + $0x98] sm:$0xf]
        %v1735 = vld [vmem:[%s510 + $0x9c] sm:$0xf]
        %v1736 = vld [vmem:[%s510 + $0xa0] sm:$0xf]
        %v1737 = vld [vmem:[%s510 + $0xa4] sm:$0xf]
        %v1738 = vld [vmem:[%s510 + $0xa8] sm:$0xf]
        %v1739 = vld [vmem:[%s510 + $0xac] sm:$0xf]
        %v1740 = vld [vmem:[%s510 + $0xb0] sm:$0xf]
        %v1741 = vld [vmem:[%s510 + $0xb4] sm:$0xf]
        %v1742 = vld [vmem:[%s510 + $0xb8] sm:$0xf]
        %v1743 = vld [vmem:[%s510 + $0xbc] sm:$0xf]
        %v1744 = vld [vmem:[%s510 + $0xc0] sm:$0xf]
        %v1745 = vld [vmem:[%s510 + $0xc4] sm:$0xf]
        %v1746 = vld [vmem:[%s510 + $0xc8] sm:$0xf]
        %v1747 = vld [vmem:[%s510 + $0xcc] sm:$0xf]
        %v1748 = vld [vmem:[%s510 + $0xd0] sm:$0xf]
        %v1749 = vld [vmem:[%s510 + $0xd4] sm:$0xf]
        %v1750 = vld [vmem:[%s510 + $0xd8] sm:$0xf]
        %v1751 = vld [vmem:[%s510 + $0xdc] sm:$0xf]
        %v1752 = vld [vmem:[%s510 + $0xe0] sm:$0xf]
        %v1753 = vld [vmem:[%s510 + $0xe4] sm:$0xf]
        %v1754 = vld [vmem:[%s510 + $0xe8] sm:$0xf]
        %v1755 = vld [vmem:[%s510 + $0xec] sm:$0xf]
        %v1756 = vld [vmem:[%s510 + $0xf0] sm:$0xf]
        %v1757 = vld [vmem:[%s510 + $0xf4] sm:$0xf]
        %v1758 = vld [vmem:[%s510 + $0xf8] sm:$0xf]
        %v1759 = vld [vmem:[%s510 + $0xfc] sm:$0xf]
        %v1760 = vld [vmem:[%s513] sm:$0x1]
        %v1762 = vlaneseq
        %v1763 = vshrl.u32 %v1762, 7
        %v1764 = vsub.s32 0, %v1763
        %v1765 = vrot.slane %v1760, %v1764
        %v1767 = vpack.c.b16 %v1314, %v1312
        %v1768 = vpack.c.b16 %v1666, %v1664
        %v1769 = vpack.c.b16 %v1506, %v1504
        %v1770 = vpack.c.b16 %v1667, %v1665
        %v1771 = vpack.c.b16 %v1318, %v1316
        %v1772 = vpack.c.b16 %v1670, %v1668
        %v1773 = vpack.c.b16 %v1510, %v1508
        %v1774 = vpack.c.b16 %v1671, %v1669
        %v1775 = vpack.c.b16 %v1322, %v1320
        %v1776 = vpack.c.b16 %v1674, %v1672
        %v1777 = vpack.c.b16 %v1514, %v1512
        %v1778 = vpack.c.b16 %v1675, %v1673
        %v1779 = vpack.c.b16 %v1326, %v1324
        %v1780 = vpack.c.b16 %v1678, %v1676
        %v1781 = vpack.c.b16 %v1518, %v1516
        %v1782 = vpack.c.b16 %v1679, %v1677
        %v1783 = vpack.c.b16 %v1330, %v1328
        %v1784 = vpack.c.b16 %v1682, %v1680
        %v1785 = vpack.c.b16 %v1522, %v1520
        %v1786 = vpack.c.b16 %v1683, %v1681
        %v1787 = vpack.c.b16 %v1334, %v1332
        %v1788 = vpack.c.b16 %v1686, %v1684
        %v1789 = vpack.c.b16 %v1526, %v1524
        %v1790 = vpack.c.b16 %v1687, %v1685
        %v1791 = vpack.c.b16 %v1338, %v1336
        %v1792 = vpack.c.b16 %v1690, %v1688
        %v1793 = vpack.c.b16 %v1530, %v1528
        %v1794 = vpack.c.b16 %v1691, %v1689
        %v1795 = vpack.c.b16 %v1342, %v1340
        %v1796 = vpack.c.b16 %v1694, %v1692
        %v1797 = vpack.c.b16 %v1534, %v1532
        %v1798 = vpack.c.b16 %v1695, %v1693
        %v1895 = vunpack.c.l.b16 %v1696
        %v1896 = vunpack.c.l.b16 %v1697
        %v1897 = vunpack.c.l.b16 %v1698
        %v1898 = vunpack.c.l.b16 %v1699
        %v1899 = vunpack.c.l.b16 %v1700
        %v1900 = vunpack.c.l.b16 %v1701
        %v1901 = vunpack.c.l.b16 %v1702
        %v1902 = vunpack.c.l.b16 %v1703
        %v1903 = vunpack.c.l.b16 %v1704
        %v1904 = vunpack.c.l.b16 %v1705
        %v1905 = vunpack.c.l.b16 %v1706
        %v1906 = vunpack.c.l.b16 %v1707
        %v1907 = vunpack.c.l.b16 %v1708
        %v1908 = vunpack.c.l.b16 %v1709
        %v1909 = vunpack.c.l.b16 %v1710
        %v1910 = vunpack.c.l.b16 %v1711
        %v1911 = vunpack.c.l.b16 %v1712
        %v1912 = vunpack.c.l.b16 %v1713
        %v1913 = vunpack.c.l.b16 %v1714
        %v1914 = vunpack.c.l.b16 %v1715
        %v1915 = vunpack.c.l.b16 %v1716
        %v1916 = vunpack.c.l.b16 %v1717
        %v1917 = vunpack.c.l.b16 %v1718
        %v1918 = vunpack.c.l.b16 %v1719
        %v1919 = vunpack.c.l.b16 %v1720
        %v1920 = vunpack.c.l.b16 %v1721
        %v1921 = vunpack.c.l.b16 %v1722
        %v1922 = vunpack.c.l.b16 %v1723
        %v1923 = vunpack.c.l.b16 %v1724
        %v1924 = vunpack.c.l.b16 %v1725
        %v1925 = vunpack.c.l.b16 %v1726
        %v1926 = vunpack.c.l.b16 %v1727
        %v1927 = vunpack.c.l.b16 %v1728
        %v1928 = vunpack.c.l.b16 %v1729
        %v1929 = vunpack.c.l.b16 %v1730
        %v1930 = vunpack.c.l.b16 %v1731
        %v1931 = vunpack.c.l.b16 %v1732
        %v1932 = vunpack.c.l.b16 %v1733
        %v1933 = vunpack.c.l.b16 %v1734
        %v1934 = vunpack.c.l.b16 %v1735
        %v1935 = vunpack.c.l.b16 %v1736
        %v1936 = vunpack.c.l.b16 %v1737
        %v1937 = vunpack.c.l.b16 %v1738
        %v1938 = vunpack.c.l.b16 %v1739
        %v1939 = vunpack.c.l.b16 %v1740
        %v1940 = vunpack.c.l.b16 %v1741
        %v1941 = vunpack.c.l.b16 %v1742
        %v1942 = vunpack.c.l.b16 %v1743
        %v1943 = vunpack.c.l.b16 %v1744
        %v1944 = vunpack.c.l.b16 %v1745
        %v1945 = vunpack.c.l.b16 %v1746
        %v1946 = vunpack.c.l.b16 %v1747
        %v1947 = vunpack.c.l.b16 %v1748
        %v1948 = vunpack.c.l.b16 %v1749
        %v1949 = vunpack.c.l.b16 %v1750
        %v1950 = vunpack.c.l.b16 %v1751
        %v1951 = vunpack.c.l.b16 %v1752
        %v1952 = vunpack.c.l.b16 %v1753
        %v1953 = vunpack.c.l.b16 %v1754
        %v1954 = vunpack.c.l.b16 %v1755
        %v1955 = vunpack.c.l.b16 %v1756
        %v1956 = vunpack.c.l.b16 %v1757
        %v1957 = vunpack.c.l.b16 %v1758
        %v1958 = vunpack.c.l.b16 %v1759
        %v1959 = vpack.c.b16 %v1896, %v1895
        %v1960 = vpack.c.b16 %v1898, %v1897
        %v1961 = vpack.c.b16 %v1900, %v1899
        %v1962 = vpack.c.b16 %v1902, %v1901
        %v1963 = vpack.c.b16 %v1904, %v1903
        %v1964 = vpack.c.b16 %v1906, %v1905
        %v1965 = vpack.c.b16 %v1908, %v1907
        %v1966 = vpack.c.b16 %v1910, %v1909
        %v1967 = vpack.c.b16 %v1912, %v1911
        %v1968 = vpack.c.b16 %v1914, %v1913
        %v1969 = vpack.c.b16 %v1916, %v1915
        %v1970 = vpack.c.b16 %v1918, %v1917
        %v1971 = vpack.c.b16 %v1920, %v1919
        %v1972 = vpack.c.b16 %v1922, %v1921
        %v1973 = vpack.c.b16 %v1924, %v1923
        %v1974 = vpack.c.b16 %v1926, %v1925
        %v1975 = vpack.c.b16 %v1928, %v1927
        %v1976 = vpack.c.b16 %v1930, %v1929
        %v1977 = vpack.c.b16 %v1932, %v1931
        %v1978 = vpack.c.b16 %v1934, %v1933
        %v1979 = vpack.c.b16 %v1936, %v1935
        %v1980 = vpack.c.b16 %v1938, %v1937
        %v1981 = vpack.c.b16 %v1940, %v1939
        %v1982 = vpack.c.b16 %v1942, %v1941
        %v1983 = vpack.c.b16 %v1944, %v1943
        %v1984 = vpack.c.b16 %v1946, %v1945
        %v1985 = vpack.c.b16 %v1948, %v1947
        %v1986 = vpack.c.b16 %v1950, %v1949
        %v1987 = vpack.c.b16 %v1952, %v1951
        %v1988 = vpack.c.b16 %v1954, %v1953
        %v1989 = vpack.c.b16 %v1956, %v1955
        %v1990 = vpack.c.b16 %v1958, %v1957
        %2023 = vmatprep.subr.bf16.mxu0 0
        %2024 = vmatpush1.bf16.msra.mxu0 %v1959
        %2025 = vmatprep.subr.bf16.mxu0 0
        %2026 = vmatpush1.bf16.msra.mxu0 %v1960
        %2027 = vmatprep.subr.bf16.mxu0 0
        %2028 = vmatpush1.bf16.msra.mxu0 %v1961
        %2029 = vmatprep.subr.bf16.mxu0 0
        %2030 = vmatpush1.bf16.msra.mxu0 %v1962
        %2031 = vmatprep.subr.bf16.mxu0 0
        %2032 = vmatpush1.bf16.msra.mxu0 %v1963
        %2033 = vmatprep.subr.bf16.mxu0 0
        %2034 = vmatpush1.bf16.msra.mxu0 %v1964
        %2035 = vmatprep.subr.bf16.mxu0 0
        %2036 = vmatpush1.bf16.msra.mxu0 %v1965
        %2037 = vmatprep.subr.bf16.mxu0 0
        %2038 = vmatpush1.bf16.msra.mxu0 %v1966
        %2039 = vmatprep.subr.bf16.mxu0 0
        %2040 = vmatpush1.bf16.msra.mxu0 %v1967
        %2041 = vmatprep.subr.bf16.mxu0 0
        %2042 = vmatpush1.bf16.msra.mxu0 %v1968
        %2043 = vmatprep.subr.bf16.mxu0 0
        %2044 = vmatpush1.bf16.msra.mxu0 %v1969
        %2045 = vmatprep.subr.bf16.mxu0 0
        %2046 = vmatpush1.bf16.msra.mxu0 %v1970
        %2047 = vmatprep.subr.bf16.mxu0 0
        %2048 = vmatpush1.bf16.msra.mxu0 %v1971
        %2049 = vmatprep.subr.bf16.mxu0 0
        %2050 = vmatpush1.bf16.msra.mxu0 %v1972
        %2051 = vmatprep.subr.bf16.mxu0 0
        %2052 = vmatpush1.bf16.msra.mxu0 %v1973
        %2053 = vmatprep.subr.bf16.mxu0 0
        %2054 = vmatpush1.bf16.msra.mxu0 %v1974
        %2055 = vmatprep.mubr.bf16.mxu0 %v1768
        %2056 = vmatmul.mubr.bf16.gmra.mrb[0].mxu0 %v1767
        %v2057 = vpop.f32.mrb[0].mxu0
        %v2058 = vadd.f32 %v1765, %v2057
        %v2059 = vpop.f32.mrb[0].mxu0
        %v2060 = vpop.f32.mrb[0].mxu0
        %v2061 = vadd.f32 %v1765, %v2060
        %v2062 = vpop.f32.mrb[0].mxu0
        %2063 = vmatprep.mubr.bf16.mxu0 %v1772
        %2064 = vmatmul.mubr.bf16.gmra.mrb[0].mxu0 %v1771
        %v2065 = vpop.f32.mrb[0].mxu0
        %v2066 = vadd.f32 %v1765, %v2065
        %v2067 = vpop.f32.mrb[0].mxu0
        %v2068 = vpop.f32.mrb[0].mxu0
        %v2069 = vadd.f32 %v1765, %v2068
        %v2070 = vpop.f32.mrb[0].mxu0
        %2071 = vmatprep.mubr.bf16.mxu0 %v1776
        %2072 = vmatmul.mubr.bf16.gmra.mrb[0].mxu0 %v1775
        %v2073 = vpop.f32.mrb[0].mxu0
        %v2074 = vadd.f32 %v1765, %v2073
        %v2075 = vpop.f32.mrb[0].mxu0
        %v2076 = vpop.f32.mrb[0].mxu0
        %v2077 = vadd.f32 %v1765, %v2076
        %v2078 = vpop.f32.mrb[0].mxu0
        %2079 = vmatprep.mubr.bf16.mxu0 %v1780
        %2080 = vmatmul.mubr.bf16.gmra.mrb[0].mxu0 %v1779
        %v2081 = vpop.f32.mrb[0].mxu0
        %v2082 = vadd.f32 %v1765, %v2081
        %v2083 = vpop.f32.mrb[0].mxu0
        %v2084 = vpop.f32.mrb[0].mxu0
        %v2085 = vadd.f32 %v1765, %v2084
        %v2086 = vpop.f32.mrb[0].mxu0
        %2087 = vmatprep.mubr.bf16.mxu0 %v1784
        %2088 = vmatmul.mubr.bf16.gmra.mrb[0].mxu0 %v1783
        %v2089 = vpop.f32.mrb[0].mxu0
        %v2090 = vadd.f32 %v1765, %v2089
        %v2091 = vpop.f32.mrb[0].mxu0
        %v2092 = vpop.f32.mrb[0].mxu0
        %v2093 = vadd.f32 %v1765, %v2092
        %v2094 = vpop.f32.mrb[0].mxu0
        %2095 = vmatprep.mubr.bf16.mxu0 %v1788
        %2096 = vmatmul.mubr.bf16.gmra.mrb[0].mxu0 %v1787
        %v2097 = vpop.f32.mrb[0].mxu0
        %v2098 = vadd.f32 %v1765, %v2097
        %v2099 = vpop.f32.mrb[0].mxu0
        %v2100 = vpop.f32.mrb[0].mxu0
        %v2101 = vadd.f32 %v1765, %v2100
        %v2102 = vpop.f32.mrb[0].mxu0
        %2103 = vmatprep.mubr.bf16.mxu0 %v1792
        %2104 = vmatmul.mubr.bf16.gmra.mrb[0].mxu0 %v1791
        %v2105 = vpop.f32.mrb[0].mxu0
        %v2106 = vadd.f32 %v1765, %v2105
        %v2107 = vpop.f32.mrb[0].mxu0
        %v2108 = vpop.f32.mrb[0].mxu0
        %v2109 = vadd.f32 %v1765, %v2108
        %v2110 = vpop.f32.mrb[0].mxu0
        %2111 = vmatprep.mubr.bf16.mxu0 %v1796
        %2112 = vmatmul.mubr.bf16.gmra.mrb[0].mxu0 %v1795
        %v2113 = vpop.f32.mrb[0].mxu0
        %v2114 = vadd.f32 %v1765, %v2113
        %v2115 = vpop.f32.mrb[0].mxu0
        %v2116 = vpop.f32.mrb[0].mxu0
        %v2117 = vadd.f32 %v1765, %v2116
        %v2118 = vpop.f32.mrb[0].mxu0
        %2119 = vdwg.mxu0
        %2120 = vmatprep.subr.bf16.mxu0 0
        %2121 = vmatpush1.bf16.msra.mxu0 %v1975
        %2122 = vmatprep.subr.bf16.mxu0 0
        %2123 = vmatpush1.bf16.msra.mxu0 %v1976
        %2124 = vmatprep.subr.bf16.mxu0 0
        %2125 = vmatpush1.bf16.msra.mxu0 %v1977
        %2126 = vmatprep.subr.bf16.mxu0 0
        %2127 = vmatpush1.bf16.msra.mxu0 %v1978
        %2128 = vmatprep.subr.bf16.mxu0 0
        %2129 = vmatpush1.bf16.msra.mxu0 %v1979
        %2130 = vmatprep.subr.bf16.mxu0 0
        %2131 = vmatpush1.bf16.msra.mxu0 %v1980
        %2132 = vmatprep.subr.bf16.mxu0 0
        %2133 = vmatpush1.bf16.msra.mxu0 %v1981
        %2134 = vmatprep.subr.bf16.mxu0 0
        %2135 = vmatpush1.bf16.msra.mxu0 %v1982
        %2136 = vmatprep.subr.bf16.mxu0 0
        %2137 = vmatpush1.bf16.msra.mxu0 %v1983
        %2138 = vmatprep.subr.bf16.mxu0 0
        %2139 = vmatpush1.bf16.msra.mxu0 %v1984
        %2140 = vmatprep.subr.bf16.mxu0 0
        %2141 = vmatpush1.bf16.msra.mxu0 %v1985
        %2142 = vmatprep.subr.bf16.mxu0 0
        %2143 = vmatpush1.bf16.msra.mxu0 %v1986
        %2144 = vmatprep.subr.bf16.mxu0 0
        %2145 = vmatpush1.bf16.msra.mxu0 %v1987
        %2146 = vmatprep.subr.bf16.mxu0 0
        %2147 = vmatpush1.bf16.msra.mxu0 %v1988
        %2148 = vmatprep.subr.bf16.mxu0 0
        %2149 = vmatpush1.bf16.msra.mxu0 %v1989
        %2150 = vmatprep.subr.bf16.mxu0 0
        %2151 = vmatpush1.bf16.msra.mxu0 %v1990
        %2152 = vmatprep.mubr.bf16.mxu0 %v1770
        %2153 = vmatmul.mubr.bf16.gmra.mrb[0].mxu0 %v1769
        %v2154 = vpop.f32.mrb[0].mxu0
        %v2155 = vadd.f32 %v2058, %v2154
        %v2156 = vpop.f32.mrb[0].mxu0
        %v2157 = vpop.f32.mrb[0].mxu0
        %v2158 = vadd.f32 %v2061, %v2157
        %v2159 = vpop.f32.mrb[0].mxu0
        %2160 = vmatprep.mubr.bf16.mxu0 %v1774
        %2161 = vmatmul.mubr.bf16.gmra.mrb[0].mxu0 %v1773
        %v2162 = vpop.f32.mrb[0].mxu0
        %v2163 = vadd.f32 %v2066, %v2162
        %v2164 = vpop.f32.mrb[0].mxu0
        %v2165 = vpop.f32.mrb[0].mxu0
        %v2166 = vadd.f32 %v2069, %v2165
        %v2167 = vpop.f32.mrb[0].mxu0
        %2168 = vmatprep.mubr.bf16.mxu0 %v1778
        %2169 = vmatmul.mubr.bf16.gmra.mrb[0].mxu0 %v1777
        %v2170 = vpop.f32.mrb[0].mxu0
        %v2171 = vadd.f32 %v2074, %v2170
        %v2172 = vpop.f32.mrb[0].mxu0
        %v2173 = vpop.f32.mrb[0].mxu0
        %v2174 = vadd.f32 %v2077, %v2173
        %v2175 = vpop.f32.mrb[0].mxu0
        %2176 = vmatprep.mubr.bf16.mxu0 %v1782
        %2177 = vmatmul.mubr.bf16.gmra.mrb[0].mxu0 %v1781
        %v2178 = vpop.f32.mrb[0].mxu0
        %v2179 = vadd.f32 %v2082, %v2178
        %v2180 = vpop.f32.mrb[0].mxu0
        %v2181 = vpop.f32.mrb[0].mxu0
        %v2182 = vadd.f32 %v2085, %v2181
        %v2183 = vpop.f32.mrb[0].mxu0
        %2184 = vmatprep.mubr.bf16.mxu0 %v1786
        %2185 = vmatmul.mubr.bf16.gmra.mrb[0].mxu0 %v1785
        %v2186 = vpop.f32.mrb[0].mxu0
        %v2187 = vadd.f32 %v2090, %v2186
        %v2188 = vpop.f32.mrb[0].mxu0
        %v2189 = vpop.f32.mrb[0].mxu0
        %v2190 = vadd.f32 %v2093, %v2189
        %v2191 = vpop.f32.mrb[0].mxu0
        %2192 = vmatprep.mubr.bf16.mxu0 %v1790
        %2193 = vmatmul.mubr.bf16.gmra.mrb[0].mxu0 %v1789
        %v2194 = vpop.f32.mrb[0].mxu0
        %v2195 = vadd.f32 %v2098, %v2194
        %v2196 = vpop.f32.mrb[0].mxu0
        %v2197 = vpop.f32.mrb[0].mxu0
        %v2198 = vadd.f32 %v2101, %v2197
        %v2199 = vpop.f32.mrb[0].mxu0
        %2200 = vmatprep.mubr.bf16.mxu0 %v1794
        %2201 = vmatmul.mubr.bf16.gmra.mrb[0].mxu0 %v1793
        %v2202 = vpop.f32.mrb[0].mxu0
        %v2203 = vadd.f32 %v2106, %v2202
        %v2204 = vpop.f32.mrb[0].mxu0
        %v2205 = vpop.f32.mrb[0].mxu0
        %v2206 = vadd.f32 %v2109, %v2205
        %v2207 = vpop.f32.mrb[0].mxu0
        %2208 = vmatprep.mubr.bf16.mxu0 %v1798
        %2209 = vmatmul.mubr.bf16.gmra.mrb[0].mxu0 %v1797
        %v2210 = vpop.f32.mrb[0].mxu0
        %v2211 = vadd.f32 %v2114, %v2210
        %v2212 = vpop.f32.mrb[0].mxu0
        %v2213 = vpop.f32.mrb[0].mxu0
        %v2214 = vadd.f32 %v2117, %v2213
        %v2215 = vpop.f32.mrb[0].mxu0
        %2216 = vdwg.mxu0
        %v2217 = vsel %vm872, %v2155, 0.0
        %v2218 = vsel %vm872, %v2158, 0.0
        %v2219 = vadd.f32 %v2217, %v2218
        %v2220 = vsel %vm872, %v2163, 0.0
        %v2221 = vadd.f32 %v2219, %v2220
        %v2222 = vsel %vm872, %v2166, 0.0
        %v2223 = vadd.f32 %v2221, %v2222
        %v2224 = vsel %vm872, %v2171, 0.0
        %v2225 = vadd.f32 %v2223, %v2224
        %v2226 = vsel %vm872, %v2174, 0.0
        %v2227 = vadd.f32 %v2225, %v2226
        %v2228 = vsel %vm872, %v2179, 0.0
        %v2229 = vadd.f32 %v2227, %v2228
        %v2230 = vsel %vm872, %v2182, 0.0
        %v2231 = vadd.f32 %v2229, %v2230
        %v2232 = vrot.slane %v2231, 4
        %v2233 = vadd.f32 %v2231, %v2232
        %v2234 = vrot.slane %v2233, 2
        %v2235 = vadd.f32 %v2233, %v2234
        %v2236 = vrot.slane %v2235, 1
        %v2237 = vadd.f32 %v2235, %v2236
        %v2238 = vsel %vm872, %v2187, 0.0
        %v2239 = vsel %vm872, %v2190, 0.0
        %v2240 = vadd.f32 %v2238, %v2239
        %v2241 = vsel %vm872, %v2195, 0.0
        %v2242 = vadd.f32 %v2240, %v2241
        %v2243 = vsel %vm872, %v2198, 0.0
        %v2244 = vadd.f32 %v2242, %v2243
        %v2245 = vsel %vm872, %v2203, 0.0
        %v2246 = vadd.f32 %v2244, %v2245
        %v2247 = vsel %vm872, %v2206, 0.0
        %v2248 = vadd.f32 %v2246, %v2247
        %v2249 = vsel %vm872, %v2211, 0.0
        %v2250 = vadd.f32 %v2248, %v2249
        %v2251 = vsel %vm872, %v2214, 0.0
        %v2252 = vadd.f32 %v2250, %v2251
        %v2253 = vrot.slane %v2252, 4
        %v2254 = vadd.f32 %v2252, %v2253
        %v2255 = vrot.slane %v2254, 2
        %v2256 = vadd.f32 %v2254, %v2255
        %v2257 = vrot.slane %v2256, 1
        %v2258 = vadd.f32 %v2256, %v2257
        %v2259 = vmul.f32 %v2155, %v2155
        %v2260 = vmul.f32 %v2158, %v2158
        %v2261 = vmul.f32 %v2163, %v2163
        %v2262 = vmul.f32 %v2166, %v2166
        %v2263 = vmul.f32 %v2171, %v2171
        %v2264 = vmul.f32 %v2174, %v2174
        %v2265 = vmul.f32 %v2179, %v2179
        %v2266 = vmul.f32 %v2182, %v2182
        %v2267 = vmul.f32 %v2187, %v2187
        %v2268 = vmul.f32 %v2190, %v2190
        %v2269 = vmul.f32 %v2195, %v2195
        %v2270 = vmul.f32 %v2198, %v2198
        %v2271 = vmul.f32 %v2203, %v2203
        %v2272 = vmul.f32 %v2206, %v2206
        %v2273 = vmul.f32 %v2211, %v2211
        %v2274 = vmul.f32 %v2214, %v2214
        %v2275 = vsel %vm872, %v2259, 0.0
        %v2276 = vsel %vm872, %v2260, 0.0
        %v2277 = vadd.f32 %v2275, %v2276
        %v2278 = vsel %vm872, %v2261, 0.0
        %v2279 = vadd.f32 %v2277, %v2278
        %v2280 = vsel %vm872, %v2262, 0.0
        %v2281 = vadd.f32 %v2279, %v2280
        %v2282 = vsel %vm872, %v2263, 0.0
        %v2283 = vadd.f32 %v2281, %v2282
        %v2284 = vsel %vm872, %v2264, 0.0
        %v2285 = vadd.f32 %v2283, %v2284
        %v2286 = vsel %vm872, %v2265, 0.0
        %v2287 = vadd.f32 %v2285, %v2286
        %v2288 = vsel %vm872, %v2266, 0.0
        %v2289 = vadd.f32 %v2287, %v2288
        %v2290 = vrot.slane %v2289, 4
        %v2291 = vadd.f32 %v2289, %v2290
        %v2292 = vrot.slane %v2291, 2
        %v2293 = vadd.f32 %v2291, %v2292
        %v2294 = vrot.slane %v2293, 1
        %v2295 = vadd.f32 %v2293, %v2294
        %v2296 = vsel %vm872, %v2267, 0.0
        %v2297 = vsel %vm872, %v2268, 0.0
        %v2298 = vadd.f32 %v2296, %v2297
        %v2299 = vsel %vm872, %v2269, 0.0
        %v2300 = vadd.f32 %v2298, %v2299
        %v2301 = vsel %vm872, %v2270, 0.0
        %v2302 = vadd.f32 %v2300, %v2301
        %v2303 = vsel %vm872, %v2271, 0.0
        %v2304 = vadd.f32 %v2302, %v2303
        %v2305 = vsel %vm872, %v2272, 0.0
        %v2306 = vadd.f32 %v2304, %v2305
        %v2307 = vsel %vm872, %v2273, 0.0
        %v2308 = vadd.f32 %v2306, %v2307
        %v2309 = vsel %vm872, %v2274, 0.0
        %v2310 = vadd.f32 %v2308, %v2309
        %v2311 = vrot.slane %v2310, 4
        %v2312 = vadd.f32 %v2310, %v2311
        %v2313 = vrot.slane %v2312, 2
        %v2314 = vadd.f32 %v2312, %v2313
        %v2315 = vrot.slane %v2314, 1
        %v2316 = vadd.f32 %v2314, %v2315
        %vm2319 = vcmask 1041409
        %v2320 = vsel %vm2319, %v2258, %v2237
        %vm2324 = vcmask 1043459
        %v2325 = vsel %vm2324, %v2316, %v2295
        %vm2327 = vcmask 1041408
        %v2328 = vsel %vm2327, %v2320, %v2325
        %v2329 = vld [vmem:[#allocation3] sm:$0xff]
        %v2330 = vld [vmem:[#allocation3 + $0x8] sm:$0xff]
        %v2331 = vld [vmem:[#allocation3 + $0x10] sm:$0xff]
        %v2332 = vld [vmem:[#allocation3 + $0x18] sm:$0xff]
        %v2333 = vld [vmem:[#allocation3 + $0x20] sm:$0xff]
        %v2334 = vld [vmem:[#allocation3 + $0x28] sm:$0xff]
        %v2335 = vld [vmem:[#allocation3 + $0x30] sm:$0xff]
        %v2336 = vld [vmem:[#allocation3 + $0x38] sm:$0xff]
        %v2338 = vsel %vm872, %v2328, 0
        %2340 = vmatprep.subr.mxu0 0.0
        %2341 = vmatpush1.msra.mxu0 %v2329
        %2342 = vmatprep.subr.mxu0 0.0
        %2343 = vmatpush1.msra.mxu0 %v2330
        %2344 = vmatprep.subr.mxu0 0.0
        %2345 = vmatpush1.msra.mxu0 %v2331
        %2346 = vmatprep.subr.mxu0 0.0
        %2347 = vmatpush1.msra.mxu0 %v2332
        %2348 = vmatprep.subr.mxu0 0.0
        %2349 = vmatpush1.msra.mxu0 %v2333
        %2350 = vmatprep.subr.mxu0 0.0
        %2351 = vmatpush1.msra.mxu0 %v2334
        %2352 = vmatprep.subr.mxu0 0.0
        %2353 = vmatpush1.msra.mxu0 %v2335
        %2354 = vmatprep.subr.mxu0 0.0
        %2355 = vmatpush1.msra.mxu0 %v2336
        %2356 = vmatprep.subr.mxu0 0.0
        %2357 = vmatpush1.msra.mxu0 0.0
        %2358 = vmatprep.subr.mxu0 0.0
        %2359 = vmatpush1.msra.mxu0 0.0
        %2360 = vmatprep.subr.mxu0 0.0
        %2361 = vmatpush1.msra.mxu0 0.0
        %2362 = vmatprep.subr.mxu0 0.0
        %2363 = vmatpush1.msra.mxu0 0.0
        %2364 = vmatprep.subr.mxu0 0.0
        %2365 = vmatpush1.msra.mxu0 0.0
        %2366 = vmatprep.subr.mxu0 0.0
        %2367 = vmatpush1.msra.mxu0 0.0
        %2368 = vmatprep.subr.mxu0 0.0
        %2369 = vmatpush1.msra.mxu0 0.0
        %2370 = vmatprep.subr.mxu0 0.0
        %2371 = vmatpush1.msra.mxu0 0.0
        %2372 = vmatprep.subr.mxu0 0.0
        %2373 = vmatpush1.msra.mxu0 0.0
        %2374 = vmatprep.subr.mxu0 0.0
        %2375 = vmatpush1.msra.mxu0 0.0
        %2376 = vmatprep.subr.mxu0 0.0
        %2377 = vmatpush1.msra.mxu0 0.0
        %2378 = vmatprep.subr.mxu0 0.0
        %2379 = vmatpush1.msra.mxu0 0.0
        %2380 = vmatprep.subr.mxu0 0.0
        %2381 = vmatpush1.msra.mxu0 0.0
        %2382 = vmatprep.subr.mxu0 0.0
        %2383 = vmatpush1.msra.mxu0 0.0
        %2384 = vmatprep.subr.mxu0 0.0
        %2385 = vmatpush1.msra.mxu0 0.0
        %2386 = vmatprep.subr.mxu0 0.0
        %2387 = vmatpush1.msra.mxu0 0.0
        %2388 = vmatprep.subr.mxu0 0.0
        %2389 = vmatpush1.msra.mxu0 0.0
        %2390 = vmatprep.subr.mxu0 0.0
        %2391 = vmatpush1.msra.mxu0 0.0
        %2392 = vmatprep.subr.mxu0 0.0
        %2393 = vmatpush1.msra.mxu0 0.0
        %2394 = vmatprep.subr.mxu0 0.0
        %2395 = vmatpush1.msra.mxu0 0.0
        %2396 = vmatprep.subr.mxu0 0.0
        %2397 = vmatpush1.msra.mxu0 0.0
        %2398 = vmatprep.subr.mxu0 0.0
        %2399 = vmatpush1.msra.mxu0 0.0
        %2400 = vmatprep.subr.mxu0 0.0
        %2401 = vmatpush1.msra.mxu0 0.0
        %2402 = vmatprep.subr.mxu0 0.0
        %2403 = vmatpush1.msra.mxu0 0.0
        %2404 = vmatprep.mubr.f32.mxu0 0.0
        %2405 = vmatmul.mubr.f32.gmra.mrb[0].mxu0 %v2338
        %v2406 = vpop.f32.mrb[0].mxu0
        %v2407 = vadd.f32 0.0, %v2406
        %v2408 = vpop.f32.mrb[0].mxu0
        %2409 = vdwg.mxu0
        %v2410 = vmul.f32 %v2407, %v2407
        %v2412 = vrot.slane %v2410, 6
        %v2414 = vsub.f32 %v2407, %v2412
        %v2415 = vadd.f32 %v2414, 1e-06
        %v2416 = vrsqrt.pop %v2415
        %v2417 = vld [vmem:[%s516] sm:$0x1]
        %v2419 = vlaneseq
        %v2420 = vshrl.u32 %v2419, 7
        %v2421 = vsub.s32 0, %v2420
        %v2422 = vrot.slane %v2417, %v2421
        %v2424 = vmul.f32 %v2416, %v2422
        %v2425 = vld [vmem:[%s519] sm:$0x1]
        %v2427 = vrot.slane %v2424, 2
        %v2429 = vmul.f32 %v2407, %v2427
        %v2431 = vlaneseq
        %v2432 = vshrl.u32 %v2431, 7
        %v2433 = vsub.s32 0, %v2432
        %v2434 = vrot.slane %v2425, %v2433
        %v2436 = vsub.f32 %v2434, %v2429
        %v2438 = vunpack.c.l.s4 1966171168
        %v2439 = vunpack.c.0.s8 %v2438
        %v2440 = vlaneseq
        %v2441 = vshrl.u32 %v2440, 7
        %v2442 = vsub.s32 %v2439, %v2441
        %v2443 = vrot.slane %v2424, %v2442
        %v2444 = vcombine.high %v2443, %v2443
        %v2446 = vunpack.c.l.s4 1966171168
        %v2447 = vunpack.c.0.s8 %v2446
        %v2448 = vlaneseq
        %v2449 = vshrl.u32 %v2448, 7
        %v2450 = vsub.s32 %v2447, %v2449
        %v2451 = vrot.slane %v2443, %v2450
        %v2453 = vunpack.c.l.s4 1966171168
        %v2454 = vunpack.c.0.s8 %v2453
        %v2455 = vlaneseq
        %v2456 = vshrl.u32 %v2455, 7
        %v2457 = vsub.s32 %v2454, %v2456
        %v2458 = vrot.slane %v2444, %v2457
        %v2459 = vcombine.high %v2451, %v2451
        %v2460 = vcombine.high %v2458, %v2458
        %v2461 = vlaneseq
        %v2462 = vshrl.u32 %v2461, 7
        %v2463 = vsub.s32 0, %v2462
        %v2464 = vrot.slane %v2459, %v2463
        %v2465 = vlaneseq
        %v2466 = vshrl.u32 %v2465, 7
        %v2467 = vsub.s32 0, %v2466
        %v2468 = vrot.slane %v2460, %v2467
        %v2471 = vmul.f32 %v2155, %v2464
        %v2472 = vmul.f32 %v2158, %v2464
        %v2473 = vmul.f32 %v2163, %v2464
        %v2474 = vmul.f32 %v2166, %v2464
        %v2475 = vmul.f32 %v2171, %v2464
        %v2476 = vmul.f32 %v2174, %v2464
        %v2477 = vmul.f32 %v2179, %v2464
        %v2478 = vmul.f32 %v2182, %v2464
        %v2479 = vmul.f32 %v2187, %v2468
        %v2480 = vmul.f32 %v2190, %v2468
        %v2481 = vmul.f32 %v2195, %v2468
        %v2482 = vmul.f32 %v2198, %v2468
        %v2483 = vmul.f32 %v2203, %v2468
        %v2484 = vmul.f32 %v2206, %v2468
        %v2485 = vmul.f32 %v2211, %v2468
        %v2486 = vmul.f32 %v2214, %v2468
        %v2489 = vunpack.c.l.s4 1966171168
        %v2490 = vunpack.c.0.s8 %v2489
        %v2491 = vlaneseq
        %v2492 = vshrl.u32 %v2491, 7
        %v2493 = vsub.s32 %v2490, %v2492
        %v2494 = vrot.slane %v2436, %v2493
        %v2495 = vcombine.high %v2494, %v2494
        %v2497 = vunpack.c.l.s4 1966171168
        %v2498 = vunpack.c.0.s8 %v2497
        %v2499 = vlaneseq
        %v2500 = vshrl.u32 %v2499, 7
        %v2501 = vsub.s32 %v2498, %v2500
        %v2502 = vrot.slane %v2494, %v2501
        %v2504 = vunpack.c.l.s4 1966171168
        %v2505 = vunpack.c.0.s8 %v2504
        %v2506 = vlaneseq
        %v2507 = vshrl.u32 %v2506, 7
        %v2508 = vsub.s32 %v2505, %v2507
        %v2509 = vrot.slane %v2495, %v2508
        %v2510 = vlaneseq
        %v2511 = vshrl.u32 %v2510, 7
        %v2512 = vsub.s32 0, %v2511
        %v2513 = vrot.slane %v2502, %v2512
        %v2514 = vlaneseq
        %v2515 = vshrl.u32 %v2514, 7
        %v2516 = vsub.s32 0, %v2515
        %v2517 = vrot.slane %v2509, %v2516
        %v2520 = vadd.f32 %v2471, %v2513
        %v2521 = vadd.f32 %v2472, %v2513
        %v2522 = vadd.f32 %v2473, %v2513
        %v2523 = vadd.f32 %v2474, %v2513
        %v2524 = vadd.f32 %v2475, %v2513
        %v2525 = vadd.f32 %v2476, %v2513
        %v2526 = vadd.f32 %v2477, %v2513
        %v2527 = vadd.f32 %v2478, %v2513
        %v2528 = vadd.f32 %v2479, %v2517
        %v2529 = vadd.f32 %v2480, %v2517
        %v2530 = vadd.f32 %v2481, %v2517
        %v2531 = vadd.f32 %v2482, %v2517
        %v2532 = vadd.f32 %v2483, %v2517
        %v2533 = vadd.f32 %v2484, %v2517
        %v2534 = vadd.f32 %v2485, %v2517
        %v2535 = vadd.f32 %v2486, %v2517
        %v2536 = vxor.u32 %v2520, 2147483648
        %v2537 = vxor.u32 %v2521, 2147483648
        %v2538 = vxor.u32 %v2522, 2147483648
        %v2539 = vxor.u32 %v2523, 2147483648
        %v2540 = vxor.u32 %v2524, 2147483648
        %v2541 = vxor.u32 %v2525, 2147483648
        %v2542 = vxor.u32 %v2526, 2147483648
        %v2543 = vxor.u32 %v2527, 2147483648
        %v2544 = vxor.u32 %v2528, 2147483648
        %v2545 = vxor.u32 %v2529, 2147483648
        %v2546 = vxor.u32 %v2530, 2147483648
        %v2547 = vxor.u32 %v2531, 2147483648
        %v2548 = vxor.u32 %v2532, 2147483648
        %v2549 = vxor.u32 %v2533, 2147483648
        %v2550 = vxor.u32 %v2534, 2147483648
        %v2551 = vxor.u32 %v2535, 2147483648
        %v2552 = vmul.f32 %v2536, 1.442695
        %v2553 = vpow.pop %v2552
        %v2554 = vmul.f32 %v2537, 1.442695
        %v2555 = vpow.pop %v2554
        %v2556 = vmul.f32 %v2538, 1.442695
        %v2557 = vpow.pop %v2556
        %v2558 = vmul.f32 %v2539, 1.442695
        %v2559 = vpow.pop %v2558
        %v2560 = vmul.f32 %v2540, 1.442695
        %v2561 = vpow.pop %v2560
        %v2562 = vmul.f32 %v2541, 1.442695
        %v2563 = vpow.pop %v2562
        %v2564 = vmul.f32 %v2542, 1.442695
        %v2565 = vpow.pop %v2564
        %v2566 = vmul.f32 %v2543, 1.442695
        %v2567 = vpow.pop %v2566
        %v2568 = vmul.f32 %v2544, 1.442695
        %v2569 = vpow.pop %v2568
        %v2570 = vmul.f32 %v2545, 1.442695
        %v2571 = vpow.pop %v2570
        %v2572 = vmul.f32 %v2546, 1.442695
        %v2573 = vpow.pop %v2572
        %v2574 = vmul.f32 %v2547, 1.442695
        %v2575 = vpow.pop %v2574
        %v2576 = vmul.f32 %v2548, 1.442695
        %v2577 = vpow.pop %v2576
        %v2578 = vmul.f32 %v2549, 1.442695
        %v2579 = vpow.pop %v2578
        %v2580 = vmul.f32 %v2550, 1.442695
        %v2581 = vpow.pop %v2580
        %v2582 = vmul.f32 %v2551, 1.442695
        %v2583 = vpow.pop %v2582
        %v2584 = vadd.f32 %v2553, 1.0
        %v2585 = vadd.f32 %v2555, 1.0
        %v2586 = vadd.f32 %v2557, 1.0
        %v2587 = vadd.f32 %v2559, 1.0
        %v2588 = vadd.f32 %v2561, 1.0
        %v2589 = vadd.f32 %v2563, 1.0
        %v2590 = vadd.f32 %v2565, 1.0
        %v2591 = vadd.f32 %v2567, 1.0
        %v2592 = vadd.f32 %v2569, 1.0
        %v2593 = vadd.f32 %v2571, 1.0
        %v2594 = vadd.f32 %v2573, 1.0
        %v2595 = vadd.f32 %v2575, 1.0
        %v2596 = vadd.f32 %v2577, 1.0
        %v2597 = vadd.f32 %v2579, 1.0
        %v2598 = vadd.f32 %v2581, 1.0
        %v2599 = vadd.f32 %v2583, 1.0
        %v2600 = vrcp.pop %v2584
        %v2601 = vmul.f32 1.0, %v2600
        %v2602 = vrcp.pop %v2585
        %v2603 = vmul.f32 1.0, %v2602
        %v2604 = vrcp.pop %v2586
        %v2605 = vmul.f32 1.0, %v2604
        %v2606 = vrcp.pop %v2587
        %v2607 = vmul.f32 1.0, %v2606
        %v2608 = vrcp.pop %v2588
        %v2609 = vmul.f32 1.0, %v2608
        %v2610 = vrcp.pop %v2589
        %v2611 = vmul.f32 1.0, %v2610
        %v2612 = vrcp.pop %v2590
        %v2613 = vmul.f32 1.0, %v2612
        %v2614 = vrcp.pop %v2591
        %v2615 = vmul.f32 1.0, %v2614
        %v2616 = vrcp.pop %v2592
        %v2617 = vmul.f32 1.0, %v2616
        %v2618 = vrcp.pop %v2593
        %v2619 = vmul.f32 1.0, %v2618
        %v2620 = vrcp.pop %v2594
        %v2621 = vmul.f32 1.0, %v2620
        %v2622 = vrcp.pop %v2595
        %v2623 = vmul.f32 1.0, %v2622
        %v2624 = vrcp.pop %v2596
        %v2625 = vmul.f32 1.0, %v2624
        %v2626 = vrcp.pop %v2597
        %v2627 = vmul.f32 1.0, %v2626
        %v2628 = vrcp.pop %v2598
        %v2629 = vmul.f32 1.0, %v2628
        %v2630 = vrcp.pop %v2599
        %v2631 = vmul.f32 1.0, %v2630
        %v2632 = vmul.f32 %v2520, %v2601
        %v2633 = vmul.f32 %v2521, %v2603
        %v2634 = vmul.f32 %v2522, %v2605
        %v2635 = vmul.f32 %v2523, %v2607
        %v2636 = vmul.f32 %v2524, %v2609
        %v2637 = vmul.f32 %v2525, %v2611
        %v2638 = vmul.f32 %v2526, %v2613
        %v2639 = vmul.f32 %v2527, %v2615
        %v2640 = vmul.f32 %v2528, %v2617
        %v2641 = vmul.f32 %v2529, %v2619
        %v2642 = vmul.f32 %v2530, %v2621
        %v2643 = vmul.f32 %v2531, %v2623
        %v2644 = vmul.f32 %v2532, %v2625
        %v2645 = vmul.f32 %v2533, %v2627
        %v2646 = vmul.f32 %v2534, %v2629
        %v2647 = vmul.f32 %v2535, %v2631
        %v2648 = vsub.f32 %v2601, 1.0
        %v2649 = vsub.f32 %v2603, 1.0
        %v2650 = vsub.f32 %v2605, 1.0
        %v2651 = vsub.f32 %v2607, 1.0
        %v2652 = vsub.f32 %v2609, 1.0
        %v2653 = vsub.f32 %v2611, 1.0
        %v2654 = vsub.f32 %v2613, 1.0
        %v2655 = vsub.f32 %v2615, 1.0
        %v2656 = vsub.f32 %v2617, 1.0
        %v2657 = vsub.f32 %v2619, 1.0
        %v2658 = vsub.f32 %v2621, 1.0
        %v2659 = vsub.f32 %v2623, 1.0
        %v2660 = vsub.f32 %v2625, 1.0
        %v2661 = vsub.f32 %v2627, 1.0
        %v2662 = vsub.f32 %v2629, 1.0
        %v2663 = vsub.f32 %v2631, 1.0
        %v2664 = vmul.f32 %v2520, %v2648
        %v2665 = vmul.f32 %v2521, %v2649
        %v2666 = vmul.f32 %v2522, %v2650
        %v2667 = vmul.f32 %v2523, %v2651
        %v2668 = vmul.f32 %v2524, %v2652
        %v2669 = vmul.f32 %v2525, %v2653
        %v2670 = vmul.f32 %v2526, %v2654
        %v2671 = vmul.f32 %v2527, %v2655
        %v2672 = vmul.f32 %v2528, %v2656
        %v2673 = vmul.f32 %v2529, %v2657
        %v2674 = vmul.f32 %v2530, %v2658
        %v2675 = vmul.f32 %v2531, %v2659
        %v2676 = vmul.f32 %v2532, %v2660
        %v2677 = vmul.f32 %v2533, %v2661
        %v2678 = vmul.f32 %v2534, %v2662
        %v2679 = vmul.f32 %v2535, %v2663
        %2696 = vrot.lane.b32.xlu0 %v2664, 64
        %v2697 = vpop.permute.xlu0 %2696
        %2698 = vrot.lane.b32.xlu0 %v2665, 64
        %v2699 = vpop.permute.xlu0 %2698
        %2700 = vrot.lane.b32.xlu0 %v2666, 64
        %v2701 = vpop.permute.xlu0 %2700
        %2702 = vrot.lane.b32.xlu0 %v2667, 64
        %v2703 = vpop.permute.xlu0 %2702
        %2704 = vrot.lane.b32.xlu0 %v2668, 64
        %v2705 = vpop.permute.xlu0 %2704
        %2706 = vrot.lane.b32.xlu0 %v2669, 64
        %v2707 = vpop.permute.xlu0 %2706
        %2708 = vrot.lane.b32.xlu0 %v2670, 64
        %v2709 = vpop.permute.xlu0 %2708
        %2710 = vrot.lane.b32.xlu0 %v2671, 64
        %v2711 = vpop.permute.xlu0 %2710
        %2712 = vrot.lane.b32.xlu0 %v2672, 64
        %v2713 = vpop.permute.xlu0 %2712
        %2714 = vrot.lane.b32.xlu0 %v2673, 64
        %v2715 = vpop.permute.xlu0 %2714
        %2716 = vrot.lane.b32.xlu0 %v2674, 64
        %v2717 = vpop.permute.xlu0 %2716
        %2718 = vrot.lane.b32.xlu0 %v2675, 64
        %v2719 = vpop.permute.xlu0 %2718
        %2720 = vrot.lane.b32.xlu0 %v2676, 64
        %v2721 = vpop.permute.xlu0 %2720
        %2722 = vrot.lane.b32.xlu0 %v2677, 64
        %v2723 = vpop.permute.xlu0 %2722
        %2724 = vrot.lane.b32.xlu0 %v2678, 64
        %v2725 = vpop.permute.xlu0 %2724
        %2726 = vrot.lane.b32.xlu0 %v2679, 64
        %v2727 = vpop.permute.xlu0 %2726
        %v2744 = vsel %vm872, %v2632, %v2697
        %v2745 = vsel %vm872, %v2633, %v2699
        %v2746 = vsel %vm872, %v2634, %v2701
        %v2747 = vsel %vm872, %v2635, %v2703
        %v2748 = vsel %vm872, %v2636, %v2705
        %v2749 = vsel %vm872, %v2637, %v2707
        %v2750 = vsel %vm872, %v2638, %v2709
        %v2751 = vsel %vm872, %v2639, %v2711
        %v2752 = vsel %vm872, %v2640, %v2713
        %v2753 = vsel %vm872, %v2641, %v2715
        %v2754 = vsel %vm872, %v2642, %v2717
        %v2755 = vsel %vm872, %v2643, %v2719
        %v2756 = vsel %vm872, %v2644, %v2721
        %v2757 = vsel %vm872, %v2645, %v2723
        %v2758 = vsel %vm872, %v2646, %v2725
        %v2759 = vsel %vm872, %v2647, %v2727
        %v2760 = vpack.c.bf16 %v2744, %v2744
        %v2761 = vpack.c.bf16 %v2745, %v2745
        %v2762 = vpack.c.bf16 %v2746, %v2746
        %v2763 = vpack.c.bf16 %v2747, %v2747
        %v2764 = vpack.c.bf16 %v2748, %v2748
        %v2765 = vpack.c.bf16 %v2749, %v2749
        %v2766 = vpack.c.bf16 %v2750, %v2750
        %v2767 = vpack.c.bf16 %v2751, %v2751
        %v2768 = vpack.c.bf16 %v2752, %v2752
        %v2769 = vpack.c.bf16 %v2753, %v2753
        %v2770 = vpack.c.bf16 %v2754, %v2754
        %v2771 = vpack.c.bf16 %v2755, %v2755
        %v2772 = vpack.c.bf16 %v2756, %v2756
        %v2773 = vpack.c.bf16 %v2757, %v2757
        %v2774 = vpack.c.bf16 %v2758, %v2758
        %v2775 = vpack.c.bf16 %v2759, %v2759
        %v2792 = vunpack.c.l.b16 %v2760
        %v2793 = vunpack.c.l.b16 %v2761
        %v2794 = vunpack.c.l.b16 %v2762
        %v2795 = vunpack.c.l.b16 %v2763
        %v2796 = vunpack.c.l.b16 %v2764
        %v2797 = vunpack.c.l.b16 %v2765
        %v2798 = vunpack.c.l.b16 %v2766
        %v2799 = vunpack.c.l.b16 %v2767
        %v2800 = vunpack.c.l.b16 %v2768
        %v2801 = vunpack.c.l.b16 %v2769
        %v2802 = vunpack.c.l.b16 %v2770
        %v2803 = vunpack.c.l.b16 %v2771
        %v2804 = vunpack.c.l.b16 %v2772
        %v2805 = vunpack.c.l.b16 %v2773
        %v2806 = vunpack.c.l.b16 %v2774
        %v2807 = vunpack.c.l.b16 %v2775
        %v2808 = vpack.c.b16 %v2792, %v2792
        %v2809 = vpack.c.b16 %v2793, %v2793
        %v2810 = vpack.c.b16 %v2794, %v2794
        %v2811 = vpack.c.b16 %v2795, %v2795
        %v2812 = vpack.c.b16 %v2796, %v2796
        %v2813 = vpack.c.b16 %v2797, %v2797
        %v2814 = vpack.c.b16 %v2798, %v2798
        %v2815 = vpack.c.b16 %v2799, %v2799
        %v2816 = vpack.c.b16 %v2800, %v2800
        %v2817 = vpack.c.b16 %v2801, %v2801
        %v2818 = vpack.c.b16 %v2802, %v2802
        %v2819 = vpack.c.b16 %v2803, %v2803
        %v2820 = vpack.c.b16 %v2804, %v2804
        %v2821 = vpack.c.b16 %v2805, %v2805
        %v2822 = vpack.c.b16 %v2806, %v2806
        %v2823 = vpack.c.b16 %v2807, %v2807
        %v2825 = vshrl.u32 %v2808, 16
        %v2827 = vrot.slane %v2825, 7
        %v2828 = vshll.u32 %v2808, 16
        %v2830 = vor.u32 %v2827, %v2828
        %v2831 = vrot.slane %v2827, 4
        %v2833 = vshrl.u32 %v2809, 16
        %v2835 = vrot.slane %v2833, 7
        %v2836 = vshll.u32 %v2809, 16
        %v2838 = vor.u32 %v2835, %v2836
        %v2839 = vrot.slane %v2835, 4
        %v2841 = vshrl.u32 %v2810, 16
        %v2843 = vrot.slane %v2841, 7
        %v2844 = vshll.u32 %v2810, 16
        %v2846 = vor.u32 %v2843, %v2844
        %v2847 = vrot.slane %v2843, 4
        %v2849 = vshrl.u32 %v2811, 16
        %v2851 = vrot.slane %v2849, 7
        %v2852 = vshll.u32 %v2811, 16
        %v2854 = vor.u32 %v2851, %v2852
        %v2855 = vrot.slane %v2851, 4
        %v2857 = vshrl.u32 %v2812, 16
        %v2859 = vrot.slane %v2857, 7
        %v2860 = vshll.u32 %v2812, 16
        %v2862 = vor.u32 %v2859, %v2860
        %v2863 = vrot.slane %v2859, 4
        %v2865 = vshrl.u32 %v2813, 16
        %v2867 = vrot.slane %v2865, 7
        %v2868 = vshll.u32 %v2813, 16
        %v2870 = vor.u32 %v2867, %v2868
        %v2871 = vrot.slane %v2867, 4
        %v2873 = vshrl.u32 %v2814, 16
        %v2875 = vrot.slane %v2873, 7
        %v2876 = vshll.u32 %v2814, 16
        %v2878 = vor.u32 %v2875, %v2876
        %v2879 = vrot.slane %v2875, 4
        %v2881 = vshrl.u32 %v2815, 16
        %v2883 = vrot.slane %v2881, 7
        %v2884 = vshll.u32 %v2815, 16
        %v2886 = vor.u32 %v2883, %v2884
        %v2887 = vrot.slane %v2883, 4
        %v2889 = vshrl.u32 %v2816, 16
        %v2891 = vrot.slane %v2889, 7
        %v2892 = vshll.u32 %v2816, 16
        %v2894 = vor.u32 %v2891, %v2892
        %v2895 = vrot.slane %v2891, 4
        %v2897 = vshrl.u32 %v2817, 16
        %v2899 = vrot.slane %v2897, 7
        %v2900 = vshll.u32 %v2817, 16
        %v2902 = vor.u32 %v2899, %v2900
        %v2903 = vrot.slane %v2899, 4
        %v2905 = vshrl.u32 %v2818, 16
        %v2907 = vrot.slane %v2905, 7
        %v2908 = vshll.u32 %v2818, 16
        %v2910 = vor.u32 %v2907, %v2908
        %v2911 = vrot.slane %v2907, 4
        %v2913 = vshrl.u32 %v2819, 16
        %v2915 = vrot.slane %v2913, 7
        %v2916 = vshll.u32 %v2819, 16
        %v2918 = vor.u32 %v2915, %v2916
        %v2919 = vrot.slane %v2915, 4
        %v2921 = vshrl.u32 %v2820, 16
        %v2923 = vrot.slane %v2921, 7
        %v2924 = vshll.u32 %v2820, 16
        %v2926 = vor.u32 %v2923, %v2924
        %v2927 = vrot.slane %v2923, 4
        %v2929 = vshrl.u32 %v2821, 16
        %v2931 = vrot.slane %v2929, 7
        %v2932 = vshll.u32 %v2821, 16
        %v2934 = vor.u32 %v2931, %v2932
        %v2935 = vrot.slane %v2931, 4
        %v2937 = vshrl.u32 %v2822, 16
        %v2939 = vrot.slane %v2937, 7
        %v2940 = vshll.u32 %v2822, 16
        %v2942 = vor.u32 %v2939, %v2940
        %v2943 = vrot.slane %v2939, 4
        %v2945 = vshrl.u32 %v2823, 16
        %v2947 = vrot.slane %v2945, 7
        %v2948 = vshll.u32 %v2823, 16
        %v2950 = vor.u32 %v2947, %v2948
        %v2951 = vrot.slane %v2947, 4
        %v2984 = vld [vmem:[%s1113] sm:$0xf]
        %v2985 = vsel %vm1116, %v2830, %v2984
        %2986 = vst [vmem:[%s1113] sm:$0xf] %v2985
        %v2987 = vld [vmem:[%s1113 + $0x4] sm:$0x1]
        %v2988 = vsel %vm1122, %v2831, %v2987
        %2989 = vst [vmem:[%s1113 + $0x4] sm:$0x1] %v2988
        %v2990 = vld [vmem:[%s1113 + $0x8] sm:$0xf]
        %v2991 = vsel %vm1116, %v2838, %v2990
        %2992 = vst [vmem:[%s1113 + $0x8] sm:$0xf] %v2991
        %v2993 = vld [vmem:[%s1113 + $0xc] sm:$0x1]
        %v2994 = vsel %vm1122, %v2839, %v2993
        %2995 = vst [vmem:[%s1113 + $0xc] sm:$0x1] %v2994
        %v2996 = vld [vmem:[%s1113 + $0x10] sm:$0xf]
        %v2997 = vsel %vm1116, %v2846, %v2996
        %2998 = vst [vmem:[%s1113 + $0x10] sm:$0xf] %v2997
        %v2999 = vld [vmem:[%s1113 + $0x14] sm:$0x1]
        %v3000 = vsel %vm1122, %v2847, %v2999
        %3001 = vst [vmem:[%s1113 + $0x14] sm:$0x1] %v3000
        %v3002 = vld [vmem:[%s1113 + $0x18] sm:$0xf]
        %v3003 = vsel %vm1116, %v2854, %v3002
        %3004 = vst [vmem:[%s1113 + $0x18] sm:$0xf] %v3003
        %v3005 = vld [vmem:[%s1113 + $0x1c] sm:$0x1]
        %v3006 = vsel %vm1122, %v2855, %v3005
        %3007 = vst [vmem:[%s1113 + $0x1c] sm:$0x1] %v3006
        %v3008 = vld [vmem:[%s1113 + $0x20] sm:$0xf]
        %v3009 = vsel %vm1116, %v2862, %v3008
        %3010 = vst [vmem:[%s1113 + $0x20] sm:$0xf] %v3009
        %v3011 = vld [vmem:[%s1113 + $0x24] sm:$0x1]
        %v3012 = vsel %vm1122, %v2863, %v3011
        %3013 = vst [vmem:[%s1113 + $0x24] sm:$0x1] %v3012
        %v3014 = vld [vmem:[%s1113 + $0x28] sm:$0xf]
        %v3015 = vsel %vm1116, %v2870, %v3014
        %3016 = vst [vmem:[%s1113 + $0x28] sm:$0xf] %v3015
        %v3017 = vld [vmem:[%s1113 + $0x2c] sm:$0x1]
        %v3018 = vsel %vm1122, %v2871, %v3017
        %3019 = vst [vmem:[%s1113 + $0x2c] sm:$0x1] %v3018
        %v3020 = vld [vmem:[%s1113 + $0x30] sm:$0xf]
        %v3021 = vsel %vm1116, %v2878, %v3020
        %3022 = vst [vmem:[%s1113 + $0x30] sm:$0xf] %v3021
        %v3023 = vld [vmem:[%s1113 + $0x34] sm:$0x1]
        %v3024 = vsel %vm1122, %v2879, %v3023
        %3025 = vst [vmem:[%s1113 + $0x34] sm:$0x1] %v3024
        %v3026 = vld [vmem:[%s1113 + $0x38] sm:$0xf]
        %v3027 = vsel %vm1116, %v2886, %v3026
        %3028 = vst [vmem:[%s1113 + $0x38] sm:$0xf] %v3027
        %v3029 = vld [vmem:[%s1113 + $0x3c] sm:$0x1]
        %v3030 = vsel %vm1122, %v2887, %v3029
        %3031 = vst [vmem:[%s1113 + $0x3c] sm:$0x1] %v3030
        %v3032 = vld [vmem:[%s1113 + $0x48] sm:$0xf]
        %v3033 = vsel %vm1116, %v2894, %v3032
        %3034 = vst [vmem:[%s1113 + $0x48] sm:$0xf] %v3033
        %v3035 = vld [vmem:[%s1113 + $0x4c] sm:$0x1]
        %v3036 = vsel %vm1122, %v2895, %v3035
        %3037 = vst [vmem:[%s1113 + $0x4c] sm:$0x1] %v3036
        %v3038 = vld [vmem:[%s1113 + $0x50] sm:$0xf]
        %v3039 = vsel %vm1116, %v2902, %v3038
        %3040 = vst [vmem:[%s1113 + $0x50] sm:$0xf] %v3039
        %v3041 = vld [vmem:[%s1113 + $0x54] sm:$0x1]
        %v3042 = vsel %vm1122, %v2903, %v3041
        %3043 = vst [vmem:[%s1113 + $0x54] sm:$0x1] %v3042
        %v3044 = vld [vmem:[%s1113 + $0x58] sm:$0xf]
        %v3045 = vsel %vm1116, %v2910, %v3044
        %3046 = vst [vmem:[%s1113 + $0x58] sm:$0xf] %v3045
        %v3047 = vld [vmem:[%s1113 + $0x5c] sm:$0x1]
        %v3048 = vsel %vm1122, %v2911, %v3047
        %3049 = vst [vmem:[%s1113 + $0x5c] sm:$0x1] %v3048
        %v3050 = vld [vmem:[%s1113 + $0x60] sm:$0xf]
        %v3051 = vsel %vm1116, %v2918, %v3050
        %3052 = vst [vmem:[%s1113 + $0x60] sm:$0xf] %v3051
        %v3053 = vld [vmem:[%s1113 + $0x64] sm:$0x1]
        %v3054 = vsel %vm1122, %v2919, %v3053
        %3055 = vst [vmem:[%s1113 + $0x64] sm:$0x1] %v3054
        %v3056 = vld [vmem:[%s1113 + $0x68] sm:$0xf]
        %v3057 = vsel %vm1116, %v2926, %v3056
        %3058 = vst [vmem:[%s1113 + $0x68] sm:$0xf] %v3057
        %v3059 = vld [vmem:[%s1113 + $0x6c] sm:$0x1]
        %v3060 = vsel %vm1122, %v2927, %v3059
        %3061 = vst [vmem:[%s1113 + $0x6c] sm:$0x1] %v3060
        %v3062 = vld [vmem:[%s1113 + $0x70] sm:$0xf]
        %v3063 = vsel %vm1116, %v2934, %v3062
        %3064 = vst [vmem:[%s1113 + $0x70] sm:$0xf] %v3063
        %v3065 = vld [vmem:[%s1113 + $0x74] sm:$0x1]
        %v3066 = vsel %vm1122, %v2935, %v3065
        %3067 = vst [vmem:[%s1113 + $0x74] sm:$0x1] %v3066
        %v3068 = vld [vmem:[%s1113 + $0x78] sm:$0xf]
        %v3069 = vsel %vm1116, %v2942, %v3068
        %3070 = vst [vmem:[%s1113 + $0x78] sm:$0xf] %v3069
        %v3071 = vld [vmem:[%s1113 + $0x7c] sm:$0x1]
        %v3072 = vsel %vm1122, %v2943, %v3071
        %3073 = vst [vmem:[%s1113 + $0x7c] sm:$0x1] %v3072
        %v3074 = vld [vmem:[%s1113 + $0x80] sm:$0xf]
        %v3075 = vsel %vm1116, %v2950, %v3074
        %3076 = vst [vmem:[%s1113 + $0x80] sm:$0xf] %v3075
        %v3077 = vld [vmem:[%s1113 + $0x84] sm:$0x1]
        %v3078 = vsel %vm1122, %v2951, %v3077
        %3079 = vst [vmem:[%s1113 + $0x84] sm:$0x1] %v3078
        %v3080 = vld [vmem:[#allocation2] sm:$0xf]
        %v3081 = vld [vmem:[#allocation2 + $0x8] sm:$0xf]
        %v3082 = vld [vmem:[#allocation2 + $0x10] sm:$0xf]
        %v3083 = vld [vmem:[#allocation2 + $0x18] sm:$0xf]
        %v3084 = vld [vmem:[#allocation2 + $0x20] sm:$0xf]
        %v3085 = vld [vmem:[#allocation2 + $0x28] sm:$0xf]
        %v3086 = vld [vmem:[#allocation2 + $0x30] sm:$0xf]
        %v3087 = vld [vmem:[#allocation2 + $0x38] sm:$0xf]
        %v3088 = vld [vmem:[#allocation2 + $0x48] sm:$0xf]
        %v3089 = vld [vmem:[#allocation2 + $0x50] sm:$0xf]
        %v3090 = vld [vmem:[#allocation2 + $0x58] sm:$0xf]
        %v3091 = vld [vmem:[#allocation2 + $0x60] sm:$0xf]
        %v3092 = vld [vmem:[#allocation2 + $0x68] sm:$0xf]
        %v3093 = vld [vmem:[#allocation2 + $0x70] sm:$0xf]
        %v3094 = vld [vmem:[#allocation2 + $0x78] sm:$0xf]
        %v3095 = vld [vmem:[#allocation2 + $0x80] sm:$0xf]
        %v3096 = vld [vmem:[#allocation2 + $0x4] sm:$0x1]
        %v3097 = vld [vmem:[#allocation2 + $0xc] sm:$0x1]
        %v3098 = vld [vmem:[#allocation2 + $0x14] sm:$0x1]
        %v3099 = vld [vmem:[#allocation2 + $0x1c] sm:$0x1]
        %v3100 = vld [vmem:[#allocation2 + $0x24] sm:$0x1]
        %v3101 = vld [vmem:[#allocation2 + $0x2c] sm:$0x1]
        %v3102 = vld [vmem:[#allocation2 + $0x34] sm:$0x1]
        %v3103 = vld [vmem:[#allocation2 + $0x3c] sm:$0x1]
        %v3104 = vld [vmem:[#allocation2 + $0x4c] sm:$0x1]
        %v3105 = vld [vmem:[#allocation2 + $0x54] sm:$0x1]
        %v3106 = vld [vmem:[#allocation2 + $0x5c] sm:$0x1]
        %v3107 = vld [vmem:[#allocation2 + $0x64] sm:$0x1]
        %v3108 = vld [vmem:[#allocation2 + $0x6c] sm:$0x1]
        %v3109 = vld [vmem:[#allocation2 + $0x74] sm:$0x1]
        %v3110 = vld [vmem:[#allocation2 + $0x7c] sm:$0x1]
        %v3111 = vld [vmem:[#allocation2 + $0x84] sm:$0x1]
        %v3112 = vld [vmem:[%s1113] sm:$0xf]
        %v3113 = vld [vmem:[%s1113 + $0x8] sm:$0xf]
        %v3114 = vld [vmem:[%s1113 + $0x10] sm:$0xf]
        %v3115 = vld [vmem:[%s1113 + $0x18] sm:$0xf]
        %v3116 = vld [vmem:[%s1113 + $0x20] sm:$0xf]
        %v3117 = vld [vmem:[%s1113 + $0x28] sm:$0xf]
        %v3118 = vld [vmem:[%s1113 + $0x30] sm:$0xf]
        %v3119 = vld [vmem:[%s1113 + $0x38] sm:$0xf]
        %v3120 = vld [vmem:[%s1113 + $0x48] sm:$0xf]
        %v3121 = vld [vmem:[%s1113 + $0x50] sm:$0xf]
        %v3122 = vld [vmem:[%s1113 + $0x58] sm:$0xf]
        %v3123 = vld [vmem:[%s1113 + $0x60] sm:$0xf]
        %v3124 = vld [vmem:[%s1113 + $0x68] sm:$0xf]
        %v3125 = vld [vmem:[%s1113 + $0x70] sm:$0xf]
        %v3126 = vld [vmem:[%s1113 + $0x78] sm:$0xf]
        %v3127 = vld [vmem:[%s1113 + $0x80] sm:$0xf]
        %v3128 = vld [vmem:[%s1113 + $0x4] sm:$0x1]
        %v3129 = vld [vmem:[%s1113 + $0xc] sm:$0x1]
        %v3130 = vld [vmem:[%s1113 + $0x14] sm:$0x1]
        %v3131 = vld [vmem:[%s1113 + $0x1c] sm:$0x1]
        %v3132 = vld [vmem:[%s1113 + $0x24] sm:$0x1]
        %v3133 = vld [vmem:[%s1113 + $0x2c] sm:$0x1]
        %v3134 = vld [vmem:[%s1113 + $0x34] sm:$0x1]
        %v3135 = vld [vmem:[%s1113 + $0x3c] sm:$0x1]
        %v3136 = vld [vmem:[%s1113 + $0x4c] sm:$0x1]
        %v3137 = vld [vmem:[%s1113 + $0x54] sm:$0x1]
        %v3138 = vld [vmem:[%s1113 + $0x5c] sm:$0x1]
        %v3139 = vld [vmem:[%s1113 + $0x64] sm:$0x1]
        %v3140 = vld [vmem:[%s1113 + $0x6c] sm:$0x1]
        %v3141 = vld [vmem:[%s1113 + $0x74] sm:$0x1]
        %v3142 = vld [vmem:[%s1113 + $0x7c] sm:$0x1]
        %v3143 = vld [vmem:[%s1113 + $0x84] sm:$0x1]
        %v3176 = vunpack.c.l.b16 %v3080
        %v3177 = vunpack.c.l.b16 %v3096
        %v3178 = vunpack.c.l.b16 %v3081
        %v3179 = vunpack.c.l.b16 %v3097
        %v3180 = vunpack.c.l.b16 %v3082
        %v3181 = vunpack.c.l.b16 %v3098
        %v3182 = vunpack.c.l.b16 %v3083
        %v3183 = vunpack.c.l.b16 %v3099
        %v3184 = vunpack.c.l.b16 %v3084
        %v3185 = vunpack.c.l.b16 %v3100
        %v3186 = vunpack.c.l.b16 %v3085
        %v3187 = vunpack.c.l.b16 %v3101
        %v3188 = vunpack.c.l.b16 %v3086
        %v3189 = vunpack.c.l.b16 %v3102
        %v3190 = vunpack.c.l.b16 %v3087
        %v3191 = vunpack.c.l.b16 %v3103
        %v3192 = vunpack.c.l.b16 %v3088
        %v3193 = vunpack.c.l.b16 %v3104
        %v3194 = vunpack.c.l.b16 %v3089
        %v3195 = vunpack.c.l.b16 %v3105
        %v3196 = vunpack.c.l.b16 %v3090
        %v3197 = vunpack.c.l.b16 %v3106
        %v3198 = vunpack.c.l.b16 %v3091
        %v3199 = vunpack.c.l.b16 %v3107
        %v3200 = vunpack.c.l.b16 %v3092
        %v3201 = vunpack.c.l.b16 %v3108
        %v3202 = vunpack.c.l.b16 %v3093
        %v3203 = vunpack.c.l.b16 %v3109
        %v3204 = vunpack.c.l.b16 %v3094
        %v3205 = vunpack.c.l.b16 %v3110
        %v3206 = vunpack.c.l.b16 %v3095
        %v3207 = vunpack.c.l.b16 %v3111
        %v3208 = vpack.c.b16 %v3177, %v3176
        %v3209 = vpack.c.b16 %v3179, %v3178
        %v3210 = vpack.c.b16 %v3181, %v3180
        %v3211 = vpack.c.b16 %v3183, %v3182
        %v3212 = vpack.c.b16 %v3185, %v3184
        %v3213 = vpack.c.b16 %v3187, %v3186
        %v3214 = vpack.c.b16 %v3189, %v3188
        %v3215 = vpack.c.b16 %v3191, %v3190
        %v3216 = vpack.c.b16 %v3193, %v3192
        %v3217 = vpack.c.b16 %v3195, %v3194
        %v3218 = vpack.c.b16 %v3197, %v3196
        %v3219 = vpack.c.b16 %v3199, %v3198
        %v3220 = vpack.c.b16 %v3201, %v3200
        %v3221 = vpack.c.b16 %v3203, %v3202
        %v3222 = vpack.c.b16 %v3205, %v3204
        %v3223 = vpack.c.b16 %v3207, %v3206
        %v3225 = vshrl.u32 %v3208, 16
        %v3227 = vshll.u32 %v3208, 16
        %v3229 = vrot.slane %v3227, 1
        %v3230 = vor.u32 %v3225, %v3229
        %v3232 = vshrl.u32 %v3209, 16
        %v3234 = vshll.u32 %v3209, 16
        %v3236 = vrot.slane %v3234, 1
        %v3237 = vor.u32 %v3232, %v3236
        %v3239 = vshrl.u32 %v3210, 16
        %v3241 = vshll.u32 %v3210, 16
        %v3243 = vrot.slane %v3241, 1
        %v3244 = vor.u32 %v3239, %v3243
        %v3246 = vshrl.u32 %v3211, 16
        %v3248 = vshll.u32 %v3211, 16
        %v3250 = vrot.slane %v3248, 1
        %v3251 = vor.u32 %v3246, %v3250
        %v3253 = vshrl.u32 %v3212, 16
        %v3255 = vshll.u32 %v3212, 16
        %v3257 = vrot.slane %v3255, 1
        %v3258 = vor.u32 %v3253, %v3257
        %v3260 = vshrl.u32 %v3213, 16
        %v3262 = vshll.u32 %v3213, 16
        %v3264 = vrot.slane %v3262, 1
        %v3265 = vor.u32 %v3260, %v3264
        %v3267 = vshrl.u32 %v3214, 16
        %v3269 = vshll.u32 %v3214, 16
        %v3271 = vrot.slane %v3269, 1
        %v3272 = vor.u32 %v3267, %v3271
        %v3274 = vshrl.u32 %v3215, 16
        %v3276 = vshll.u32 %v3215, 16
        %v3278 = vrot.slane %v3276, 1
        %v3279 = vor.u32 %v3274, %v3278
        %v3281 = vshrl.u32 %v3216, 16
        %v3283 = vshll.u32 %v3216, 16
        %v3285 = vrot.slane %v3283, 1
        %v3286 = vor.u32 %v3281, %v3285
        %v3288 = vshrl.u32 %v3217, 16
        %v3290 = vshll.u32 %v3217, 16
        %v3292 = vrot.slane %v3290, 1
        %v3293 = vor.u32 %v3288, %v3292
        %v3295 = vshrl.u32 %v3218, 16
        %v3297 = vshll.u32 %v3218, 16
        %v3299 = vrot.slane %v3297, 1
        %v3300 = vor.u32 %v3295, %v3299
        %v3302 = vshrl.u32 %v3219, 16
        %v3304 = vshll.u32 %v3219, 16
        %v3306 = vrot.slane %v3304, 1
        %v3307 = vor.u32 %v3302, %v3306
        %v3309 = vshrl.u32 %v3220, 16
        %v3311 = vshll.u32 %v3220, 16
        %v3313 = vrot.slane %v3311, 1
        %v3314 = vor.u32 %v3309, %v3313
        %v3316 = vshrl.u32 %v3221, 16
        %v3318 = vshll.u32 %v3221, 16
        %v3320 = vrot.slane %v3318, 1
        %v3321 = vor.u32 %v3316, %v3320
        %v3323 = vshrl.u32 %v3222, 16
        %v3325 = vshll.u32 %v3222, 16
        %v3327 = vrot.slane %v3325, 1
        %v3328 = vor.u32 %v3323, %v3327
        %v3330 = vshrl.u32 %v3223, 16
        %v3332 = vshll.u32 %v3223, 16
        %v3334 = vrot.slane %v3332, 1
        %v3335 = vor.u32 %v3330, %v3334
        %v3368 = vunpack.c.l.b16 %v3112
        %v3369 = vunpack.c.l.b16 %v3128
        %v3370 = vunpack.c.l.b16 %v3113
        %v3371 = vunpack.c.l.b16 %v3129
        %v3372 = vunpack.c.l.b16 %v3114
        %v3373 = vunpack.c.l.b16 %v3130
        %v3374 = vunpack.c.l.b16 %v3115
        %v3375 = vunpack.c.l.b16 %v3131
        %v3376 = vunpack.c.l.b16 %v3116
        %v3377 = vunpack.c.l.b16 %v3132
        %v3378 = vunpack.c.l.b16 %v3117
        %v3379 = vunpack.c.l.b16 %v3133
        %v3380 = vunpack.c.l.b16 %v3118
        %v3381 = vunpack.c.l.b16 %v3134
        %v3382 = vunpack.c.l.b16 %v3119
        %v3383 = vunpack.c.l.b16 %v3135
        %v3384 = vunpack.c.l.b16 %v3120
        %v3385 = vunpack.c.l.b16 %v3136
        %v3386 = vunpack.c.l.b16 %v3121
        %v3387 = vunpack.c.l.b16 %v3137
        %v3388 = vunpack.c.l.b16 %v3122
        %v3389 = vunpack.c.l.b16 %v3138
        %v3390 = vunpack.c.l.b16 %v3123
        %v3391 = vunpack.c.l.b16 %v3139
        %v3392 = vunpack.c.l.b16 %v3124
        %v3393 = vunpack.c.l.b16 %v3140
        %v3394 = vunpack.c.l.b16 %v3125
        %v3395 = vunpack.c.l.b16 %v3141
        %v3396 = vunpack.c.l.b16 %v3126
        %v3397 = vunpack.c.l.b16 %v3142
        %v3398 = vunpack.c.l.b16 %v3127
        %v3399 = vunpack.c.l.b16 %v3143
        %v3400 = vpack.c.b16 %v3369, %v3368
        %v3401 = vpack.c.b16 %v3371, %v3370
        %v3402 = vpack.c.b16 %v3373, %v3372
        %v3403 = vpack.c.b16 %v3375, %v3374
        %v3404 = vpack.c.b16 %v3377, %v3376
        %v3405 = vpack.c.b16 %v3379, %v3378
        %v3406 = vpack.c.b16 %v3381, %v3380
        %v3407 = vpack.c.b16 %v3383, %v3382
        %v3408 = vpack.c.b16 %v3385, %v3384
        %v3409 = vpack.c.b16 %v3387, %v3386
        %v3410 = vpack.c.b16 %v3389, %v3388
        %v3411 = vpack.c.b16 %v3391, %v3390
        %v3412 = vpack.c.b16 %v3393, %v3392
        %v3413 = vpack.c.b16 %v3395, %v3394
        %v3414 = vpack.c.b16 %v3397, %v3396
        %v3415 = vpack.c.b16 %v3399, %v3398
        %v3417 = vshrl.u32 %v3400, 16
        %v3419 = vshll.u32 %v3400, 16
        %v3421 = vrot.slane %v3419, 1
        %v3422 = vor.u32 %v3417, %v3421
        %v3424 = vshrl.u32 %v3401, 16
        %v3426 = vshll.u32 %v3401, 16
        %v3428 = vrot.slane %v3426, 1
        %v3429 = vor.u32 %v3424, %v3428
        %v3431 = vshrl.u32 %v3402, 16
        %v3433 = vshll.u32 %v3402, 16
        %v3435 = vrot.slane %v3433, 1
        %v3436 = vor.u32 %v3431, %v3435
        %v3438 = vshrl.u32 %v3403, 16
        %v3440 = vshll.u32 %v3403, 16
        %v3442 = vrot.slane %v3440, 1
        %v3443 = vor.u32 %v3438, %v3442
        %v3445 = vshrl.u32 %v3404, 16
        %v3447 = vshll.u32 %v3404, 16
        %v3449 = vrot.slane %v3447, 1
        %v3450 = vor.u32 %v3445, %v3449
        %v3452 = vshrl.u32 %v3405, 16
        %v3454 = vshll.u32 %v3405, 16
        %v3456 = vrot.slane %v3454, 1
        %v3457 = vor.u32 %v3452, %v3456
        %v3459 = vshrl.u32 %v3406, 16
        %v3461 = vshll.u32 %v3406, 16
        %v3463 = vrot.slane %v3461, 1
        %v3464 = vor.u32 %v3459, %v3463
        %v3466 = vshrl.u32 %v3407, 16
        %v3468 = vshll.u32 %v3407, 16
        %v3470 = vrot.slane %v3468, 1
        %v3471 = vor.u32 %v3466, %v3470
        %v3473 = vshrl.u32 %v3408, 16
        %v3475 = vshll.u32 %v3408, 16
        %v3477 = vrot.slane %v3475, 1
        %v3478 = vor.u32 %v3473, %v3477
        %v3480 = vshrl.u32 %v3409, 16
        %v3482 = vshll.u32 %v3409, 16
        %v3484 = vrot.slane %v3482, 1
        %v3485 = vor.u32 %v3480, %v3484
        %v3487 = vshrl.u32 %v3410, 16
        %v3489 = vshll.u32 %v3410, 16
        %v3491 = vrot.slane %v3489, 1
        %v3492 = vor.u32 %v3487, %v3491
        %v3494 = vshrl.u32 %v3411, 16
        %v3496 = vshll.u32 %v3411, 16
        %v3498 = vrot.slane %v3496, 1
        %v3499 = vor.u32 %v3494, %v3498
        %v3501 = vshrl.u32 %v3412, 16
        %v3503 = vshll.u32 %v3412, 16
        %v3505 = vrot.slane %v3503, 1
        %v3506 = vor.u32 %v3501, %v3505
        %v3508 = vshrl.u32 %v3413, 16
        %v3510 = vshll.u32 %v3413, 16
        %v3512 = vrot.slane %v3510, 1
        %v3513 = vor.u32 %v3508, %v3512
        %v3515 = vshrl.u32 %v3414, 16
        %v3517 = vshll.u32 %v3414, 16
        %v3519 = vrot.slane %v3517, 1
        %v3520 = vor.u32 %v3515, %v3519
        %v3522 = vshrl.u32 %v3415, 16
        %v3524 = vshll.u32 %v3415, 16
        %v3526 = vrot.slane %v3524, 1
        %v3527 = vor.u32 %v3522, %v3526
        %v3528 = vunpack.c.l.b16 %v3230
        %v3529 = vunpack.c.l.b16 %v3422
        %v3530 = vunpack.c.l.b16 %v3237
        %v3531 = vunpack.c.l.b16 %v3429
        %v3532 = vunpack.c.l.b16 %v3244
        %v3533 = vunpack.c.l.b16 %v3436
        %v3534 = vunpack.c.l.b16 %v3251
        %v3535 = vunpack.c.l.b16 %v3443
        %v3536 = vunpack.c.l.b16 %v3258
        %v3537 = vunpack.c.l.b16 %v3450
        %v3538 = vunpack.c.l.b16 %v3265
        %v3539 = vunpack.c.l.b16 %v3457
        %v3540 = vunpack.c.l.b16 %v3272
        %v3541 = vunpack.c.l.b16 %v3464
        %v3542 = vunpack.c.l.b16 %v3279
        %v3543 = vunpack.c.l.b16 %v3471
        %v3544 = vunpack.c.l.b16 %v3286
        %v3545 = vunpack.c.l.b16 %v3478
        %v3546 = vunpack.c.l.b16 %v3293
        %v3547 = vunpack.c.l.b16 %v3485
        %v3548 = vunpack.c.l.b16 %v3300
        %v3549 = vunpack.c.l.b16 %v3492
        %v3550 = vunpack.c.l.b16 %v3307
        %v3551 = vunpack.c.l.b16 %v3499
        %v3552 = vunpack.c.l.b16 %v3314
        %v3553 = vunpack.c.l.b16 %v3506
        %v3554 = vunpack.c.l.b16 %v3321
        %v3555 = vunpack.c.l.b16 %v3513
        %v3556 = vunpack.c.l.b16 %v3328
        %v3557 = vunpack.c.l.b16 %v3520
        %v3558 = vunpack.c.l.b16 %v3335
        %v3559 = vunpack.c.l.b16 %v3527
        %v3560 = vld [vmem:[%s524] sm:$0xf]
        %v3561 = vld [vmem:[%s524 + $0x4] sm:$0xf]
        %v3562 = vld [vmem:[%s524 + $0x8] sm:$0xf]
        %v3563 = vld [vmem:[%s524 + $0xc] sm:$0xf]
        %v3564 = vld [vmem:[%s524 + $0x10] sm:$0xf]
        %v3565 = vld [vmem:[%s524 + $0x14] sm:$0xf]
        %v3566 = vld [vmem:[%s524 + $0x18] sm:$0xf]
        %v3567 = vld [vmem:[%s524 + $0x1c] sm:$0xf]
        %v3568 = vld [vmem:[%s524 + $0x20] sm:$0xf]
        %v3569 = vld [vmem:[%s524 + $0x24] sm:$0xf]
        %v3570 = vld [vmem:[%s524 + $0x28] sm:$0xf]
        %v3571 = vld [vmem:[%s524 + $0x2c] sm:$0xf]
        %v3572 = vld [vmem:[%s524 + $0x30] sm:$0xf]
        %v3573 = vld [vmem:[%s524 + $0x34] sm:$0xf]
        %v3574 = vld [vmem:[%s524 + $0x38] sm:$0xf]
        %v3575 = vld [vmem:[%s524 + $0x3c] sm:$0xf]
        %v3576 = vld [vmem:[%s524 + $0x40] sm:$0xf]
        %v3577 = vld [vmem:[%s524 + $0x44] sm:$0xf]
        %v3578 = vld [vmem:[%s524 + $0x48] sm:$0xf]
        %v3579 = vld [vmem:[%s524 + $0x4c] sm:$0xf]
        %v3580 = vld [vmem:[%s524 + $0x50] sm:$0xf]
        %v3581 = vld [vmem:[%s524 + $0x54] sm:$0xf]
        %v3582 = vld [vmem:[%s524 + $0x58] sm:$0xf]
        %v3583 = vld [vmem:[%s524 + $0x5c] sm:$0xf]
        %v3584 = vld [vmem:[%s524 + $0x60] sm:$0xf]
        %v3585 = vld [vmem:[%s524 + $0x64] sm:$0xf]
        %v3586 = vld [vmem:[%s524 + $0x68] sm:$0xf]
        %v3587 = vld [vmem:[%s524 + $0x6c] sm:$0xf]
        %v3588 = vld [vmem:[%s524 + $0x70] sm:$0xf]
        %v3589 = vld [vmem:[%s524 + $0x74] sm:$0xf]
        %v3590 = vld [vmem:[%s524 + $0x78] sm:$0xf]
        %v3591 = vld [vmem:[%s524 + $0x7c] sm:$0xf]
        %v3592 = vld [vmem:[%s524 + $0x80] sm:$0xf]
        %v3593 = vld [vmem:[%s524 + $0x84] sm:$0xf]
        %v3594 = vld [vmem:[%s524 + $0x88] sm:$0xf]
        %v3595 = vld [vmem:[%s524 + $0x8c] sm:$0xf]
        %v3596 = vld [vmem:[%s524 + $0x90] sm:$0xf]
        %v3597 = vld [vmem:[%s524 + $0x94] sm:$0xf]
        %v3598 = vld [vmem:[%s524 + $0x98] sm:$0xf]
        %v3599 = vld [vmem:[%s524 + $0x9c] sm:$0xf]
        %v3600 = vld [vmem:[%s524 + $0xa0] sm:$0xf]
        %v3601 = vld [vmem:[%s524 + $0xa4] sm:$0xf]
        %v3602 = vld [vmem:[%s524 + $0xa8] sm:$0xf]
        %v3603 = vld [vmem:[%s524 + $0xac] sm:$0xf]
        %v3604 = vld [vmem:[%s524 + $0xb0] sm:$0xf]
        %v3605 = vld [vmem:[%s524 + $0xb4] sm:$0xf]
        %v3606 = vld [vmem:[%s524 + $0xb8] sm:$0xf]
        %v3607 = vld [vmem:[%s524 + $0xbc] sm:$0xf]
        %v3608 = vld [vmem:[%s524 + $0xc0] sm:$0xf]
        %v3609 = vld [vmem:[%s524 + $0xc4] sm:$0xf]
        %v3610 = vld [vmem:[%s524 + $0xc8] sm:$0xf]
        %v3611 = vld [vmem:[%s524 + $0xcc] sm:$0xf]
        %v3612 = vld [vmem:[%s524 + $0xd0] sm:$0xf]
        %v3613 = vld [vmem:[%s524 + $0xd4] sm:$0xf]
        %v3614 = vld [vmem:[%s524 + $0xd8] sm:$0xf]
        %v3615 = vld [vmem:[%s524 + $0xdc] sm:$0xf]
        %v3616 = vld [vmem:[%s524 + $0xe0] sm:$0xf]
        %v3617 = vld [vmem:[%s524 + $0xe4] sm:$0xf]
        %v3618 = vld [vmem:[%s524 + $0xe8] sm:$0xf]
        %v3619 = vld [vmem:[%s524 + $0xec] sm:$0xf]
        %v3620 = vld [vmem:[%s524 + $0xf0] sm:$0xf]
        %v3621 = vld [vmem:[%s524 + $0xf4] sm:$0xf]
        %v3622 = vld [vmem:[%s524 + $0xf8] sm:$0xf]
        %v3623 = vld [vmem:[%s524 + $0xfc] sm:$0xf]
        %v3624 = vld [vmem:[%s527] sm:$0x1]
        %v3626 = vlaneseq
        %v3627 = vshrl.u32 %v3626, 7
        %v3628 = vsub.s32 0, %v3627
        %v3629 = vrot.slane %v3624, %v3628
        %v3631 = vpack.c.b16 %v3178, %v3176
        %v3632 = vpack.c.b16 %v3530, %v3528
        %v3633 = vpack.c.b16 %v3370, %v3368
        %v3634 = vpack.c.b16 %v3531, %v3529
        %v3635 = vpack.c.b16 %v3182, %v3180
        %v3636 = vpack.c.b16 %v3534, %v3532
        %v3637 = vpack.c.b16 %v3374, %v3372
        %v3638 = vpack.c.b16 %v3535, %v3533
        %v3639 = vpack.c.b16 %v3186, %v3184
        %v3640 = vpack.c.b16 %v3538, %v3536
        %v3641 = vpack.c.b16 %v3378, %v3376
        %v3642 = vpack.c.b16 %v3539, %v3537
        %v3643 = vpack.c.b16 %v3190, %v3188
        %v3644 = vpack.c.b16 %v3542, %v3540
        %v3645 = vpack.c.b16 %v3382, %v3380
        %v3646 = vpack.c.b16 %v3543, %v3541
        %v3647 = vpack.c.b16 %v3194, %v3192
        %v3648 = vpack.c.b16 %v3546, %v3544
        %v3649 = vpack.c.b16 %v3386, %v3384
        %v3650 = vpack.c.b16 %v3547, %v3545
        %v3651 = vpack.c.b16 %v3198, %v3196
        %v3652 = vpack.c.b16 %v3550, %v3548
        %v3653 = vpack.c.b16 %v3390, %v3388
        %v3654 = vpack.c.b16 %v3551, %v3549
        %v3655 = vpack.c.b16 %v3202, %v3200
        %v3656 = vpack.c.b16 %v3554, %v3552
        %v3657 = vpack.c.b16 %v3394, %v3392
        %v3658 = vpack.c.b16 %v3555, %v3553
        %v3659 = vpack.c.b16 %v3206, %v3204
        %v3660 = vpack.c.b16 %v3558, %v3556
        %v3661 = vpack.c.b16 %v3398, %v3396
        %v3662 = vpack.c.b16 %v3559, %v3557
        %v3759 = vunpack.c.l.b16 %v3560
        %v3760 = vunpack.c.l.b16 %v3561
        %v3761 = vunpack.c.l.b16 %v3562
        %v3762 = vunpack.c.l.b16 %v3563
        %v3763 = vunpack.c.l.b16 %v3564
        %v3764 = vunpack.c.l.b16 %v3565
        %v3765 = vunpack.c.l.b16 %v3566
        %v3766 = vunpack.c.l.b16 %v3567
        %v3767 = vunpack.c.l.b16 %v3568
        %v3768 = vunpack.c.l.b16 %v3569
        %v3769 = vunpack.c.l.b16 %v3570
        %v3770 = vunpack.c.l.b16 %v3571
        %v3771 = vunpack.c.l.b16 %v3572
        %v3772 = vunpack.c.l.b16 %v3573
        %v3773 = vunpack.c.l.b16 %v3574
        %v3774 = vunpack.c.l.b16 %v3575
        %v3775 = vunpack.c.l.b16 %v3576
        %v3776 = vunpack.c.l.b16 %v3577
        %v3777 = vunpack.c.l.b16 %v3578
        %v3778 = vunpack.c.l.b16 %v3579
        %v3779 = vunpack.c.l.b16 %v3580
        %v3780 = vunpack.c.l.b16 %v3581
        %v3781 = vunpack.c.l.b16 %v3582
        %v3782 = vunpack.c.l.b16 %v3583
        %v3783 = vunpack.c.l.b16 %v3584
        %v3784 = vunpack.c.l.b16 %v3585
        %v3785 = vunpack.c.l.b16 %v3586
        %v3786 = vunpack.c.l.b16 %v3587
        %v3787 = vunpack.c.l.b16 %v3588
        %v3788 = vunpack.c.l.b16 %v3589
        %v3789 = vunpack.c.l.b16 %v3590
        %v3790 = vunpack.c.l.b16 %v3591
        %v3791 = vunpack.c.l.b16 %v3592
        %v3792 = vunpack.c.l.b16 %v3593
        %v3793 = vunpack.c.l.b16 %v3594
        %v3794 = vunpack.c.l.b16 %v3595
        %v3795 = vunpack.c.l.b16 %v3596
        %v3796 = vunpack.c.l.b16 %v3597
        %v3797 = vunpack.c.l.b16 %v3598
        %v3798 = vunpack.c.l.b16 %v3599
        %v3799 = vunpack.c.l.b16 %v3600
        %v3800 = vunpack.c.l.b16 %v3601
        %v3801 = vunpack.c.l.b16 %v3602
        %v3802 = vunpack.c.l.b16 %v3603
        %v3803 = vunpack.c.l.b16 %v3604
        %v3804 = vunpack.c.l.b16 %v3605
        %v3805 = vunpack.c.l.b16 %v3606
        %v3806 = vunpack.c.l.b16 %v3607
        %v3807 = vunpack.c.l.b16 %v3608
        %v3808 = vunpack.c.l.b16 %v3609
        %v3809 = vunpack.c.l.b16 %v3610
        %v3810 = vunpack.c.l.b16 %v3611
        %v3811 = vunpack.c.l.b16 %v3612
        %v3812 = vunpack.c.l.b16 %v3613
        %v3813 = vunpack.c.l.b16 %v3614
        %v3814 = vunpack.c.l.b16 %v3615
        %v3815 = vunpack.c.l.b16 %v3616
        %v3816 = vunpack.c.l.b16 %v3617
        %v3817 = vunpack.c.l.b16 %v3618
        %v3818 = vunpack.c.l.b16 %v3619
        %v3819 = vunpack.c.l.b16 %v3620
        %v3820 = vunpack.c.l.b16 %v3621
        %v3821 = vunpack.c.l.b16 %v3622
        %v3822 = vunpack.c.l.b16 %v3623
        %v3823 = vpack.c.b16 %v3760, %v3759
        %v3824 = vpack.c.b16 %v3762, %v3761
        %v3825 = vpack.c.b16 %v3764, %v3763
        %v3826 = vpack.c.b16 %v3766, %v3765
        %v3827 = vpack.c.b16 %v3768, %v3767
        %v3828 = vpack.c.b16 %v3770, %v3769
        %v3829 = vpack.c.b16 %v3772, %v3771
        %v3830 = vpack.c.b16 %v3774, %v3773
        %v3831 = vpack.c.b16 %v3776, %v3775
        %v3832 = vpack.c.b16 %v3778, %v3777
        %v3833 = vpack.c.b16 %v3780, %v3779
        %v3834 = vpack.c.b16 %v3782, %v3781
        %v3835 = vpack.c.b16 %v3784, %v3783
        %v3836 = vpack.c.b16 %v3786, %v3785
        %v3837 = vpack.c.b16 %v3788, %v3787
        %v3838 = vpack.c.b16 %v3790, %v3789
        %v3839 = vpack.c.b16 %v3792, %v3791
        %v3840 = vpack.c.b16 %v3794, %v3793
        %v3841 = vpack.c.b16 %v3796, %v3795
        %v3842 = vpack.c.b16 %v3798, %v3797
        %v3843 = vpack.c.b16 %v3800, %v3799
        %v3844 = vpack.c.b16 %v3802, %v3801
        %v3845 = vpack.c.b16 %v3804, %v3803
        %v3846 = vpack.c.b16 %v3806, %v3805
        %v3847 = vpack.c.b16 %v3808, %v3807
        %v3848 = vpack.c.b16 %v3810, %v3809
        %v3849 = vpack.c.b16 %v3812, %v3811
        %v3850 = vpack.c.b16 %v3814, %v3813
        %v3851 = vpack.c.b16 %v3816, %v3815
        %v3852 = vpack.c.b16 %v3818, %v3817
        %v3853 = vpack.c.b16 %v3820, %v3819
        %v3854 = vpack.c.b16 %v3822, %v3821
        %3887 = vmatprep.subr.bf16.mxu0 0
        %3888 = vmatpush1.bf16.msra.mxu0 %v3823
        %3889 = vmatprep.subr.bf16.mxu0 0
        %3890 = vmatpush1.bf16.msra.mxu0 %v3824
        %3891 = vmatprep.subr.bf16.mxu0 0
        %3892 = vmatpush1.bf16.msra.mxu0 %v3825
        %3893 = vmatprep.subr.bf16.mxu0 0
        %3894 = vmatpush1.bf16.msra.mxu0 %v3826
        %3895 = vmatprep.subr.bf16.mxu0 0
        %3896 = vmatpush1.bf16.msra.mxu0 %v3827
        %3897 = vmatprep.subr.bf16.mxu0 0
        %3898 = vmatpush1.bf16.msra.mxu0 %v3828
        %3899 = vmatprep.subr.bf16.mxu0 0
        %3900 = vmatpush1.bf16.msra.mxu0 %v3829
        %3901 = vmatprep.subr.bf16.mxu0 0
        %3902 = vmatpush1.bf16.msra.mxu0 %v3830
        %3903 = vmatprep.subr.bf16.mxu0 0
        %3904 = vmatpush1.bf16.msra.mxu0 %v3831
        %3905 = vmatprep.subr.bf16.mxu0 0
        %3906 = vmatpush1.bf16.msra.mxu0 %v3832
        %3907 = vmatprep.subr.bf16.mxu0 0
        %3908 = vmatpush1.bf16.msra.mxu0 %v3833
        %3909 = vmatprep.subr.bf16.mxu0 0
        %3910 = vmatpush1.bf16.msra.mxu0 %v3834
        %3911 = vmatprep.subr.bf16.mxu0 0
        %3912 = vmatpush1.bf16.msra.mxu0 %v3835
        %3913 = vmatprep.subr.bf16.mxu0 0
        %3914 = vmatpush1.bf16.msra.mxu0 %v3836
        %3915 = vmatprep.subr.bf16.mxu0 0
        %3916 = vmatpush1.bf16.msra.mxu0 %v3837
        %3917 = vmatprep.subr.bf16.mxu0 0
        %3918 = vmatpush1.bf16.msra.mxu0 %v3838
        %3919 = vmatprep.mubr.bf16.mxu0 %v3632
        %3920 = vmatmul.mubr.bf16.gmra.mrb[0].mxu0 %v3631
        %v3921 = vpop.f32.mrb[0].mxu0
        %v3922 = vadd.f32 %v3629, %v3921
        %v3923 = vpop.f32.mrb[0].mxu0
        %v3924 = vpop.f32.mrb[0].mxu0
        %v3925 = vadd.f32 %v3629, %v3924
        %v3926 = vpop.f32.mrb[0].mxu0
        %3927 = vmatprep.mubr.bf16.mxu0 %v3636
        %3928 = vmatmul.mubr.bf16.gmra.mrb[0].mxu0 %v3635
        %v3929 = vpop.f32.mrb[0].mxu0
        %v3930 = vadd.f32 %v3629, %v3929
        %v3931 = vpop.f32.mrb[0].mxu0
        %v3932 = vpop.f32.mrb[0].mxu0
        %v3933 = vadd.f32 %v3629, %v3932
        %v3934 = vpop.f32.mrb[0].mxu0
        %3935 = vmatprep.mubr.bf16.mxu0 %v3640
        %3936 = vmatmul.mubr.bf16.gmra.mrb[0].mxu0 %v3639
        %v3937 = vpop.f32.mrb[0].mxu0
        %v3938 = vadd.f32 %v3629, %v3937
        %v3939 = vpop.f32.mrb[0].mxu0
        %v3940 = vpop.f32.mrb[0].mxu0
        %v3941 = vadd.f32 %v3629, %v3940
        %v3942 = vpop.f32.mrb[0].mxu0
        %3943 = vmatprep.mubr.bf16.mxu0 %v3644
        %3944 = vmatmul.mubr.bf16.gmra.mrb[0].mxu0 %v3643
        %v3945 = vpop.f32.mrb[0].mxu0
        %v3946 = vadd.f32 %v3629, %v3945
        %v3947 = vpop.f32.mrb[0].mxu0
        %v3948 = vpop.f32.mrb[0].mxu0
        %v3949 = vadd.f32 %v3629, %v3948
        %v3950 = vpop.f32.mrb[0].mxu0
        %3951 = vmatprep.mubr.bf16.mxu0 %v3648
        %3952 = vmatmul.mubr.bf16.gmra.mrb[0].mxu0 %v3647
        %v3953 = vpop.f32.mrb[0].mxu0
        %v3954 = vadd.f32 %v3629, %v3953
        %v3955 = vpop.f32.mrb[0].mxu0
        %v3956 = vpop.f32.mrb[0].mxu0
        %v3957 = vadd.f32 %v3629, %v3956
        %v3958 = vpop.f32.mrb[0].mxu0
        %3959 = vmatprep.mubr.bf16.mxu0 %v3652
        %3960 = vmatmul.mubr.bf16.gmra.mrb[0].mxu0 %v3651
        %v3961 = vpop.f32.mrb[0].mxu0
        %v3962 = vadd.f32 %v3629, %v3961
        %v3963 = vpop.f32.mrb[0].mxu0
        %v3964 = vpop.f32.mrb[0].mxu0
        %v3965 = vadd.f32 %v3629, %v3964
        %v3966 = vpop.f32.mrb[0].mxu0
        %3967 = vmatprep.mubr.bf16.mxu0 %v3656
        %3968 = vmatmul.mubr.bf16.gmra.mrb[0].mxu0 %v3655
        %v3969 = vpop.f32.mrb[0].mxu0
        %v3970 = vadd.f32 %v3629, %v3969
        %v3971 = vpop.f32.mrb[0].mxu0
        %v3972 = vpop.f32.mrb[0].mxu0
        %v3973 = vadd.f32 %v3629, %v3972
        %v3974 = vpop.f32.mrb[0].mxu0
        %3975 = vmatprep.mubr.bf16.mxu0 %v3660
        %3976 = vmatmul.mubr.bf16.gmra.mrb[0].mxu0 %v3659
        %v3977 = vpop.f32.mrb[0].mxu0
        %v3978 = vadd.f32 %v3629, %v3977
        %v3979 = vpop.f32.mrb[0].mxu0
        %v3980 = vpop.f32.mrb[0].mxu0
        %v3981 = vadd.f32 %v3629, %v3980
        %v3982 = vpop.f32.mrb[0].mxu0
        %3983 = vdwg.mxu0
        %3984 = vmatprep.subr.bf16.mxu0 0
        %3985 = vmatpush1.bf16.msra.mxu0 %v3839
        %3986 = vmatprep.subr.bf16.mxu0 0
        %3987 = vmatpush1.bf16.msra.mxu0 %v3840
        %3988 = vmatprep.subr.bf16.mxu0 0
        %3989 = vmatpush1.bf16.msra.mxu0 %v3841
        %3990 = vmatprep.subr.bf16.mxu0 0
        %3991 = vmatpush1.bf16.msra.mxu0 %v3842
        %3992 = vmatprep.subr.bf16.mxu0 0
        %3993 = vmatpush1.bf16.msra.mxu0 %v3843
        %3994 = vmatprep.subr.bf16.mxu0 0
        %3995 = vmatpush1.bf16.msra.mxu0 %v3844
        %3996 = vmatprep.subr.bf16.mxu0 0
        %3997 = vmatpush1.bf16.msra.mxu0 %v3845
        %3998 = vmatprep.subr.bf16.mxu0 0
        %3999 = vmatpush1.bf16.msra.mxu0 %v3846
        %4000 = vmatprep.subr.bf16.mxu0 0
        %4001 = vmatpush1.bf16.msra.mxu0 %v3847
        %4002 = vmatprep.subr.bf16.mxu0 0
        %4003 = vmatpush1.bf16.msra.mxu0 %v3848
        %4004 = vmatprep.subr.bf16.mxu0 0
        %4005 = vmatpush1.bf16.msra.mxu0 %v3849
        %4006 = vmatprep.subr.bf16.mxu0 0
        %4007 = vmatpush1.bf16.msra.mxu0 %v3850
        %4008 = vmatprep.subr.bf16.mxu0 0
        %4009 = vmatpush1.bf16.msra.mxu0 %v3851
        %4010 = vmatprep.subr.bf16.mxu0 0
        %4011 = vmatpush1.bf16.msra.mxu0 %v3852
        %4012 = vmatprep.subr.bf16.mxu0 0
        %4013 = vmatpush1.bf16.msra.mxu0 %v3853
        %4014 = vmatprep.subr.bf16.mxu0 0
        %4015 = vmatpush1.bf16.msra.mxu0 %v3854
        %4016 = vmatprep.mubr.bf16.mxu0 %v3634
        %4017 = vmatmul.mubr.bf16.gmra.mrb[0].mxu0 %v3633
        %v4018 = vpop.f32.mrb[0].mxu0
        %v4019 = vadd.f32 %v3922, %v4018
        %v4020 = vpop.f32.mrb[0].mxu0
        %v4021 = vpop.f32.mrb[0].mxu0
        %v4022 = vadd.f32 %v3925, %v4021
        %v4023 = vpop.f32.mrb[0].mxu0
        %4024 = vmatprep.mubr.bf16.mxu0 %v3638
        %4025 = vmatmul.mubr.bf16.gmra.mrb[0].mxu0 %v3637
        %v4026 = vpop.f32.mrb[0].mxu0
        %v4027 = vadd.f32 %v3930, %v4026
        %v4028 = vpop.f32.mrb[0].mxu0
        %v4029 = vpop.f32.mrb[0].mxu0
        %v4030 = vadd.f32 %v3933, %v4029
        %v4031 = vpop.f32.mrb[0].mxu0
        %4032 = vmatprep.mubr.bf16.mxu0 %v3642
        %4033 = vmatmul.mubr.bf16.gmra.mrb[0].mxu0 %v3641
        %v4034 = vpop.f32.mrb[0].mxu0
        %v4035 = vadd.f32 %v3938, %v4034
        %v4036 = vpop.f32.mrb[0].mxu0
        %v4037 = vpop.f32.mrb[0].mxu0
        %v4038 = vadd.f32 %v3941, %v4037
        %v4039 = vpop.f32.mrb[0].mxu0
        %4040 = vmatprep.mubr.bf16.mxu0 %v3646
        %4041 = vmatmul.mubr.bf16.gmra.mrb[0].mxu0 %v3645
        %v4042 = vpop.f32.mrb[0].mxu0
        %v4043 = vadd.f32 %v3946, %v4042
        %v4044 = vpop.f32.mrb[0].mxu0
        %v4045 = vpop.f32.mrb[0].mxu0
        %v4046 = vadd.f32 %v3949, %v4045
        %v4047 = vpop.f32.mrb[0].mxu0
        %4048 = vmatprep.mubr.bf16.mxu0 %v3650
        %4049 = vmatmul.mubr.bf16.gmra.mrb[0].mxu0 %v3649
        %v4050 = vpop.f32.mrb[0].mxu0
        %v4051 = vadd.f32 %v3954, %v4050
        %v4052 = vpop.f32.mrb[0].mxu0
        %v4053 = vpop.f32.mrb[0].mxu0
        %v4054 = vadd.f32 %v3957, %v4053
        %v4055 = vpop.f32.mrb[0].mxu0
        %4056 = vmatprep.mubr.bf16.mxu0 %v3654
        %4057 = vmatmul.mubr.bf16.gmra.mrb[0].mxu0 %v3653
        %v4058 = vpop.f32.mrb[0].mxu0
        %v4059 = vadd.f32 %v3962, %v4058
        %v4060 = vpop.f32.mrb[0].mxu0
        %v4061 = vpop.f32.mrb[0].mxu0
        %v4062 = vadd.f32 %v3965, %v4061
        %v4063 = vpop.f32.mrb[0].mxu0
        %4064 = vmatprep.mubr.bf16.mxu0 %v3658
        %4065 = vmatmul.mubr.bf16.gmra.mrb[0].mxu0 %v3657
        %v4066 = vpop.f32.mrb[0].mxu0
        %v4067 = vadd.f32 %v3970, %v4066
        %v4068 = vpop.f32.mrb[0].mxu0
        %v4069 = vpop.f32.mrb[0].mxu0
        %v4070 = vadd.f32 %v3973, %v4069
        %v4071 = vpop.f32.mrb[0].mxu0
        %4072 = vmatprep.mubr.bf16.mxu0 %v3662
        %4073 = vmatmul.mubr.bf16.gmra.mrb[0].mxu0 %v3661
        %v4074 = vpop.f32.mrb[0].mxu0
        %v4075 = vadd.f32 %v3978, %v4074
        %v4076 = vpop.f32.mrb[0].mxu0
        %v4077 = vpop.f32.mrb[0].mxu0
        %v4078 = vadd.f32 %v3981, %v4077
        %v4079 = vpop.f32.mrb[0].mxu0
        %4080 = vdwg.mxu0
        %v4081 = vadd.f32 %v4019, %v4022
        %v4082 = vadd.f32 %v4081, %v4027
        %v4083 = vadd.f32 %v4082, %v4030
        %v4084 = vadd.f32 %v4083, %v4035
        %v4085 = vadd.f32 %v4084, %v4038
        %v4086 = vadd.f32 %v4085, %v4043
        %v4087 = vadd.f32 %v4086, %v4046
        %v4088 = vrot.slane %v4087, 4
        %v4089 = vadd.f32 %v4087, %v4088
        %v4090 = vrot.slane %v4089, 2
        %v4091 = vadd.f32 %v4089, %v4090
        %v4092 = vrot.slane %v4091, 1
        %v4093 = vadd.f32 %v4091, %v4092
        %v4094 = vadd.f32 %v4051, %v4054
        %v4095 = vadd.f32 %v4094, %v4059
        %v4096 = vadd.f32 %v4095, %v4062
        %v4097 = vadd.f32 %v4096, %v4067
        %v4098 = vadd.f32 %v4097, %v4070
        %v4099 = vadd.f32 %v4098, %v4075
        %v4100 = vadd.f32 %v4099, %v4078
        %v4101 = vrot.slane %v4100, 4
        %v4102 = vadd.f32 %v4100, %v4101
        %v4103 = vrot.slane %v4102, 2
        %v4104 = vadd.f32 %v4102, %v4103
        %v4105 = vrot.slane %v4104, 1
        %v4106 = vadd.f32 %v4104, %v4105
        %v4107 = vmul.f32 %v4019, %v4019
        %v4108 = vmul.f32 %v4022, %v4022
        %v4109 = vmul.f32 %v4027, %v4027
        %v4110 = vmul.f32 %v4030, %v4030
        %v4111 = vmul.f32 %v4035, %v4035
        %v4112 = vmul.f32 %v4038, %v4038
        %v4113 = vmul.f32 %v4043, %v4043
        %v4114 = vmul.f32 %v4046, %v4046
        %v4115 = vmul.f32 %v4051, %v4051
        %v4116 = vmul.f32 %v4054, %v4054
        %v4117 = vmul.f32 %v4059, %v4059
        %v4118 = vmul.f32 %v4062, %v4062
        %v4119 = vmul.f32 %v4067, %v4067
        %v4120 = vmul.f32 %v4070, %v4070
        %v4121 = vmul.f32 %v4075, %v4075
        %v4122 = vmul.f32 %v4078, %v4078
        %v4123 = vadd.f32 %v4107, %v4108
        %v4124 = vadd.f32 %v4123, %v4109
        %v4125 = vadd.f32 %v4124, %v4110
        %v4126 = vadd.f32 %v4125, %v4111
        %v4127 = vadd.f32 %v4126, %v4112
        %v4128 = vadd.f32 %v4127, %v4113
        %v4129 = vadd.f32 %v4128, %v4114
        %v4130 = vrot.slane %v4129, 4
        %v4131 = vadd.f32 %v4129, %v4130
        %v4132 = vrot.slane %v4131, 2
        %v4133 = vadd.f32 %v4131, %v4132
        %v4134 = vrot.slane %v4133, 1
        %v4135 = vadd.f32 %v4133, %v4134
        %v4136 = vadd.f32 %v4115, %v4116
        %v4137 = vadd.f32 %v4136, %v4117
        %v4138 = vadd.f32 %v4137, %v4118
        %v4139 = vadd.f32 %v4138, %v4119
        %v4140 = vadd.f32 %v4139, %v4120
        %v4141 = vadd.f32 %v4140, %v4121
        %v4142 = vadd.f32 %v4141, %v4122
        %v4143 = vrot.slane %v4142, 4
        %v4144 = vadd.f32 %v4142, %v4143
        %v4145 = vrot.slane %v4144, 2
        %v4146 = vadd.f32 %v4144, %v4145
        %v4147 = vrot.slane %v4146, 1
        %v4148 = vadd.f32 %v4146, %v4147
        %v4151 = vsel %vm2319, %v4106, %v4093
        %v4155 = vsel %vm2324, %v4148, %v4135
        %v4157 = vsel %vm2327, %v4151, %v4155
        %v4158 = vld [vmem:[%s10] sm:$0xff]
        %v4159 = vld [vmem:[%s10 + $0x8] sm:$0xff]
        %v4160 = vld [vmem:[%s10 + $0x10] sm:$0xff]
        %v4161 = vld [vmem:[%s10 + $0x18] sm:$0xff]
        %v4162 = vld [vmem:[%s10 + $0x20] sm:$0xff]
        %v4163 = vld [vmem:[%s10 + $0x28] sm:$0xff]
        %v4164 = vld [vmem:[%s10 + $0x30] sm:$0xff]
        %v4165 = vld [vmem:[%s10 + $0x38] sm:$0xff]
        %v4166 = vld [vmem:[%s10 + $0x40] sm:$0xff]
        %v4167 = vld [vmem:[%s10 + $0x48] sm:$0xff]
        %v4168 = vld [vmem:[%s10 + $0x50] sm:$0xff]
        %v4169 = vld [vmem:[%s10 + $0x58] sm:$0xff]
        %v4170 = vld [vmem:[%s10 + $0x60] sm:$0xff]
        %v4171 = vld [vmem:[%s10 + $0x68] sm:$0xff]
        %v4172 = vld [vmem:[%s10 + $0x70] sm:$0xff]
        %v4173 = vld [vmem:[%s10 + $0x78] sm:$0xff]
        %4174 = vmatprep.subr.mxu0 0.0
        %4175 = vmatpush1.msra.mxu0 %v4158
        %4176 = vmatprep.subr.mxu0 0.0
        %4177 = vmatpush1.msra.mxu0 %v4159
        %4178 = vmatprep.subr.mxu0 0.0
        %4179 = vmatpush1.msra.mxu0 %v4160
        %4180 = vmatprep.subr.mxu0 0.0
        %4181 = vmatpush1.msra.mxu0 %v4161
        %4182 = vmatprep.subr.mxu0 0.0
        %4183 = vmatpush1.msra.mxu0 %v4162
        %4184 = vmatprep.subr.mxu0 0.0
        %4185 = vmatpush1.msra.mxu0 %v4163
        %4186 = vmatprep.subr.mxu0 0.0
        %4187 = vmatpush1.msra.mxu0 %v4164
        %4188 = vmatprep.subr.mxu0 0.0
        %4189 = vmatpush1.msra.mxu0 %v4165
        %4190 = vmatprep.subr.mxu0 0.0
        %4191 = vmatpush1.msra.mxu0 %v4166
        %4192 = vmatprep.subr.mxu0 0.0
        %4193 = vmatpush1.msra.mxu0 %v4167
        %4194 = vmatprep.subr.mxu0 0.0
        %4195 = vmatpush1.msra.mxu0 %v4168
        %4196 = vmatprep.subr.mxu0 0.0
        %4197 = vmatpush1.msra.mxu0 %v4169
        %4198 = vmatprep.subr.mxu0 0.0
        %4199 = vmatpush1.msra.mxu0 %v4170
        %4200 = vmatprep.subr.mxu0 0.0
        %4201 = vmatpush1.msra.mxu0 %v4171
        %4202 = vmatprep.subr.mxu0 0.0
        %4203 = vmatpush1.msra.mxu0 %v4172
        %4204 = vmatprep.subr.mxu0 0.0
        %4205 = vmatpush1.msra.mxu0 %v4173
        %4206 = vmatprep.subr.mxu0 0.0
        %4207 = vmatpush1.msra.mxu0 0.0
        %4208 = vmatprep.subr.mxu0 0.0
        %4209 = vmatpush1.msra.mxu0 0.0
        %4210 = vmatprep.subr.mxu0 0.0
        %4211 = vmatpush1.msra.mxu0 0.0
        %4212 = vmatprep.subr.mxu0 0.0
        %4213 = vmatpush1.msra.mxu0 0.0
        %4214 = vmatprep.subr.mxu0 0.0
        %4215 = vmatpush1.msra.mxu0 0.0
        %4216 = vmatprep.subr.mxu0 0.0
        %4217 = vmatpush1.msra.mxu0 0.0
        %4218 = vmatprep.subr.mxu0 0.0
        %4219 = vmatpush1.msra.mxu0 0.0
        %4220 = vmatprep.subr.mxu0 0.0
        %4221 = vmatpush1.msra.mxu0 0.0
        %4222 = vmatprep.subr.mxu0 0.0
        %4223 = vmatpush1.msra.mxu0 0.0
        %4224 = vmatprep.subr.mxu0 0.0
        %4225 = vmatpush1.msra.mxu0 0.0
        %4226 = vmatprep.subr.mxu0 0.0
        %4227 = vmatpush1.msra.mxu0 0.0
        %4228 = vmatprep.subr.mxu0 0.0
        %4229 = vmatpush1.msra.mxu0 0.0
        %4230 = vmatprep.subr.mxu0 0.0
        %4231 = vmatpush1.msra.mxu0 0.0
        %4232 = vmatprep.subr.mxu0 0.0
        %4233 = vmatpush1.msra.mxu0 0.0
        %4234 = vmatprep.subr.mxu0 0.0
        %4235 = vmatpush1.msra.mxu0 0.0
        %4236 = vmatprep.subr.mxu0 0.0
        %4237 = vmatpush1.msra.mxu0 0.0
        %4238 = vmatprep.mubr.f32.mxu0 0.0
        %4239 = vmatmul.mubr.f32.gmra.mrb[0].mxu0 %v4157
        %v4240 = vpop.f32.mrb[0].mxu0
        %v4241 = vadd.f32 0.0, %v4240
        %v4242 = vpop.f32.mrb[0].mxu0
        %4243 = vdwg.mxu0
        %v4244 = vmul.f32 %v4241, %v4241
        %v4246 = vrot.slane %v4244, 6
        %v4248 = vsub.f32 %v4241, %v4246
        %v4249 = vadd.f32 %v4248, 1e-06
        %v4250 = vrsqrt.pop %v4249
        %v4251 = vld [vmem:[%s530] sm:$0x1]
        %v4253 = vlaneseq
        %v4254 = vshrl.u32 %v4253, 7
        %v4255 = vsub.s32 0, %v4254
        %v4256 = vrot.slane %v4251, %v4255
        %v4258 = vmul.f32 %v4250, %v4256
        %v4259 = vld [vmem:[%s533] sm:$0x1]
        %v4261 = vrot.slane %v4258, 2
        %v4263 = vmul.f32 %v4241, %v4261
        %v4265 = vlaneseq
        %v4266 = vshrl.u32 %v4265, 7
        %v4267 = vsub.s32 0, %v4266
        %v4268 = vrot.slane %v4259, %v4267
        %v4270 = vsub.f32 %v4268, %v4263
        %v4272 = vunpack.c.l.s4 1966171168
        %v4273 = vunpack.c.0.s8 %v4272
        %v4274 = vlaneseq
        %v4275 = vshrl.u32 %v4274, 7
        %v4276 = vsub.s32 %v4273, %v4275
        %v4277 = vrot.slane %v4258, %v4276
        %v4278 = vcombine.high %v4277, %v4277
        %v4280 = vunpack.c.l.s4 1966171168
        %v4281 = vunpack.c.0.s8 %v4280
        %v4282 = vlaneseq
        %v4283 = vshrl.u32 %v4282, 7
        %v4284 = vsub.s32 %v4281, %v4283
        %v4285 = vrot.slane %v4277, %v4284
        %v4287 = vunpack.c.l.s4 1966171168
        %v4288 = vunpack.c.0.s8 %v4287
        %v4289 = vlaneseq
        %v4290 = vshrl.u32 %v4289, 7
        %v4291 = vsub.s32 %v4288, %v4290
        %v4292 = vrot.slane %v4278, %v4291
        %v4293 = vcombine.high %v4285, %v4285
        %v4294 = vcombine.high %v4292, %v4292
        %v4295 = vlaneseq
        %v4296 = vshrl.u32 %v4295, 7
        %v4297 = vsub.s32 0, %v4296
        %v4298 = vrot.slane %v4293, %v4297
        %v4299 = vlaneseq
        %v4300 = vshrl.u32 %v4299, 7
        %v4301 = vsub.s32 0, %v4300
        %v4302 = vrot.slane %v4294, %v4301
        %v4305 = vmul.f32 %v4019, %v4298
        %v4306 = vmul.f32 %v4022, %v4298
        %v4307 = vmul.f32 %v4027, %v4298
        %v4308 = vmul.f32 %v4030, %v4298
        %v4309 = vmul.f32 %v4035, %v4298
        %v4310 = vmul.f32 %v4038, %v4298
        %v4311 = vmul.f32 %v4043, %v4298
        %v4312 = vmul.f32 %v4046, %v4298
        %v4313 = vmul.f32 %v4051, %v4302
        %v4314 = vmul.f32 %v4054, %v4302
        %v4315 = vmul.f32 %v4059, %v4302
        %v4316 = vmul.f32 %v4062, %v4302
        %v4317 = vmul.f32 %v4067, %v4302
        %v4318 = vmul.f32 %v4070, %v4302
        %v4319 = vmul.f32 %v4075, %v4302
        %v4320 = vmul.f32 %v4078, %v4302
        %v4323 = vunpack.c.l.s4 1966171168
        %v4324 = vunpack.c.0.s8 %v4323
        %v4325 = vlaneseq
        %v4326 = vshrl.u32 %v4325, 7
        %v4327 = vsub.s32 %v4324, %v4326
        %v4328 = vrot.slane %v4270, %v4327
        %v4329 = vcombine.high %v4328, %v4328
        %v4331 = vunpack.c.l.s4 1966171168
        %v4332 = vunpack.c.0.s8 %v4331
        %v4333 = vlaneseq
        %v4334 = vshrl.u32 %v4333, 7
        %v4335 = vsub.s32 %v4332, %v4334
        %v4336 = vrot.slane %v4328, %v4335
        %v4338 = vunpack.c.l.s4 1966171168
        %v4339 = vunpack.c.0.s8 %v4338
        %v4340 = vlaneseq
        %v4341 = vshrl.u32 %v4340, 7
        %v4342 = vsub.s32 %v4339, %v4341
        %v4343 = vrot.slane %v4329, %v4342
        %v4344 = vlaneseq
        %v4345 = vshrl.u32 %v4344, 7
        %v4346 = vsub.s32 0, %v4345
        %v4347 = vrot.slane %v4336, %v4346
        %v4348 = vlaneseq
        %v4349 = vshrl.u32 %v4348, 7
        %v4350 = vsub.s32 0, %v4349
        %v4351 = vrot.slane %v4343, %v4350
        %v4354 = vadd.f32 %v4305, %v4347
        %v4355 = vadd.f32 %v4306, %v4347
        %v4356 = vadd.f32 %v4307, %v4347
        %v4357 = vadd.f32 %v4308, %v4347
        %v4358 = vadd.f32 %v4309, %v4347
        %v4359 = vadd.f32 %v4310, %v4347
        %v4360 = vadd.f32 %v4311, %v4347
        %v4361 = vadd.f32 %v4312, %v4347
        %v4362 = vadd.f32 %v4313, %v4351
        %v4363 = vadd.f32 %v4314, %v4351
        %v4364 = vadd.f32 %v4315, %v4351
        %v4365 = vadd.f32 %v4316, %v4351
        %v4366 = vadd.f32 %v4317, %v4351
        %v4367 = vadd.f32 %v4318, %v4351
        %v4368 = vadd.f32 %v4319, %v4351
        %v4369 = vadd.f32 %v4320, %v4351
        %v4370 = vxor.u32 %v4354, 2147483648
        %v4371 = vxor.u32 %v4355, 2147483648
        %v4372 = vxor.u32 %v4356, 2147483648
        %v4373 = vxor.u32 %v4357, 2147483648
        %v4374 = vxor.u32 %v4358, 2147483648
        %v4375 = vxor.u32 %v4359, 2147483648
        %v4376 = vxor.u32 %v4360, 2147483648
        %v4377 = vxor.u32 %v4361, 2147483648
        %v4378 = vxor.u32 %v4362, 2147483648
        %v4379 = vxor.u32 %v4363, 2147483648
        %v4380 = vxor.u32 %v4364, 2147483648
        %v4381 = vxor.u32 %v4365, 2147483648
        %v4382 = vxor.u32 %v4366, 2147483648
        %v4383 = vxor.u32 %v4367, 2147483648
        %v4384 = vxor.u32 %v4368, 2147483648
        %v4385 = vxor.u32 %v4369, 2147483648
        %v4386 = vmul.f32 %v4370, 1.442695
        %v4387 = vpow.pop %v4386
        %v4388 = vmul.f32 %v4371, 1.442695
        %v4389 = vpow.pop %v4388
        %v4390 = vmul.f32 %v4372, 1.442695
        %v4391 = vpow.pop %v4390
        %v4392 = vmul.f32 %v4373, 1.442695
        %v4393 = vpow.pop %v4392
        %v4394 = vmul.f32 %v4374, 1.442695
        %v4395 = vpow.pop %v4394
        %v4396 = vmul.f32 %v4375, 1.442695
        %v4397 = vpow.pop %v4396
        %v4398 = vmul.f32 %v4376, 1.442695
        %v4399 = vpow.pop %v4398
        %v4400 = vmul.f32 %v4377, 1.442695
        %v4401 = vpow.pop %v4400
        %v4402 = vmul.f32 %v4378, 1.442695
        %v4403 = vpow.pop %v4402
        %v4404 = vmul.f32 %v4379, 1.442695
        %v4405 = vpow.pop %v4404
        %v4406 = vmul.f32 %v4380, 1.442695
        %v4407 = vpow.pop %v4406
        %v4408 = vmul.f32 %v4381, 1.442695
        %v4409 = vpow.pop %v4408
        %v4410 = vmul.f32 %v4382, 1.442695
        %v4411 = vpow.pop %v4410
        %v4412 = vmul.f32 %v4383, 1.442695
        %v4413 = vpow.pop %v4412
        %v4414 = vmul.f32 %v4384, 1.442695
        %v4415 = vpow.pop %v4414
        %v4416 = vmul.f32 %v4385, 1.442695
        %v4417 = vpow.pop %v4416
        %v4418 = vadd.f32 %v4387, 1.0
        %v4419 = vadd.f32 %v4389, 1.0
        %v4420 = vadd.f32 %v4391, 1.0
        %v4421 = vadd.f32 %v4393, 1.0
        %v4422 = vadd.f32 %v4395, 1.0
        %v4423 = vadd.f32 %v4397, 1.0
        %v4424 = vadd.f32 %v4399, 1.0
        %v4425 = vadd.f32 %v4401, 1.0
        %v4426 = vadd.f32 %v4403, 1.0
        %v4427 = vadd.f32 %v4405, 1.0
        %v4428 = vadd.f32 %v4407, 1.0
        %v4429 = vadd.f32 %v4409, 1.0
        %v4430 = vadd.f32 %v4411, 1.0
        %v4431 = vadd.f32 %v4413, 1.0
        %v4432 = vadd.f32 %v4415, 1.0
        %v4433 = vadd.f32 %v4417, 1.0
        %v4434 = vrcp.pop %v4418
        %v4435 = vmul.f32 1.0, %v4434
        %v4436 = vrcp.pop %v4419
        %v4437 = vmul.f32 1.0, %v4436
        %v4438 = vrcp.pop %v4420
        %v4439 = vmul.f32 1.0, %v4438
        %v4440 = vrcp.pop %v4421
        %v4441 = vmul.f32 1.0, %v4440
        %v4442 = vrcp.pop %v4422
        %v4443 = vmul.f32 1.0, %v4442
        %v4444 = vrcp.pop %v4423
        %v4445 = vmul.f32 1.0, %v4444
        %v4446 = vrcp.pop %v4424
        %v4447 = vmul.f32 1.0, %v4446
        %v4448 = vrcp.pop %v4425
        %v4449 = vmul.f32 1.0, %v4448
        %v4450 = vrcp.pop %v4426
        %v4451 = vmul.f32 1.0, %v4450
        %v4452 = vrcp.pop %v4427
        %v4453 = vmul.f32 1.0, %v4452
        %v4454 = vrcp.pop %v4428
        %v4455 = vmul.f32 1.0, %v4454
        %v4456 = vrcp.pop %v4429
        %v4457 = vmul.f32 1.0, %v4456
        %v4458 = vrcp.pop %v4430
        %v4459 = vmul.f32 1.0, %v4458
        %v4460 = vrcp.pop %v4431
        %v4461 = vmul.f32 1.0, %v4460
        %v4462 = vrcp.pop %v4432
        %v4463 = vmul.f32 1.0, %v4462
        %v4464 = vrcp.pop %v4433
        %v4465 = vmul.f32 1.0, %v4464
        %4482 = vrot.lane.b32.xlu0 %v4435, 64
        %v4483 = vpop.permute.xlu0 %4482
        %4484 = vrot.lane.b32.xlu0 %v4437, 64
        %v4485 = vpop.permute.xlu0 %4484
        %4486 = vrot.lane.b32.xlu0 %v4439, 64
        %v4487 = vpop.permute.xlu0 %4486
        %4488 = vrot.lane.b32.xlu0 %v4441, 64
        %v4489 = vpop.permute.xlu0 %4488
        %4490 = vrot.lane.b32.xlu0 %v4443, 64
        %v4491 = vpop.permute.xlu0 %4490
        %4492 = vrot.lane.b32.xlu0 %v4445, 64
        %v4493 = vpop.permute.xlu0 %4492
        %4494 = vrot.lane.b32.xlu0 %v4447, 64
        %v4495 = vpop.permute.xlu0 %4494
        %4496 = vrot.lane.b32.xlu0 %v4449, 64
        %v4497 = vpop.permute.xlu0 %4496
        %4498 = vrot.lane.b32.xlu0 %v4451, 64
        %v4499 = vpop.permute.xlu0 %4498
        %4500 = vrot.lane.b32.xlu0 %v4453, 64
        %v4501 = vpop.permute.xlu0 %4500
        %4502 = vrot.lane.b32.xlu0 %v4455, 64
        %v4503 = vpop.permute.xlu0 %4502
        %4504 = vrot.lane.b32.xlu0 %v4457, 64
        %v4505 = vpop.permute.xlu0 %4504
        %4506 = vrot.lane.b32.xlu0 %v4459, 64
        %v4507 = vpop.permute.xlu0 %4506
        %4508 = vrot.lane.b32.xlu0 %v4461, 64
        %v4509 = vpop.permute.xlu0 %4508
        %4510 = vrot.lane.b32.xlu0 %v4463, 64
        %v4511 = vpop.permute.xlu0 %4510
        %4512 = vrot.lane.b32.xlu0 %v4465, 64
        %v4513 = vpop.permute.xlu0 %4512
        %v4530 = vmul.f32 %v4354, %v4483
        %v4531 = vmul.f32 %v4355, %v4485
        %v4532 = vmul.f32 %v4356, %v4487
        %v4533 = vmul.f32 %v4357, %v4489
        %v4534 = vmul.f32 %v4358, %v4491
        %v4535 = vmul.f32 %v4359, %v4493
        %v4536 = vmul.f32 %v4360, %v4495
        %v4537 = vmul.f32 %v4361, %v4497
        %v4538 = vmul.f32 %v4362, %v4499
        %v4539 = vmul.f32 %v4363, %v4501
        %v4540 = vmul.f32 %v4364, %v4503
        %v4541 = vmul.f32 %v4365, %v4505
        %v4542 = vmul.f32 %v4366, %v4507
        %v4543 = vmul.f32 %v4367, %v4509
        %v4544 = vmul.f32 %v4368, %v4511
        %v4545 = vmul.f32 %v4369, %v4513
        %v4546 = vadd.f32 %v648, %v4530
        %v4547 = vadd.f32 %v649, %v4531
        %v4548 = vadd.f32 %v650, %v4532
        %v4549 = vadd.f32 %v651, %v4533
        %v4550 = vadd.f32 %v652, %v4534
        %v4551 = vadd.f32 %v653, %v4535
        %v4552 = vadd.f32 %v654, %v4536
        %v4553 = vadd.f32 %v655, %v4537
        %v4554 = vadd.f32 %v656, %v4538
        %v4555 = vadd.f32 %v657, %v4539
        %v4556 = vadd.f32 %v658, %v4540
        %v4557 = vadd.f32 %v659, %v4541
        %v4558 = vadd.f32 %v660, %v4542
        %v4559 = vadd.f32 %v661, %v4543
        %v4560 = vadd.f32 %v662, %v4544
        %v4561 = vadd.f32 %v663, %v4545
        %4562 = vst.msk [vmem:[#allocation6] sm:$0xff] %vm872, %v4546
        %4563 = vst.msk [vmem:[#allocation6 + $0x8] sm:$0xff] %vm872, %v4547
        %4564 = vst.msk [vmem:[#allocation6 + $0x10] sm:$0xff] %vm872, %v4548
        %4565 = vst.msk [vmem:[#allocation6 + $0x18] sm:$0xff] %vm872, %v4549
        %4566 = vst.msk [vmem:[#allocation6 + $0x20] sm:$0xff] %vm872, %v4550
        %4567 = vst.msk [vmem:[#allocation6 + $0x28] sm:$0xff] %vm872, %v4551
        %4568 = vst.msk [vmem:[#allocation6 + $0x30] sm:$0xff] %vm872, %v4552
        %4569 = vst.msk [vmem:[#allocation6 + $0x38] sm:$0xff] %vm872, %v4553
        %4570 = vst.msk [vmem:[#allocation6 + $0x40] sm:$0xff] %vm872, %v4554
        %4571 = vst.msk [vmem:[#allocation6 + $0x48] sm:$0xff] %vm872, %v4555
        %4572 = vst.msk [vmem:[#allocation6 + $0x50] sm:$0xff] %vm872, %v4556
        %4573 = vst.msk [vmem:[#allocation6 + $0x58] sm:$0xff] %vm872, %v4557
        %4574 = vst.msk [vmem:[#allocation6 + $0x60] sm:$0xff] %vm872, %v4558
        %4575 = vst.msk [vmem:[#allocation6 + $0x68] sm:$0xff] %vm872, %v4559
        %4576 = vst.msk [vmem:[#allocation6 + $0x70] sm:$0xff] %vm872, %v4560
        %4577 = vst.msk [vmem:[#allocation6 + $0x78] sm:$0xff] %vm872, %v4561
        // Predicated region
        $region73: #{tpu_custom_call.1} parent=63 // pred_check
          %p4578 = pneg %p330
        $region74: #{tpu_custom_call.1} parent=63 // pred_check_branch
          %4580 = sbr.rel (%p4578) target = $region76
        $region75: #{tpu_custom_call.1} parent=63 // pred_region
          %s4581 = smul.u32 2, %s28
          %s4583 = ssub.s32 2048, 2048
          %4584 = vsyncadd [#allocation5], %s4583
          %s4585 = smul.addr %s4581, 8
          %s4586 = smul.addr %s4585, 128
          %s4587 = scalar_lea.hbm %s11, %s4586
          %s4588 = sshll.u32 [#allocation6], 4
          %s4589 = int_to_ptr.vmem [resolvable:$true] %s4588
          %4594 = dma.vmem_to_hbm [thread:$0]  %s4589, 2048, %s4587, [#allocation5], 128, 128, 8
        $region76: #{tpu_custom_call.1} parent=63 // pred_fallthru
          _
        // Predicated region
        $region77: #{tpu_custom_call.1} parent=63 // pred_check
          %p4595 = pneg %p330
        $region78: #{tpu_custom_call.1} parent=63 // pred_check_branch
          %4597 = sbr.rel (%p4595) target = $region80
        $region79: #{tpu_custom_call.1} parent=63 // pred_region
          %4598 = dma.done [#allocation5], 2048
        $region80: #{tpu_custom_call.1} parent=63 // pred_fallthru
          _
      $region64: #{tpu_custom_call.1} parent=5 // pred_fallthru
        _
      %p4599 = scmp.le.s32.totalorder 2, %s19
      // Predicated region
      $region81: #{tpu_custom_call.1} parent=5 // pred_check
        %p4600 = pneg %p4599
      $region82: #{tpu_custom_call.1} parent=5 // pred_check_branch
        %4602 = sbr.rel (%p4600) target = $region84
      $region83: #{tpu_custom_call.1} parent=5 // pred_region
        %s4603 = ssub.s32 %s19, 2
      $region84: #{tpu_custom_call.1} parent=5 // pred_fallthru
        _
    $region6: #{tpu_custom_call.1} parent=1 // loop_footer
      %s23 = sadd.s32 1, %s19
    $region7: #{tpu_custom_call.1} parent=1 // loop_footer_branch
      %18 = sbr.rel target = $region3
    $region8: #{tpu_custom_call.1} parent=1 // loop_exit
      _
    %4604 = vsyncpa [#allocation4], 1
    %s4605 = scalar_lea.sflag [#allocation4], 1
    %4606 = vsyncpa %s4605, 1
    %4607 = vsyncpa [#allocation5], 1
    %s4608 = scalar_lea.sflag [#allocation5], 1
    %4609 = vsyncpa %s4608, 1

</llo_original>
